<compile_context>
chip_gen: v5e
topology: v5e:2x2
jax: 0.10.0
libtpu: 0.0.40
codegen_flags: <defaults>
</compile_context>

<pallas_src>
import jax
import jax.numpy as jnp
from jax.experimental import pallas as pl
from jax.experimental.pallas import tpu as pltpu

IN_CH = 3
MID = 64                  # mid_channels (module default)
OUT_CH = 3 * 4 ** 2       # 48 channels before PixelShuffle(4)
OUT_CH_PAD = 64           # conv4 out channels padded 48 -> 64 in the kernel


def _make_kernel(h, w, th, n_bands):
    """Fused conv1..conv4 band kernel for an (h, w) frame, TH-row bands."""
    r1, r2, r3 = th + 6, th + 4, th + 2   # row extents of the x1 / x2 / x3 bands

    def _row_mask(x, first_row):
        # Zero rows whose original frame row lies outside [0, h).  This
        # reproduces the zero 'SAME' padding of the *next* conv at the true
        # frame border; band-interior halo rows keep their recomputed values.
        r = first_row + jax.lax.broadcasted_iota(jnp.int32, x.shape, 0)
        return jnp.where(jnp.logical_and(r >= 0, r < h), x, 0.0)

    def _pad_cols(x):
        # (rows, w, c) -> (rows, w + 2, c) with zero columns at 0 and w + 1
        # (the zero 'SAME' padding at the left / right frame border).
        z = jnp.zeros((x.shape[0], 1, x.shape[2]), x.dtype)
        return jnp.concatenate([z, x, z], axis=1)

    def _conv3x3(zp, w_ref, rows_out):
        # zp: (rows_out + 2, w + 2, cin) bf16.  im2col -> one K = 9*cin matmul.
        cin = zp.shape[-1]
        taps = [zp[dy:dy + rows_out, dx:dx + w, :]
                for dy in range(3) for dx in range(3)]
        patches = jnp.concatenate(taps, axis=-1)            # (rows_out, w, 9*cin)
        acc = jnp.dot(patches.reshape(rows_out * w, 9 * cin), w_ref[...],
                      preferred_element_type=jnp.float32)
        return acc.reshape(rows_out, w, w_ref.shape[-1])

    def kernel(p_ref, w1_ref, b1_ref, w2_ref, b2_ref, a_ref,
               w3_ref, b3_ref, w4_ref, b4_ref, out_ref):
        band = pl.program_id(0) % n_bands
        r0 = band * th                       # first output row of this band

        # ---- conv1 + ReLU (patches pre-im2col'ed in the wrapper, K = 27) ----
        p = p_ref[0]                                           # (r1, w, 27) bf16
        x1 = jnp.dot(p.reshape(r1 * w, 27), w1_ref[...],
                     preferred_element_type=jnp.float32)
        x1 = jnp.maximum(x1 + b1_ref[...], 0.0).reshape(r1, w, MID)
        x1 = _row_mask(x1, r0 - 3)

        # ---- conv2 + PReLU (K = 576) ----
        x2 = _conv3x3(_pad_cols(x1.astype(jnp.bfloat16)), w2_ref, r2)
        x2 = x2 + b2_ref[...]
        x2 = jnp.where(x2 >= 0.0, x2, x2 * a_ref[...])
        x2 = _row_mask(x2, r0 - 2)

        # ---- conv3 + ReLU (K = 576) ----
        x3 = _conv3x3(_pad_cols(x2.astype(jnp.bfloat16)), w3_ref, r3)
        x3 = jnp.maximum(x3 + b3_ref[...], 0.0)
        x3 = _row_mask(x3, r0 - 1)

        # ---- conv4(x3 + skip) + ReLU (K = 576, out channels padded to 64) ----
        skip = x1[2:2 + r3]                  # same rows / cols as x3 (f32)
        x4 = _conv3x3(_pad_cols((x3 + skip).astype(jnp.bfloat16)), w4_ref, th)
        x4 = jnp.maximum(x4 + b4_ref[...], 0.0)

        out_ref[0] = x4

    return kernel


def effvsr_forward(lqs, p, *, tile_h=32):
    """lqs: (n, h, w, t*3) float32 (PyTorch 'train mode' 4-D input)."""
    n, h, w, tc = lqs.shape
    t = tc // 3
    b_tot = n * t
    # (n,h,w,t,3) -> (n,t,h,w,3) -> (n*t, h, w, 3)   (NHWC per frame)
    x = lqs.reshape(n, h, w, t, 3).transpose(0, 3, 1, 2, 4).reshape(b_tot, h, w, 3)

    th = max(1, min(tile_h, h))
    n_bands = (h + th - 1) // th
    h_pad = n_bands * th

    # conv1 im2col patches for every x1 position each band needs
    # (rows [-3, h_pad+3), cols [0, w)); zeros outside the frame.
    xp = jnp.pad(x, ((0, 0), (4, h_pad - h + 4), (1, 1), (0, 0)))
    patches = jnp.concatenate(
        [xp[:, dy:dy + h_pad + 6, dx:dx + w, :]
         for dy in range(3) for dx in range(3)],
        axis=-1)                                          # (b, h_pad+6, w, 27)
    bands = jnp.stack(
        [patches[:, s * th:s * th + th + 6] for s in range(n_bands)], axis=1)
    bands = bands.reshape(b_tot * n_bands, th + 6, w, 9 * IN_CH)
    bands = bands.astype(jnp.bfloat16)

    # Weights in MXU-friendly (K, Cout) bf16 layout; conv4 padded 48 -> 64.
    w1f = p['w1'].reshape(9 * IN_CH, MID).astype(jnp.bfloat16)
    w2f = p['w2'].reshape(9 * MID, MID).astype(jnp.bfloat16)
    w3f = p['w3'].reshape(9 * MID, MID).astype(jnp.bfloat16)
    w4f = jnp.pad(p['w4'].reshape(9 * MID, OUT_CH),
                  ((0, 0), (0, OUT_CH_PAD - OUT_CH))).astype(jnp.bfloat16)
    b4f = jnp.pad(p['b4'], ((0, 0), (0, OUT_CH_PAD - OUT_CH)))

    def _full(shape):
        return pl.BlockSpec(shape, lambda i: (0,) * len(shape))

    feat = pl.pallas_call(
        _make_kernel(h, w, th, n_bands),
        out_shape=jax.ShapeDtypeStruct((b_tot * n_bands, th, w, OUT_CH_PAD),
                                       jnp.float32),
        grid_spec=pltpu.PrefetchScalarGridSpec(
            num_scalar_prefetch=0,
            grid=(b_tot * n_bands,),
            in_specs=[
                pl.BlockSpec((1, th + 6, w, 9 * IN_CH), lambda i: (i, 0, 0, 0)),
                _full((9 * IN_CH, MID)), _full((1, MID)),
                _full((9 * MID, MID)), _full((1, MID)),
                _full((1, MID)),                              # PReLU alpha
                _full((9 * MID, MID)), _full((1, MID)),
                _full((9 * MID, OUT_CH_PAD)), _full((1, OUT_CH_PAD)),
            ],
            out_specs=pl.BlockSpec((1, th, w, OUT_CH_PAD),
                                   lambda i: (i, 0, 0, 0)),
        ),
        compiler_params=pltpu.CompilerParams(
            dimension_semantics=("parallel",)),   # bands/frames independent
    )(bands, w1f, p['b1'], w2f, p['b2'], p['alpha'], w3f, p['b3'], w4f, b4f)

    # Strip the band / row padding and the 48 -> 64 channel padding.
    feat = feat.reshape(b_tot, h_pad, w, OUT_CH_PAD)[:, :h, :, :OUT_CH]

    # PixelShuffle(4) in NHWC (pure data movement - JAX glue).
    ps = feat.reshape(b_tot, h, w, 3, 4, 4)
    ps = ps.transpose(0, 1, 4, 2, 5, 3).reshape(b_tot, 4 * h, 4 * w, 3)
    preds = ps.reshape(n, t, 4 * h, 4 * w, 3).transpose(0, 2, 3, 1, 4)
    preds = preds.reshape(n, 4 * h, 4 * w, t * 3)
    return preds, None, None


def init_params(key):
    ks = jax.random.split(key, 8)

    def wconv(k, cin, cout):
        return (jax.random.normal(k, (3, 3, cin, cout), jnp.float32)
                * (1.0 / jnp.sqrt(9.0 * cin)))

    return {
        'w1': wconv(ks[0], IN_CH, MID),
        'b1': jax.random.normal(ks[1], (1, MID), jnp.float32) * 0.01,
        'w2': wconv(ks[2], MID, MID),
        'b2': jax.random.normal(ks[3], (1, MID), jnp.float32) * 0.01,
        'alpha': jnp.full((1, MID), 0.25, jnp.float32),       # PReLU init
        'w3': wconv(ks[4], MID, MID),
        'b3': jax.random.normal(ks[5], (1, MID), jnp.float32) * 0.01,
        'w4': wconv(ks[6], MID, OUT_CH),
        'b4': jax.random.normal(ks[7], (1, OUT_CH), jnp.float32) * 0.01,
    }


def ref_forward(lqs, p):
    """Pure-JAX f32 reference (XLA convs) mirroring the PyTorch forward."""
    n, h, w, tc = lqs.shape
    t = tc // 3
    x = lqs.reshape(n, h, w, t, 3).transpose(0, 3, 1, 2, 4).reshape(n * t, h, w, 3)

    def conv(z, wgt, bias):
        y = jax.lax.conv_general_dilated(
            z, wgt, (1, 1), 'SAME',
            dimension_numbers=('NHWC', 'HWIO', 'NHWC'))
        return y + bias.reshape(1, 1, 1, -1)

    x1 = jnp.maximum(conv(x, p['w1'], p['b1']), 0.0)
    skip = x1
    x2 = conv(x1, p['w2'], p['b2'])
    a = p['alpha'].reshape(1, 1, 1, -1)
    x2 = jnp.where(x2 >= 0.0, x2, a * x2)
    x3 = jnp.maximum(conv(x2, p['w3'], p['b3']), 0.0)
    x4 = jnp.maximum(conv(x3 + skip, p['w4'], p['b4']), 0.0)
    ps = x4.reshape(n * t, h, w, 3, 4, 4).transpose(0, 1, 4, 2, 5, 3)
    ps = ps.reshape(n * t, 4 * h, 4 * w, 3)
    preds = ps.reshape(n, t, 4 * h, 4 * w, 3).transpose(0, 2, 3, 1, 4)
    return preds.reshape(n, 4 * h, 4 * w, t * 3)


if __name__ == "__main__":
    key = jax.random.PRNGKey(0)
    kp, kx1, kx2 = jax.random.split(key, 3)
    params = init_params(kp)

    # num_frames=3 (module default), small spatial sizes.  tile_h=8 exercises
    # multi-band tiling, halo recompute and frame-border masking; the second
    # case has h not divisible by tile_h (band overhang + output crop path).
    cases = [((2, 3, 16, 16), kx1), ((1, 2, 12, 16), kx2)]
    for (n, t, h, w), kk in cases:
        lqs = jax.random.uniform(kk, (n, h, w, t * 3), dtype=jnp.float32)
        preds, _, _ = effvsr_forward(lqs, params, tile_h=8)
        preds = jax.block_until_ready(preds)
        assert preds.shape == (n, 4 * h, 4 * w, t * 3), preds.shape

        ref = jax.block_until_ready(ref_forward(lqs, params))
        max_err = float(jnp.max(jnp.abs(preds - ref)))
        # bf16 matmul inputs (f32 accumulation) vs pure-f32 reference.
        assert max_err < 5e-2, f"kernel/reference mismatch: {max_err}"

    print("KERNEL_OK")
</pallas_src>

<mosaic_0001>
module attributes {stable_mosaic.version = 11 : i64} {
  func.func @kernel(%arg0: i32, %arg1: memref<1x14x16x27xbf16, #tpu.memory_space<vmem>>, %arg2: memref<27x64xbf16, #tpu.memory_space<vmem>>, %arg3: memref<1x64xf32, #tpu.memory_space<vmem>>, %arg4: memref<576x64xbf16, #tpu.memory_space<vmem>>, %arg5: memref<1x64xf32, #tpu.memory_space<vmem>>, %arg6: memref<1x64xf32, #tpu.memory_space<vmem>>, %arg7: memref<576x64xbf16, #tpu.memory_space<vmem>>, %arg8: memref<1x64xf32, #tpu.memory_space<vmem>>, %arg9: memref<576x64xbf16, #tpu.memory_space<vmem>>, %arg10: memref<1x64xf32, #tpu.memory_space<vmem>>, %arg11: memref<1x8x16x64xf32, #tpu.memory_space<vmem>>) attributes {dimension_semantics = [#tpu.dimension_semantics<parallel>], iteration_bounds = array<i64: 12>, scalar_prefetch = 0 : i64, scratch_operands = 0 : i64, tpu.core_type = #tpu.core_type<tc>, window_params = [{transform_indices = @transform_0, window_bounds = array<i64: 1, 14, 16, 27>}, {pipeline_mode = #tpu.pipeline_mode<synchronous>, transform_indices = @transform_1, window_bounds = array<i64: 27, 64>}, {pipeline_mode = #tpu.pipeline_mode<synchronous>, transform_indices = @transform_2, window_bounds = array<i64: 1, 64>}, {pipeline_mode = #tpu.pipeline_mode<synchronous>, transform_indices = @transform_3, window_bounds = array<i64: 576, 64>}, {pipeline_mode = #tpu.pipeline_mode<synchronous>, transform_indices = @transform_4, window_bounds = array<i64: 1, 64>}, {pipeline_mode = #tpu.pipeline_mode<synchronous>, transform_indices = @transform_5, window_bounds = array<i64: 1, 64>}, {pipeline_mode = #tpu.pipeline_mode<synchronous>, transform_indices = @transform_6, window_bounds = array<i64: 576, 64>}, {pipeline_mode = #tpu.pipeline_mode<synchronous>, transform_indices = @transform_7, window_bounds = array<i64: 1, 64>}, {pipeline_mode = #tpu.pipeline_mode<synchronous>, transform_indices = @transform_8, window_bounds = array<i64: 576, 64>}, {pipeline_mode = #tpu.pipeline_mode<synchronous>, transform_indices = @transform_9, window_bounds = array<i64: 1, 64>}, {transform_indices = @transform_10, window_bounds = array<i64: 1, 8, 16, 64>}]} {
    %c2_i32 = arith.constant 2 : i32
    %c0_i32 = arith.constant 0 : i32
    %0 = arith.cmpi eq, %c2_i32, %c0_i32 : i32
    %c1_i32 = arith.constant 1 : i32
    %1 = arith.select %0, %c1_i32, %c2_i32 : i32
    %2 = arith.remsi %arg0, %1 : i32
    %c0_i32_0 = arith.constant 0 : i32
    %3 = arith.cmpi ne, %2, %c0_i32_0 : i32
    %c0_i32_1 = arith.constant 0 : i32
    %4 = arith.cmpi slt, %2, %c0_i32_1 : i32
    %c0_i32_2 = arith.constant 0 : i32
    %5 = arith.cmpi slt, %1, %c0_i32_2 : i32
    %6 = arith.xori %4, %5 : i1
    %7 = arith.andi %6, %3 : i1
    %8 = arith.addi %2, %1 : i32
    %9 = arith.select %7, %8, %2 : i32
    %c8_i32 = arith.constant 8 : i32
    %10 = arith.muli %9, %c8_i32 : i32
    %c0 = arith.constant 0 : index
    %c0_3 = arith.constant 0 : index
    %c0_4 = arith.constant 0 : index
    %c0_5 = arith.constant 0 : index
    %11 = vector.load %arg1[%c0, %c0_3, %c0_4, %c0_5] : memref<1x14x16x27xbf16, #tpu.memory_space<vmem>>, vector<1x14x16x27xbf16>
    %12 = vector.shape_cast %11 : vector<1x14x16x27xbf16> to vector<14x16x27xbf16>
    %13 = vector.shape_cast %12 : vector<14x16x27xbf16> to vector<224x27xbf16>
    %c0_6 = arith.constant 0 : index
    %c0_7 = arith.constant 0 : index
    %14 = vector.load %arg2[%c0_6, %c0_7] : memref<27x64xbf16, #tpu.memory_space<vmem>>, vector<27x64xbf16>
    %cst = arith.constant dense<0.000000e+00> : vector<224x64xf32>
    %15 = tpu.matmul %13, %14, %cst {dimension_numbers = #tpu.dot_dimension_numbers<[1], [0], [0], [1], [0, 0, 1, 1], [], []>} : vector<224x27xbf16>, vector<27x64xbf16>, vector<224x64xf32> -> vector<224x64xf32>
    %c0_8 = arith.constant 0 : index
    %c0_9 = arith.constant 0 : index
    %16 = vector.load %arg3[%c0_8, %c0_9] : memref<1x64xf32, #tpu.memory_space<vmem>>, vector<1x64xf32>
    %17 = vector.broadcast %16 : vector<1x64xf32> to vector<224x64xf32>
    %18 = arith.addf %15, %17 : vector<224x64xf32>
    %cst_10 = arith.constant 0.000000e+00 : f32
    %19 = vector.broadcast %cst_10 : f32 to vector<224x64xf32>
    %20 = arith.maximumf %18, %19 : vector<224x64xf32>
    %21 = vector.shape_cast %20 : vector<224x64xf32> to vector<14x16x64xf32>
    %c3_i32 = arith.constant 3 : i32
    %22 = arith.subi %10, %c3_i32 : i32
    %23 = tpu.iota {dimensions = array<i32: 0>} : vector<14x16x64xi32>
    %24 = vector.broadcast %22 : i32 to vector<14x16x64xi32>
    %25 = arith.addi %24, %23 : vector<14x16x64xi32>
    %c0_i32_11 = arith.constant 0 : i32
    %26 = vector.broadcast %c0_i32_11 : i32 to vector<14x16x64xi32>
    %27 = arith.cmpi sge, %25, %26 : vector<14x16x64xi32>
    %c16_i32 = arith.constant 16 : i32
    %28 = vector.broadcast %c16_i32 : i32 to vector<14x16x64xi32>
    %29 = arith.cmpi slt, %25, %28 : vector<14x16x64xi32>
    %30 = arith.andi %27, %29 : vector<14x16x64xi1>
    %cst_12 = arith.constant 0.000000e+00 : f32
    %31 = vector.broadcast %cst_12 : f32 to vector<14x16x64xf32>
    %32 = arith.select %30, %21, %31 : vector<14x16x64xi1>, vector<14x16x64xf32>
    %33 = arith.truncf %32 : vector<14x16x64xf32> to vector<14x16x64xbf16>
    %cst_13 = arith.constant 0.000000e+00 : bf16
    %34 = vector.broadcast %cst_13 : bf16 to vector<14x1x64xbf16>
    %35 = tpu.concatenate %34, %33, %34 in 1 : vector<14x1x64xbf16>, vector<14x16x64xbf16>, vector<14x1x64xbf16> -> vector<14x18x64xbf16>
    %36 = vector.extract_strided_slice %35 {offsets = [0, 0, 0], sizes = [12, 16, 64], strides = [1, 1, 1]} : vector<14x18x64xbf16> to vector<12x16x64xbf16>
    %37 = vector.extract_strided_slice %35 {offsets = [0, 1, 0], sizes = [12, 16, 64], strides = [1, 1, 1]} : vector<14x18x64xbf16> to vector<12x16x64xbf16>
    %38 = vector.extract_strided_slice %35 {offsets = [0, 2, 0], sizes = [12, 16, 64], strides = [1, 1, 1]} : vector<14x18x64xbf16> to vector<12x16x64xbf16>
    %39 = vector.extract_strided_slice %35 {offsets = [1, 0, 0], sizes = [12, 16, 64], strides = [1, 1, 1]} : vector<14x18x64xbf16> to vector<12x16x64xbf16>
    %40 = vector.extract_strided_slice %35 {offsets = [1, 1, 0], sizes = [12, 16, 64], strides = [1, 1, 1]} : vector<14x18x64xbf16> to vector<12x16x64xbf16>
    %41 = vector.extract_strided_slice %35 {offsets = [1, 2, 0], sizes = [12, 16, 64], strides = [1, 1, 1]} : vector<14x18x64xbf16> to vector<12x16x64xbf16>
    %42 = vector.extract_strided_slice %35 {offsets = [2, 0, 0], sizes = [12, 16, 64], strides = [1, 1, 1]} : vector<14x18x64xbf16> to vector<12x16x64xbf16>
    %43 = vector.extract_strided_slice %35 {offsets = [2, 1, 0], sizes = [12, 16, 64], strides = [1, 1, 1]} : vector<14x18x64xbf16> to vector<12x16x64xbf16>
    %44 = vector.extract_strided_slice %35 {offsets = [2, 2, 0], sizes = [12, 16, 64], strides = [1, 1, 1]} : vector<14x18x64xbf16> to vector<12x16x64xbf16>
    %45 = tpu.concatenate %36, %37, %38, %39, %40, %41, %42, %43, %44 in 2 : vector<12x16x64xbf16>, vector<12x16x64xbf16>, vector<12x16x64xbf16>, vector<12x16x64xbf16>, vector<12x16x64xbf16>, vector<12x16x64xbf16>, vector<12x16x64xbf16>, vector<12x16x64xbf16>, vector<12x16x64xbf16> -> vector<12x16x576xbf16>
    %46 = vector.shape_cast %45 : vector<12x16x576xbf16> to vector<192x576xbf16>
    %c0_14 = arith.constant 0 : index
    %c0_15 = arith.constant 0 : index
    %47 = vector.load %arg4[%c0_14, %c0_15] : memref<576x64xbf16, #tpu.memory_space<vmem>>, vector<576x64xbf16>
    %cst_16 = arith.constant dense<0.000000e+00> : vector<192x64xf32>
    %48 = tpu.matmul %46, %47, %cst_16 {dimension_numbers = #tpu.dot_dimension_numbers<[1], [0], [0], [1], [0, 0, 1, 1], [], []>} : vector<192x576xbf16>, vector<576x64xbf16>, vector<192x64xf32> -> vector<192x64xf32>
    %49 = vector.shape_cast %48 : vector<192x64xf32> to vector<12x16x64xf32>
    %c0_17 = arith.constant 0 : index
    %c0_18 = arith.constant 0 : index
    %50 = vector.load %arg5[%c0_17, %c0_18] : memref<1x64xf32, #tpu.memory_space<vmem>>, vector<1x64xf32>
    %51 = vector.shape_cast %50 : vector<1x64xf32> to vector<1x1x64xf32>
    %52 = vector.broadcast %51 : vector<1x1x64xf32> to vector<12x16x64xf32>
    %53 = arith.addf %49, %52 : vector<12x16x64xf32>
    %cst_19 = arith.constant 0.000000e+00 : f32
    %54 = vector.broadcast %cst_19 : f32 to vector<12x16x64xf32>
    %55 = arith.cmpf oge, %53, %54 : vector<12x16x64xf32>
    %c0_20 = arith.constant 0 : index
    %c0_21 = arith.constant 0 : index
    %56 = vector.load %arg6[%c0_20, %c0_21] : memref<1x64xf32, #tpu.memory_space<vmem>>, vector<1x64xf32>
    %57 = vector.shape_cast %56 : vector<1x64xf32> to vector<1x1x64xf32>
    %58 = vector.broadcast %57 : vector<1x1x64xf32> to vector<12x16x64xf32>
    %59 = arith.mulf %53, %58 : vector<12x16x64xf32>
    %60 = arith.select %55, %53, %59 : vector<12x16x64xi1>, vector<12x16x64xf32>
    %c2_i32_22 = arith.constant 2 : i32
    %61 = arith.subi %10, %c2_i32_22 : i32
    %62 = tpu.iota {dimensions = array<i32: 0>} : vector<12x16x64xi32>
    %63 = vector.broadcast %61 : i32 to vector<12x16x64xi32>
    %64 = arith.addi %63, %62 : vector<12x16x64xi32>
    %c0_i32_23 = arith.constant 0 : i32
    %65 = vector.broadcast %c0_i32_23 : i32 to vector<12x16x64xi32>
    %66 = arith.cmpi sge, %64, %65 : vector<12x16x64xi32>
    %c16_i32_24 = arith.constant 16 : i32
    %67 = vector.broadcast %c16_i32_24 : i32 to vector<12x16x64xi32>
    %68 = arith.cmpi slt, %64, %67 : vector<12x16x64xi32>
    %69 = arith.andi %66, %68 : vector<12x16x64xi1>
    %cst_25 = arith.constant 0.000000e+00 : f32
    %70 = vector.broadcast %cst_25 : f32 to vector<12x16x64xf32>
    %71 = arith.select %69, %60, %70 : vector<12x16x64xi1>, vector<12x16x64xf32>
    %72 = arith.truncf %71 : vector<12x16x64xf32> to vector<12x16x64xbf16>
    %cst_26 = arith.constant 0.000000e+00 : bf16
    %73 = vector.broadcast %cst_26 : bf16 to vector<12x1x64xbf16>
    %74 = tpu.concatenate %73, %72, %73 in 1 : vector<12x1x64xbf16>, vector<12x16x64xbf16>, vector<12x1x64xbf16> -> vector<12x18x64xbf16>
    %75 = vector.extract_strided_slice %74 {offsets = [0, 0, 0], sizes = [10, 16, 64], strides = [1, 1, 1]} : vector<12x18x64xbf16> to vector<10x16x64xbf16>
    %76 = vector.extract_strided_slice %74 {offsets = [0, 1, 0], sizes = [10, 16, 64], strides = [1, 1, 1]} : vector<12x18x64xbf16> to vector<10x16x64xbf16>
    %77 = vector.extract_strided_slice %74 {offsets = [0, 2, 0], sizes = [10, 16, 64], strides = [1, 1, 1]} : vector<12x18x64xbf16> to vector<10x16x64xbf16>
    %78 = vector.extract_strided_slice %74 {offsets = [1, 0, 0], sizes = [10, 16, 64], strides = [1, 1, 1]} : vector<12x18x64xbf16> to vector<10x16x64xbf16>
    %79 = vector.extract_strided_slice %74 {offsets = [1, 1, 0], sizes = [10, 16, 64], strides = [1, 1, 1]} : vector<12x18x64xbf16> to vector<10x16x64xbf16>
    %80 = vector.extract_strided_slice %74 {offsets = [1, 2, 0], sizes = [10, 16, 64], strides = [1, 1, 1]} : vector<12x18x64xbf16> to vector<10x16x64xbf16>
    %81 = vector.extract_strided_slice %74 {offsets = [2, 0, 0], sizes = [10, 16, 64], strides = [1, 1, 1]} : vector<12x18x64xbf16> to vector<10x16x64xbf16>
    %82 = vector.extract_strided_slice %74 {offsets = [2, 1, 0], sizes = [10, 16, 64], strides = [1, 1, 1]} : vector<12x18x64xbf16> to vector<10x16x64xbf16>
    %83 = vector.extract_strided_slice %74 {offsets = [2, 2, 0], sizes = [10, 16, 64], strides = [1, 1, 1]} : vector<12x18x64xbf16> to vector<10x16x64xbf16>
    %84 = tpu.concatenate %75, %76, %77, %78, %79, %80, %81, %82, %83 in 2 : vector<10x16x64xbf16>, vector<10x16x64xbf16>, vector<10x16x64xbf16>, vector<10x16x64xbf16>, vector<10x16x64xbf16>, vector<10x16x64xbf16>, vector<10x16x64xbf16>, vector<10x16x64xbf16>, vector<10x16x64xbf16> -> vector<10x16x576xbf16>
    %85 = vector.shape_cast %84 : vector<10x16x576xbf16> to vector<160x576xbf16>
    %c0_27 = arith.constant 0 : index
    %c0_28 = arith.constant 0 : index
    %86 = vector.load %arg7[%c0_27, %c0_28] : memref<576x64xbf16, #tpu.memory_space<vmem>>, vector<576x64xbf16>
    %cst_29 = arith.constant dense<0.000000e+00> : vector<160x64xf32>
    %87 = tpu.matmul %85, %86, %cst_29 {dimension_numbers = #tpu.dot_dimension_numbers<[1], [0], [0], [1], [0, 0, 1, 1], [], []>} : vector<160x576xbf16>, vector<576x64xbf16>, vector<160x64xf32> -> vector<160x64xf32>
    %88 = vector.shape_cast %87 : vector<160x64xf32> to vector<10x16x64xf32>
    %c0_30 = arith.constant 0 : index
    %c0_31 = arith.constant 0 : index
    %89 = vector.load %arg8[%c0_30, %c0_31] : memref<1x64xf32, #tpu.memory_space<vmem>>, vector<1x64xf32>
    %90 = vector.shape_cast %89 : vector<1x64xf32> to vector<1x1x64xf32>
    %91 = vector.broadcast %90 : vector<1x1x64xf32> to vector<10x16x64xf32>
    %92 = arith.addf %88, %91 : vector<10x16x64xf32>
    %cst_32 = arith.constant 0.000000e+00 : f32
    %93 = vector.broadcast %cst_32 : f32 to vector<10x16x64xf32>
    %94 = arith.maximumf %92, %93 : vector<10x16x64xf32>
    %c1_i32_33 = arith.constant 1 : i32
    %95 = arith.subi %10, %c1_i32_33 : i32
    %96 = tpu.iota {dimensions = array<i32: 0>} : vector<10x16x64xi32>
    %97 = vector.broadcast %95 : i32 to vector<10x16x64xi32>
    %98 = arith.addi %97, %96 : vector<10x16x64xi32>
    %c0_i32_34 = arith.constant 0 : i32
    %99 = vector.broadcast %c0_i32_34 : i32 to vector<10x16x64xi32>
    %100 = arith.cmpi sge, %98, %99 : vector<10x16x64xi32>
    %c16_i32_35 = arith.constant 16 : i32
    %101 = vector.broadcast %c16_i32_35 : i32 to vector<10x16x64xi32>
    %102 = arith.cmpi slt, %98, %101 : vector<10x16x64xi32>
    %103 = arith.andi %100, %102 : vector<10x16x64xi1>
    %cst_36 = arith.constant 0.000000e+00 : f32
    %104 = vector.broadcast %cst_36 : f32 to vector<10x16x64xf32>
    %105 = arith.select %103, %94, %104 : vector<10x16x64xi1>, vector<10x16x64xf32>
    %106 = vector.extract_strided_slice %32 {offsets = [2, 0, 0], sizes = [10, 16, 64], strides = [1, 1, 1]} : vector<14x16x64xf32> to vector<10x16x64xf32>
    %107 = arith.addf %105, %106 : vector<10x16x64xf32>
    %108 = arith.truncf %107 : vector<10x16x64xf32> to vector<10x16x64xbf16>
    %cst_37 = arith.constant 0.000000e+00 : bf16
    %109 = vector.broadcast %cst_37 : bf16 to vector<10x1x64xbf16>
    %110 = tpu.concatenate %109, %108, %109 in 1 : vector<10x1x64xbf16>, vector<10x16x64xbf16>, vector<10x1x64xbf16> -> vector<10x18x64xbf16>
    %111 = vector.extract_strided_slice %110 {offsets = [0, 0, 0], sizes = [8, 16, 64], strides = [1, 1, 1]} : vector<10x18x64xbf16> to vector<8x16x64xbf16>
    %112 = vector.extract_strided_slice %110 {offsets = [0, 1, 0], sizes = [8, 16, 64], strides = [1, 1, 1]} : vector<10x18x64xbf16> to vector<8x16x64xbf16>
    %113 = vector.extract_strided_slice %110 {offsets = [0, 2, 0], sizes = [8, 16, 64], strides = [1, 1, 1]} : vector<10x18x64xbf16> to vector<8x16x64xbf16>
    %114 = vector.extract_strided_slice %110 {offsets = [1, 0, 0], sizes = [8, 16, 64], strides = [1, 1, 1]} : vector<10x18x64xbf16> to vector<8x16x64xbf16>
    %115 = vector.extract_strided_slice %110 {offsets = [1, 1, 0], sizes = [8, 16, 64], strides = [1, 1, 1]} : vector<10x18x64xbf16> to vector<8x16x64xbf16>
    %116 = vector.extract_strided_slice %110 {offsets = [1, 2, 0], sizes = [8, 16, 64], strides = [1, 1, 1]} : vector<10x18x64xbf16> to vector<8x16x64xbf16>
    %117 = vector.extract_strided_slice %110 {offsets = [2, 0, 0], sizes = [8, 16, 64], strides = [1, 1, 1]} : vector<10x18x64xbf16> to vector<8x16x64xbf16>
    %118 = vector.extract_strided_slice %110 {offsets = [2, 1, 0], sizes = [8, 16, 64], strides = [1, 1, 1]} : vector<10x18x64xbf16> to vector<8x16x64xbf16>
    %119 = vector.extract_strided_slice %110 {offsets = [2, 2, 0], sizes = [8, 16, 64], strides = [1, 1, 1]} : vector<10x18x64xbf16> to vector<8x16x64xbf16>
    %120 = tpu.concatenate %111, %112, %113, %114, %115, %116, %117, %118, %119 in 2 : vector<8x16x64xbf16>, vector<8x16x64xbf16>, vector<8x16x64xbf16>, vector<8x16x64xbf16>, vector<8x16x64xbf16>, vector<8x16x64xbf16>, vector<8x16x64xbf16>, vector<8x16x64xbf16>, vector<8x16x64xbf16> -> vector<8x16x576xbf16>
    %121 = vector.shape_cast %120 : vector<8x16x576xbf16> to vector<128x576xbf16>
    %c0_38 = arith.constant 0 : index
    %c0_39 = arith.constant 0 : index
    %122 = vector.load %arg9[%c0_38, %c0_39] : memref<576x64xbf16, #tpu.memory_space<vmem>>, vector<576x64xbf16>
    %cst_40 = arith.constant dense<0.000000e+00> : vector<128x64xf32>
    %123 = tpu.matmul %121, %122, %cst_40 {dimension_numbers = #tpu.dot_dimension_numbers<[1], [0], [0], [1], [0, 0, 1, 1], [], []>} : vector<128x576xbf16>, vector<576x64xbf16>, vector<128x64xf32> -> vector<128x64xf32>
    %124 = vector.shape_cast %123 : vector<128x64xf32> to vector<8x16x64xf32>
    %c0_41 = arith.constant 0 : index
    %c0_42 = arith.constant 0 : index
    %125 = vector.load %arg10[%c0_41, %c0_42] : memref<1x64xf32, #tpu.memory_space<vmem>>, vector<1x64xf32>
    %126 = vector.shape_cast %125 : vector<1x64xf32> to vector<1x1x64xf32>
    %127 = vector.broadcast %126 : vector<1x1x64xf32> to vector<8x16x64xf32>
    %128 = arith.addf %124, %127 : vector<8x16x64xf32>
    %cst_43 = arith.constant 0.000000e+00 : f32
    %129 = vector.broadcast %cst_43 : f32 to vector<8x16x64xf32>
    %130 = arith.maximumf %128, %129 : vector<8x16x64xf32>
    %c0_44 = arith.constant 0 : index
    %c0_45 = arith.constant 0 : index
    %c0_46 = arith.constant 0 : index
    %c0_47 = arith.constant 0 : index
    %131 = vector.load %arg11[%c0_44, %c0_45, %c0_46, %c0_47] : memref<1x8x16x64xf32, #tpu.memory_space<vmem>>, vector<1x8x16x64xf32>
    %132 = vector.shape_cast %131 : vector<1x8x16x64xf32> to vector<8x16x64xf32>
    %133 = vector.shape_cast %130 : vector<8x16x64xf32> to vector<1x8x16x64xf32>
    tpu.vector_store %arg11[%c0_44, %c0_45, %c0_46, %c0_47], %133 {strides = array<i32>} : memref<1x8x16x64xf32, #tpu.memory_space<vmem>>, vector<1x8x16x64xf32>,
    return
  }
  func.func @transform_0(%arg0: i32) -> (i32, i32, i32, i32) {
    %c0_i32 = arith.constant 0 : i32
    %c0_i32_0 = arith.constant 0 : i32
    %c0_i32_1 = arith.constant 0 : i32
    %c0_i32_2 = arith.constant 0 : i32
    return %arg0, %c0_i32, %c0_i32_0, %c0_i32_1 : i32, i32, i32, i32
  }
  func.func @transform_1(%arg0: i32) -> (i32, i32) {
    %c0_i32 = arith.constant 0 : i32
    %c0_i32_0 = arith.constant 0 : i32
    %c0_i32_1 = arith.constant 0 : i32
    return %c0_i32, %c0_i32_0 : i32, i32
  }
  func.func @transform_2(%arg0: i32) -> (i32, i32) {
    %c0_i32 = arith.constant 0 : i32
    %c0_i32_0 = arith.constant 0 : i32
    %c0_i32_1 = arith.constant 0 : i32
    return %c0_i32, %c0_i32_0 : i32, i32
  }
  func.func @transform_3(%arg0: i32) -> (i32, i32) {
    %c0_i32 = arith.constant 0 : i32
    %c0_i32_0 = arith.constant 0 : i32
    %c0_i32_1 = arith.constant 0 : i32
    return %c0_i32, %c0_i32_0 : i32, i32
  }
  func.func @transform_4(%arg0: i32) -> (i32, i32) {
    %c0_i32 = arith.constant 0 : i32
    %c0_i32_0 = arith.constant 0 : i32
    %c0_i32_1 = arith.constant 0 : i32
    return %c0_i32, %c0_i32_0 : i32, i32
  }
  func.func @transform_5(%arg0: i32) -> (i32, i32) {
    %c0_i32 = arith.constant 0 : i32
    %c0_i32_0 = arith.constant 0 : i32
    %c0_i32_1 = arith.constant 0 : i32
    return %c0_i32, %c0_i32_0 : i32, i32
  }
  func.func @transform_6(%arg0: i32) -> (i32, i32) {
    %c0_i32 = arith.constant 0 : i32
    %c0_i32_0 = arith.constant 0 : i32
    %c0_i32_1 = arith.constant 0 : i32
    return %c0_i32, %c0_i32_0 : i32, i32
  }
  func.func @transform_7(%arg0: i32) -> (i32, i32) {
    %c0_i32 = arith.constant 0 : i32
    %c0_i32_0 = arith.constant 0 : i32
    %c0_i32_1 = arith.constant 0 : i32
    return %c0_i32, %c0_i32_0 : i32, i32
  }
  func.func @transform_8(%arg0: i32) -> (i32, i32) {
    %c0_i32 = arith.constant 0 : i32
    %c0_i32_0 = arith.constant 0 : i32
    %c0_i32_1 = arith.constant 0 : i32
    return %c0_i32, %c0_i32_0 : i32, i32
  }
  func.func @transform_9(%arg0: i32) -> (i32, i32) {
    %c0_i32 = arith.constant 0 : i32
    %c0_i32_0 = arith.constant 0 : i32
    %c0_i32_1 = arith.constant 0 : i32
    return %c0_i32, %c0_i32_0 : i32, i32
  }
  func.func @transform_10(%arg0: i32) -> (i32, i32, i32, i32) {
    %c0_i32 = arith.constant 0 : i32
    %c0_i32_0 = arith.constant 0 : i32
    %c0_i32_1 = arith.constant 0 : i32
    %c0_i32_2 = arith.constant 0 : i32
    return %arg0, %c0_i32, %c0_i32_0, %c0_i32_1 : i32, i32, i32, i32
  }
}

</mosaic_0001>

<llo_original>
// kernel: tpu_custom_call.1
$region0: #{tpu_custom_call.1}
  #allocation0 [shape = 'u32[]', space=smem, size = 0x4, offset = 0x4, fixed_abs, tag = 'smem constant byte address 0x4 - core index']
  #allocation1 [shape = 'u32[72,128]{1,0:T(1,128)}', space=vmem, size = 0x9000, scoped, tag = 'internal scratch']
  %s0 = inlined_call_operand.hbm [shape: bf16[12,14,16,27], index: 0, kind: input, shape index: {}]
  %s1 = inlined_call_operand.vmem [shape: bf16[27,64], index: 1, kind: input, shape index: {}]
  %s2 = inlined_call_operand.vmem [shape: f32[1,64], index: 2, kind: input, shape index: {}]
  %s3 = inlined_call_operand.vmem [shape: bf16[576,64], index: 3, kind: input, shape index: {}]
  %s4 = inlined_call_operand.vmem [shape: f32[1,64], index: 4, kind: input, shape index: {}]
  %s5 = inlined_call_operand.vmem [shape: f32[1,64], index: 5, kind: input, shape index: {}]
  %s6 = inlined_call_operand.vmem [shape: bf16[576,64], index: 6, kind: input, shape index: {}]
  %s7 = inlined_call_operand.vmem [shape: f32[1,64], index: 7, kind: input, shape index: {}]
  %s8 = inlined_call_operand.vmem [shape: bf16[576,64], index: 8, kind: input, shape index: {}]
  %s9 = inlined_call_operand.vmem [shape: f32[1,64], index: 9, kind: input, shape index: {}]
  %s10 = inlined_call_operand.hbm [shape: f32[12,8,16,64], index: 10, kind: output, shape index: {}]
  %s11 = sld [smem:[#allocation0]]
  $region77: #{tpu_custom_call.1} parent=0
    _
  %s13 = ssub.s32 1, %s11
  %s14 = scalar_select 0, %s13, %s11
  $region1: #{tpu_custom_call.1} parent=0
    #allocation2 [shape = 'u8[114688]{0}', space=vmem, size = 0x1c000, scoped, tag = 'input window, operand 0']
    #allocation3 [shape = 's32[2]{0}', space=sflag, size = 0x8, scoped, tag = 'scoped memory for tpu_custom_call.1']
    #allocation4 [shape = 's32[2]{0}', space=sflag, size = 0x8, scoped, tag = 'scoped memory for tpu_custom_call.1']
    #allocation5 [shape = 'u8[131072]{0}', space=vmem, size = 0x20000, scoped, tag = 'output window, operand 0']
    %15 = vsyncpa [#allocation3], 0
    %s16 = scalar_lea.sflag [#allocation3], 1
    %17 = vsyncpa %s16, 0
    %18 = vsyncpa [#allocation4], 0
    %s19 = scalar_lea.sflag [#allocation4], 1
    %20 = vsyncpa %s19, 0
    loop: start=0, step=1, limit=14
    $region2: #{tpu_custom_call.1} parent=1 // loop_pre_header
      _
    $region3: #{tpu_custom_call.1} parent=1 // loop_header
      %s22 = sphi 0, %s26
      %p23 = scmp.ge.s32.totalorder %s22, 14
      %s32 = sphi 0, %s34
      %s35 = sphi 0, %s32
      %s36 = sphi 0, %s35
      %s52 = sphi 0, %s36
      %s56 = sphi 0, %s56
      %s58 = sphi 0, %s56
      %s59 = sphi 0, %s58
      %s73 = sphi 0, %s59
      %s77 = sphi 0, %s77
      %s79 = sphi 0, %s77
      %s80 = sphi 0, %s79
      %s94 = sphi 0, %s80
      %s98 = sphi 0, %s98
      %s100 = sphi 0, %s98
      %s101 = sphi 0, %s100
      %s115 = sphi 0, %s101
      %s119 = sphi 0, %s119
      %s121 = sphi 0, %s119
      %s122 = sphi 0, %s121
      %s136 = sphi 0, %s122
      %s140 = sphi 0, %s140
      %s142 = sphi 0, %s140
      %s143 = sphi 0, %s142
      %s157 = sphi 0, %s143
      %s161 = sphi 0, %s161
      %s163 = sphi 0, %s161
      %s164 = sphi 0, %s163
      %s178 = sphi 0, %s164
      %s182 = sphi 0, %s182
      %s184 = sphi 0, %s182
      %s185 = sphi 0, %s184
      %s199 = sphi 0, %s185
      %s203 = sphi 0, %s203
      %s205 = sphi 0, %s203
      %s206 = sphi 0, %s205
      %s220 = sphi 0, %s206
      %s224 = sphi 0, %s224
      %s226 = sphi 0, %s224
      %s227 = sphi 0, %s226
      %s241 = sphi 0, %s227
      %s247 = sphi 0, %s249
      %s250 = sphi 0, %s247
      %s251 = sphi 0, %s250
      %s267 = sphi 0, %s251
    $region4: #{tpu_custom_call.1} parent=1 // loop_header_branch
      %25 = sbr.rel (%p23) target = $region8
    $region5: #{tpu_custom_call.1} parent=1 // loop_body
      %s27 = ssub.s32 %s22, 1
      %s28 = ssub.s32 %s22, 2
      %s29 = sadd.s32 %s22, 1
      %s30 = ssub.s32 %s22, %s29
      %p31 = scmp.eq.s32.totalorder %s30, 0
      %s33 = sadd.s32 %s32, 1
      %s34 = scalar_select %p31, %s32, %s33
      %p37 = pneg %p31
      %p38 = scmp.eq.s32.totalorder %s22, 11
      %p39 = por %p37, %p38
      %p40 = scmp.ne.s32.totalorder %s32, %s35
      %p41 = scmp.eq.s32.totalorder %s22, 0
      %p42 = por %p40, %p41
      %p43 = scmp.ne.s32.totalorder %s32, %s35
      %p44 = scmp.eq.s32.totalorder %s27, 11
      %p45 = por %p43, %p44
      %p46 = scmp.ne.s32.totalorder %s35, %s36
      %p47 = scmp.eq.s32.totalorder %s27, 0
      %p48 = por %p46, %p47
      %p49 = scmp.ne.s32.totalorder %s35, %s36
      %p50 = scmp.eq.s32.totalorder %s28, 11
      %p51 = por %p49, %p50
      %p53 = scmp.ne.s32.totalorder %s36, %s52
      %p54 = scmp.eq.s32.totalorder %s28, 0
      %p55 = por %p53, %p54
      %s57 = sadd.s32 %s56, 1
      %p60 = scmp.eq.s32.totalorder %s22, 11
      %p61 = scmp.ne.s32.totalorder %s56, %s58
      %p62 = scmp.eq.s32.totalorder %s22, 0
      %p63 = por %p61, %p62
      %p64 = scmp.ne.s32.totalorder %s56, %s58
      %p65 = scmp.eq.s32.totalorder %s27, 11
      %p66 = por %p64, %p65
      %p67 = scmp.ne.s32.totalorder %s58, %s59
      %p68 = scmp.eq.s32.totalorder %s27, 0
      %p69 = por %p67, %p68
      %p70 = scmp.ne.s32.totalorder %s58, %s59
      %p71 = scmp.eq.s32.totalorder %s28, 11
      %p72 = por %p70, %p71
      %p74 = scmp.ne.s32.totalorder %s59, %s73
      %p75 = scmp.eq.s32.totalorder %s28, 0
      %p76 = por %p74, %p75
      %s78 = sadd.s32 %s77, 1
      %p81 = scmp.eq.s32.totalorder %s22, 11
      %p82 = scmp.ne.s32.totalorder %s77, %s79
      %p83 = scmp.eq.s32.totalorder %s22, 0
      %p84 = por %p82, %p83
      %p85 = scmp.ne.s32.totalorder %s77, %s79
      %p86 = scmp.eq.s32.totalorder %s27, 11
      %p87 = por %p85, %p86
      %p88 = scmp.ne.s32.totalorder %s79, %s80
      %p89 = scmp.eq.s32.totalorder %s27, 0
      %p90 = por %p88, %p89
      %p91 = scmp.ne.s32.totalorder %s79, %s80
      %p92 = scmp.eq.s32.totalorder %s28, 11
      %p93 = por %p91, %p92
      %p95 = scmp.ne.s32.totalorder %s80, %s94
      %p96 = scmp.eq.s32.totalorder %s28, 0
      %p97 = por %p95, %p96
      %s99 = sadd.s32 %s98, 1
      %p102 = scmp.eq.s32.totalorder %s22, 11
      %p103 = scmp.ne.s32.totalorder %s98, %s100
      %p104 = scmp.eq.s32.totalorder %s22, 0
      %p105 = por %p103, %p104
      %p106 = scmp.ne.s32.totalorder %s98, %s100
      %p107 = scmp.eq.s32.totalorder %s27, 11
      %p108 = por %p106, %p107
      %p109 = scmp.ne.s32.totalorder %s100, %s101
      %p110 = scmp.eq.s32.totalorder %s27, 0
      %p111 = por %p109, %p110
      %p112 = scmp.ne.s32.totalorder %s100, %s101
      %p113 = scmp.eq.s32.totalorder %s28, 11
      %p114 = por %p112, %p113
      %p116 = scmp.ne.s32.totalorder %s101, %s115
      %p117 = scmp.eq.s32.totalorder %s28, 0
      %p118 = por %p116, %p117
      %s120 = sadd.s32 %s119, 1
      %p123 = scmp.eq.s32.totalorder %s22, 11
      %p124 = scmp.ne.s32.totalorder %s119, %s121
      %p125 = scmp.eq.s32.totalorder %s22, 0
      %p126 = por %p124, %p125
      %p127 = scmp.ne.s32.totalorder %s119, %s121
      %p128 = scmp.eq.s32.totalorder %s27, 11
      %p129 = por %p127, %p128
      %p130 = scmp.ne.s32.totalorder %s121, %s122
      %p131 = scmp.eq.s32.totalorder %s27, 0
      %p132 = por %p130, %p131
      %p133 = scmp.ne.s32.totalorder %s121, %s122
      %p134 = scmp.eq.s32.totalorder %s28, 11
      %p135 = por %p133, %p134
      %p137 = scmp.ne.s32.totalorder %s122, %s136
      %p138 = scmp.eq.s32.totalorder %s28, 0
      %p139 = por %p137, %p138
      %s141 = sadd.s32 %s140, 1
      %p144 = scmp.eq.s32.totalorder %s22, 11
      %p145 = scmp.ne.s32.totalorder %s140, %s142
      %p146 = scmp.eq.s32.totalorder %s22, 0
      %p147 = por %p145, %p146
      %p148 = scmp.ne.s32.totalorder %s140, %s142
      %p149 = scmp.eq.s32.totalorder %s27, 11
      %p150 = por %p148, %p149
      %p151 = scmp.ne.s32.totalorder %s142, %s143
      %p152 = scmp.eq.s32.totalorder %s27, 0
      %p153 = por %p151, %p152
      %p154 = scmp.ne.s32.totalorder %s142, %s143
      %p155 = scmp.eq.s32.totalorder %s28, 11
      %p156 = por %p154, %p155
      %p158 = scmp.ne.s32.totalorder %s143, %s157
      %p159 = scmp.eq.s32.totalorder %s28, 0
      %p160 = por %p158, %p159
      %s162 = sadd.s32 %s161, 1
      %p165 = scmp.eq.s32.totalorder %s22, 11
      %p166 = scmp.ne.s32.totalorder %s161, %s163
      %p167 = scmp.eq.s32.totalorder %s22, 0
      %p168 = por %p166, %p167
      %p169 = scmp.ne.s32.totalorder %s161, %s163
      %p170 = scmp.eq.s32.totalorder %s27, 11
      %p171 = por %p169, %p170
      %p172 = scmp.ne.s32.totalorder %s163, %s164
      %p173 = scmp.eq.s32.totalorder %s27, 0
      %p174 = por %p172, %p173
      %p175 = scmp.ne.s32.totalorder %s163, %s164
      %p176 = scmp.eq.s32.totalorder %s28, 11
      %p177 = por %p175, %p176
      %p179 = scmp.ne.s32.totalorder %s164, %s178
      %p180 = scmp.eq.s32.totalorder %s28, 0
      %p181 = por %p179, %p180
      %s183 = sadd.s32 %s182, 1
      %p186 = scmp.eq.s32.totalorder %s22, 11
      %p187 = scmp.ne.s32.totalorder %s182, %s184
      %p188 = scmp.eq.s32.totalorder %s22, 0
      %p189 = por %p187, %p188
      %p190 = scmp.ne.s32.totalorder %s182, %s184
      %p191 = scmp.eq.s32.totalorder %s27, 11
      %p192 = por %p190, %p191
      %p193 = scmp.ne.s32.totalorder %s184, %s185
      %p194 = scmp.eq.s32.totalorder %s27, 0
      %p195 = por %p193, %p194
      %p196 = scmp.ne.s32.totalorder %s184, %s185
      %p197 = scmp.eq.s32.totalorder %s28, 11
      %p198 = por %p196, %p197
      %p200 = scmp.ne.s32.totalorder %s185, %s199
      %p201 = scmp.eq.s32.totalorder %s28, 0
      %p202 = por %p200, %p201
      %s204 = sadd.s32 %s203, 1
      %p207 = scmp.eq.s32.totalorder %s22, 11
      %p208 = scmp.ne.s32.totalorder %s203, %s205
      %p209 = scmp.eq.s32.totalorder %s22, 0
      %p210 = por %p208, %p209
      %p211 = scmp.ne.s32.totalorder %s203, %s205
      %p212 = scmp.eq.s32.totalorder %s27, 11
      %p213 = por %p211, %p212
      %p214 = scmp.ne.s32.totalorder %s205, %s206
      %p215 = scmp.eq.s32.totalorder %s27, 0
      %p216 = por %p214, %p215
      %p217 = scmp.ne.s32.totalorder %s205, %s206
      %p218 = scmp.eq.s32.totalorder %s28, 11
      %p219 = por %p217, %p218
      %p221 = scmp.ne.s32.totalorder %s206, %s220
      %p222 = scmp.eq.s32.totalorder %s28, 0
      %p223 = por %p221, %p222
      %s225 = sadd.s32 %s224, 1
      %p228 = scmp.eq.s32.totalorder %s22, 11
      %p229 = scmp.ne.s32.totalorder %s224, %s226
      %p230 = scmp.eq.s32.totalorder %s22, 0
      %p231 = por %p229, %p230
      %p232 = scmp.ne.s32.totalorder %s224, %s226
      %p233 = scmp.eq.s32.totalorder %s27, 11
      %p234 = por %p232, %p233
      %p235 = scmp.ne.s32.totalorder %s226, %s227
      %p236 = scmp.eq.s32.totalorder %s27, 0
      %p237 = por %p235, %p236
      %p238 = scmp.ne.s32.totalorder %s226, %s227
      %p239 = scmp.eq.s32.totalorder %s28, 11
      %p240 = por %p238, %p239
      %p242 = scmp.ne.s32.totalorder %s227, %s241
      %p243 = scmp.eq.s32.totalorder %s28, 0
      %p244 = por %p242, %p243
      %s245 = ssub.s32 %s22, %s29
      %p246 = scmp.eq.s32.totalorder %s245, 0
      %s248 = sadd.s32 %s247, 1
      %s249 = scalar_select %p246, %s247, %s248
      %p252 = pneg %p246
      %p253 = scmp.eq.s32.totalorder %s22, 11
      %p254 = por %p252, %p253
      %p255 = scmp.ne.s32.totalorder %s247, %s250
      %p256 = scmp.eq.s32.totalorder %s22, 0
      %p257 = por %p255, %p256
      %p258 = scmp.ne.s32.totalorder %s247, %s250
      %p259 = scmp.eq.s32.totalorder %s27, 11
      %p260 = por %p258, %p259
      %p261 = scmp.ne.s32.totalorder %s250, %s251
      %p262 = scmp.eq.s32.totalorder %s27, 0
      %p263 = por %p261, %p262
      %p264 = scmp.ne.s32.totalorder %s250, %s251
      %p265 = scmp.eq.s32.totalorder %s28, 11
      %p266 = por %p264, %p265
      %p268 = scmp.ne.s32.totalorder %s251, %s267
      %p269 = scmp.eq.s32.totalorder %s28, 0
      %p270 = por %p268, %p269
      %p271 = scmp.le.s32.totalorder 1, %s22
      %p272 = scmp.lt.s32.totalorder %s22, 13
      %p273 = pnand %p271, %p272
      %p274 = pneg %p273
      // Predicated region
      $region9: #{tpu_custom_call.1} parent=5 // pred_check
        _
      $region10: #{tpu_custom_call.1} parent=5 // pred_check_branch
        %276 = sbr.rel (%p273) target = $region12
      $region11: #{tpu_custom_call.1} parent=5 // pred_region
        %s277 = ssub.s32 %s22, 1
        // Predicated region
        $region13: #{tpu_custom_call.1} parent=11 // pred_check
          %p278 = pneg %p69
        $region14: #{tpu_custom_call.1} parent=11 // pred_check_branch
          %280 = sbr.rel (%p278) target = $region16
        $region15: #{tpu_custom_call.1} parent=11 // pred_region
          _
        $region16: #{tpu_custom_call.1} parent=11 // pred_fallthru
          _
        // Predicated region
        $region17: #{tpu_custom_call.1} parent=11 // pred_check
          %p281 = pneg %p90
        $region18: #{tpu_custom_call.1} parent=11 // pred_check_branch
          %283 = sbr.rel (%p281) target = $region20
        $region19: #{tpu_custom_call.1} parent=11 // pred_region
          _
        $region20: #{tpu_custom_call.1} parent=11 // pred_fallthru
          _
        // Predicated region
        $region21: #{tpu_custom_call.1} parent=11 // pred_check
          %p284 = pneg %p111
        $region22: #{tpu_custom_call.1} parent=11 // pred_check_branch
          %286 = sbr.rel (%p284) target = $region24
        $region23: #{tpu_custom_call.1} parent=11 // pred_region
          _
        $region24: #{tpu_custom_call.1} parent=11 // pred_fallthru
          _
        // Predicated region
        $region25: #{tpu_custom_call.1} parent=11 // pred_check
          %p287 = pneg %p132
        $region26: #{tpu_custom_call.1} parent=11 // pred_check_branch
          %289 = sbr.rel (%p287) target = $region28
        $region27: #{tpu_custom_call.1} parent=11 // pred_region
          _
        $region28: #{tpu_custom_call.1} parent=11 // pred_fallthru
          _
        // Predicated region
        $region29: #{tpu_custom_call.1} parent=11 // pred_check
          %p290 = pneg %p153
        $region30: #{tpu_custom_call.1} parent=11 // pred_check_branch
          %292 = sbr.rel (%p290) target = $region32
        $region31: #{tpu_custom_call.1} parent=11 // pred_region
          _
        $region32: #{tpu_custom_call.1} parent=11 // pred_fallthru
          _
        // Predicated region
        $region33: #{tpu_custom_call.1} parent=11 // pred_check
          %p293 = pneg %p174
        $region34: #{tpu_custom_call.1} parent=11 // pred_check_branch
          %295 = sbr.rel (%p293) target = $region36
        $region35: #{tpu_custom_call.1} parent=11 // pred_region
          _
        $region36: #{tpu_custom_call.1} parent=11 // pred_fallthru
          _
        // Predicated region
        $region37: #{tpu_custom_call.1} parent=11 // pred_check
          %p296 = pneg %p195
        $region38: #{tpu_custom_call.1} parent=11 // pred_check_branch
          %298 = sbr.rel (%p296) target = $region40
        $region39: #{tpu_custom_call.1} parent=11 // pred_region
          _
        $region40: #{tpu_custom_call.1} parent=11 // pred_fallthru
          _
        // Predicated region
        $region41: #{tpu_custom_call.1} parent=11 // pred_check
          %p299 = pneg %p216
        $region42: #{tpu_custom_call.1} parent=11 // pred_check_branch
          %301 = sbr.rel (%p299) target = $region44
        $region43: #{tpu_custom_call.1} parent=11 // pred_region
          _
        $region44: #{tpu_custom_call.1} parent=11 // pred_fallthru
          _
        // Predicated region
        $region45: #{tpu_custom_call.1} parent=11 // pred_check
          %p302 = pneg %p237
        $region46: #{tpu_custom_call.1} parent=11 // pred_check_branch
          %304 = sbr.rel (%p302) target = $region48
        $region47: #{tpu_custom_call.1} parent=11 // pred_region
          _
        $region48: #{tpu_custom_call.1} parent=11 // pred_fallthru
          _
      $region12: #{tpu_custom_call.1} parent=5 // pred_fallthru
        _
      %p305 = scmp.lt.s32.totalorder %s22, 12
      // Predicated region
      $region49: #{tpu_custom_call.1} parent=5 // pred_check
        %p306 = pneg %p305
      $region50: #{tpu_custom_call.1} parent=5 // pred_check_branch
        %308 = sbr.rel (%p306) target = $region52
      $region51: #{tpu_custom_call.1} parent=5 // pred_region
        // Predicated region
        $region53: #{tpu_custom_call.1} parent=51 // pred_check
          %p309 = pneg %p42
        $region54: #{tpu_custom_call.1} parent=51 // pred_check_branch
          %311 = sbr.rel (%p309) target = $region56
        $region55: #{tpu_custom_call.1} parent=51 // pred_region
          %s312 = sand.u32 %s32, 1
          %s313 = scalar_lea.sflag [#allocation3], %s312
          %s314 = sand.u32 %s32, 1
          %s315 = smul.addr %s314, 112
          %s316 = scalar_lea.vmem [#allocation2], %s315
          %318 = vsyncadd %s313, 0
          %s319 = smul.addr %s22, 28
          %s320 = smul.addr %s319, 4
          %s321 = scalar_lea.hbm %s0, %s320
          %s322 = sshll.u32 %s321, 4
          %s323 = int_to_ptr.hbm [resolvable:$true] %s322
          %s324 = sshll.u32 %s316, 4
          %s325 = int_to_ptr.vmem [resolvable:$true] %s324
          %330 = dma.hbm_to_vmem [thread:$0]  %s323, 1792, %s325, %s313, 64, 64, 4
        $region56: #{tpu_custom_call.1} parent=51 // pred_fallthru
          _
      $region52: #{tpu_custom_call.1} parent=5 // pred_fallthru
        _
      %p331 = scmp.le.s32.totalorder 1, %s22
      %p332 = scmp.lt.s32.totalorder %s22, 13
      %p333 = pnand %p331, %p332
      %p334 = pneg %p333
      // Predicated region
      $region57: #{tpu_custom_call.1} parent=5 // pred_check
        _
      $region58: #{tpu_custom_call.1} parent=5 // pred_check_branch
        %336 = sbr.rel (%p333) target = $region60
      $region59: #{tpu_custom_call.1} parent=5 // pred_region
        %s337 = ssub.s32 %s22, 1
        %s338 = sand.u32 %s35, 1
        %s339 = scalar_lea.sflag [#allocation3], %s338
        %s340 = sand.u32 %s35, 1
        %s341 = smul.addr %s340, 112
        %s342 = scalar_lea.vmem [#allocation2], %s341
        // Predicated region
        $region61: #{tpu_custom_call.1} parent=59 // pred_check
          %p343 = pneg %p48
        $region62: #{tpu_custom_call.1} parent=59 // pred_check_branch
          %345 = sbr.rel (%p343) target = $region64
        $region63: #{tpu_custom_call.1} parent=59 // pred_region
          %347 = dma.done %s339, 1792
        $region64: #{tpu_custom_call.1} parent=59 // pred_fallthru
          _
        %s348 = sand.u32 %s35, 1
        %s349 = scalar_lea.sflag [#allocation3], %s348
        %s350 = sand.u32 %s35, 1
        %s351 = smul.addr %s350, 112
        %s352 = scalar_lea.vmem [#allocation2], %s351
        %p353 = pneg %p48
        %p354 = pneg %p45
        %p355 = pneg %p69
        %p356 = pneg %p66
        %p357 = pneg %p90
        %p358 = pneg %p87
        %p359 = pneg %p111
        %p360 = pneg %p108
        %p361 = pneg %p132
        %p362 = pneg %p129
        %p363 = pneg %p153
        %p364 = pneg %p150
        %p365 = pneg %p174
        %p366 = pneg %p171
        %p367 = pneg %p195
        %p368 = pneg %p192
        %p369 = pneg %p216
        %p370 = pneg %p213
        %p371 = pneg %p237
        %p372 = pneg %p234
        %p373 = pneg %p263
        %p374 = pneg %p260
        %s375 = sand.u32 %s250, 1
        %s376 = scalar_lea.sflag [#allocation4], %s375
        %s377 = sand.u32 %s250, 1
        %s378 = smul.addr %s377, 128
        %s379 = scalar_lea.vmem [#allocation5], %s378
        %p381 = scmp.lt.s32.totalorder %s27, 0
        %s382 = ssub.s32 0, %s27
        %s383 = scalar_select %p381, %s382, %s27
        %s384 = sand.u32 %s383, 1
        %s385 = ssub.s32 0, %s384
        %s386 = scalar_select %p381, %s385, %s384
        %p387 = scmp.ne.s32.totalorder %s386, 0
        %p388 = scmp.lt.s32.totalorder %s386, 0
        %p389 = pnand %p388, %p387
        %p390 = pneg %p389
        %s391 = sadd.s32 %s386, 2
        %s392 = scalar_select %p390, %s391, %s386
        %s393 = smul.u32 %s392, 8
        %v394 = vld [vmem:[%s342] sm:$0xf]
        %v395 = vld [vmem:[%s342 + $0x4] sm:$0xf]
        %v396 = vld [vmem:[%s342 + $0x8] sm:$0xf]
        %v397 = vld [vmem:[%s342 + $0xc] sm:$0xf]
        %v398 = vld [vmem:[%s342 + $0x10] sm:$0xf]
        %v399 = vld [vmem:[%s342 + $0x14] sm:$0xf]
        %v400 = vld [vmem:[%s342 + $0x18] sm:$0xf]
        %v401 = vld [vmem:[%s342 + $0x1c] sm:$0xf]
        %v402 = vld [vmem:[%s342 + $0x20] sm:$0xf]
        %v403 = vld [vmem:[%s342 + $0x24] sm:$0xf]
        %v404 = vld [vmem:[%s342 + $0x28] sm:$0xf]
        %v405 = vld [vmem:[%s342 + $0x2c] sm:$0xf]
        %v406 = vld [vmem:[%s342 + $0x30] sm:$0xf]
        %v407 = vld [vmem:[%s342 + $0x34] sm:$0xf]
        %v408 = vld [vmem:[%s342 + $0x38] sm:$0xf]
        %v409 = vld [vmem:[%s342 + $0x3c] sm:$0xf]
        %v410 = vld [vmem:[%s342 + $0x40] sm:$0xf]
        %v411 = vld [vmem:[%s342 + $0x44] sm:$0xf]
        %v412 = vld [vmem:[%s342 + $0x48] sm:$0xf]
        %v413 = vld [vmem:[%s342 + $0x4c] sm:$0xf]
        %v414 = vld [vmem:[%s342 + $0x50] sm:$0xf]
        %v415 = vld [vmem:[%s342 + $0x54] sm:$0xf]
        %v416 = vld [vmem:[%s342 + $0x58] sm:$0xf]
        %v417 = vld [vmem:[%s342 + $0x5c] sm:$0xf]
        %v418 = vld [vmem:[%s342 + $0x60] sm:$0xf]
        %v419 = vld [vmem:[%s342 + $0x64] sm:$0xf]
        %v420 = vld [vmem:[%s342 + $0x68] sm:$0xf]
        %v421 = vld [vmem:[%s342 + $0x6c] sm:$0xf]
        %v422 = vld [vmem:[%s1] sm:$0xf]
        %v423 = vld [vmem:[%s1 + $0x4] sm:$0xf]
        %v424 = vld [vmem:[%s1 + $0x8] sm:$0xf]
        %v425 = vld [vmem:[%s1 + $0xc] sm:$0x3]
        %v426 = vld [vmem:[%s2] sm:$0x1]
        %v428 = vperm.slane %v426, 0
        %v458 = vunpack.c.l.b16 %v394
        %v459 = vunpack.c.l.b16 %v395
        %v460 = vunpack.c.l.b16 %v396
        %v461 = vunpack.c.l.b16 %v397
        %v462 = vunpack.c.l.b16 %v398
        %v463 = vunpack.c.l.b16 %v399
        %v464 = vunpack.c.l.b16 %v400
        %v465 = vunpack.c.l.b16 %v401
        %v466 = vunpack.c.l.b16 %v402
        %v467 = vunpack.c.l.b16 %v403
        %v468 = vunpack.c.l.b16 %v404
        %v469 = vunpack.c.l.b16 %v405
        %v470 = vunpack.c.l.b16 %v406
        %v471 = vunpack.c.l.b16 %v407
        %v472 = vunpack.c.l.b16 %v408
        %v473 = vunpack.c.l.b16 %v409
        %v474 = vunpack.c.l.b16 %v410
        %v475 = vunpack.c.l.b16 %v411
        %v476 = vunpack.c.l.b16 %v412
        %v477 = vunpack.c.l.b16 %v413
        %v478 = vunpack.c.l.b16 %v414
        %v479 = vunpack.c.l.b16 %v415
        %v480 = vunpack.c.l.b16 %v416
        %v481 = vunpack.c.l.b16 %v417
        %v482 = vunpack.c.l.b16 %v418
        %v483 = vunpack.c.l.b16 %v419
        %v484 = vunpack.c.l.b16 %v420
        %v485 = vunpack.c.l.b16 %v421
        %v486 = vpack.c.b16 %v459, %v458
        %v487 = vpack.c.b16 %v461, %v460
        %v488 = vpack.c.b16 %v463, %v462
        %v489 = vpack.c.b16 %v465, %v464
        %v490 = vpack.c.b16 %v467, %v466
        %v491 = vpack.c.b16 %v469, %v468
        %v492 = vpack.c.b16 %v471, %v470
        %v493 = vpack.c.b16 %v473, %v472
        %v494 = vpack.c.b16 %v475, %v474
        %v495 = vpack.c.b16 %v477, %v476
        %v496 = vpack.c.b16 %v479, %v478
        %v497 = vpack.c.b16 %v481, %v480
        %v498 = vpack.c.b16 %v483, %v482
        %v499 = vpack.c.b16 %v485, %v484
        %v504 = vunpack.c.l.b16 %v422
        %v505 = vunpack.c.l.b16 %v423
        %v506 = vunpack.c.l.b16 %v424
        %v507 = vunpack.c.l.b16 %v425
        %v508 = vpack.c.b16 %v505, %v504
        %v509 = vpack.c.b16 %v507, %v506
        %vm511 = vcmask 220160
        %v513 = vsel %vm511, %v486, 0
        %v516 = vsel %vm511, %v487, 0
        %v519 = vsel %vm511, %v488, 0
        %v522 = vsel %vm511, %v489, 0
        %v525 = vsel %vm511, %v490, 0
        %v528 = vsel %vm511, %v491, 0
        %v531 = vsel %vm511, %v492, 0
        %v534 = vsel %vm511, %v493, 0
        %v537 = vsel %vm511, %v494, 0
        %v540 = vsel %vm511, %v495, 0
        %v543 = vsel %vm511, %v496, 0
        %v546 = vsel %vm511, %v497, 0
        %v549 = vsel %vm511, %v498, 0
        %v552 = vsel %vm511, %v499, 0
        %vm554 = vcmask 1044480
        %vm555 = vcmask 1045504
        %v556 = vsel %vm554, 4294967295, 65535
        %v557 = vsel %vm555, %v556, 0
        %v559 = vand.u32 %v509, %v557
        %561 = vmatpush.bf16.msra.mxu0 0
        %562 = vmatpush.bf16.msra.mxu0 0
        %563 = vmatpush.bf16.msra.mxu0 0
        %564 = vmatpush.bf16.msra.mxu0 0
        %565 = vmatpush.bf16.msra.mxu0 0
        %566 = vmatpush.bf16.msra.mxu0 0
        %567 = vmatpush.bf16.msra.mxu0 %v559
        %568 = vmatpush.bf16.msra.mxu0 %v508
        %569 = vmatmul.bf16.gmra.mxu0 %v513
        %v570 = vpop.f32.mrf.mxu0
        %v571 = vadd.f32 %v428, %v570
        %v572 = vpop.f32.mrf.mxu0
        %v573 = vadd.f32 %v428, %v572
        %574 = vmatmul.bf16.gmra.mxu0 %v516
        %v575 = vpop.f32.mrf.mxu0
        %v576 = vadd.f32 %v428, %v575
        %v577 = vpop.f32.mrf.mxu0
        %v578 = vadd.f32 %v428, %v577
        %579 = vmatmul.bf16.gmra.mxu0 %v519
        %v580 = vpop.f32.mrf.mxu0
        %v581 = vadd.f32 %v428, %v580
        %v582 = vpop.f32.mrf.mxu0
        %v583 = vadd.f32 %v428, %v582
        %584 = vmatmul.bf16.gmra.mxu0 %v522
        %v585 = vpop.f32.mrf.mxu0
        %v586 = vadd.f32 %v428, %v585
        %v587 = vpop.f32.mrf.mxu0
        %v588 = vadd.f32 %v428, %v587
        %589 = vmatmul.bf16.gmra.mxu0 %v525
        %v590 = vpop.f32.mrf.mxu0
        %v591 = vadd.f32 %v428, %v590
        %v592 = vpop.f32.mrf.mxu0
        %v593 = vadd.f32 %v428, %v592
        %594 = vmatmul.bf16.gmra.mxu0 %v528
        %v595 = vpop.f32.mrf.mxu0
        %v596 = vadd.f32 %v428, %v595
        %v597 = vpop.f32.mrf.mxu0
        %v598 = vadd.f32 %v428, %v597
        %599 = vmatmul.bf16.gmra.mxu0 %v531
        %v600 = vpop.f32.mrf.mxu0
        %v601 = vadd.f32 %v428, %v600
        %v602 = vpop.f32.mrf.mxu0
        %v603 = vadd.f32 %v428, %v602
        %604 = vmatmul.bf16.gmra.mxu0 %v534
        %v605 = vpop.f32.mrf.mxu0
        %v606 = vadd.f32 %v428, %v605
        %v607 = vpop.f32.mrf.mxu0
        %v608 = vadd.f32 %v428, %v607
        %609 = vmatmul.bf16.gmra.mxu0 %v537
        %v610 = vpop.f32.mrf.mxu0
        %v611 = vadd.f32 %v428, %v610
        %v612 = vpop.f32.mrf.mxu0
        %v613 = vadd.f32 %v428, %v612
        %614 = vmatmul.bf16.gmra.mxu0 %v540
        %v615 = vpop.f32.mrf.mxu0
        %v616 = vadd.f32 %v428, %v615
        %v617 = vpop.f32.mrf.mxu0
        %v618 = vadd.f32 %v428, %v617
        %619 = vmatmul.bf16.gmra.mxu0 %v543
        %v620 = vpop.f32.mrf.mxu0
        %v621 = vadd.f32 %v428, %v620
        %v622 = vpop.f32.mrf.mxu0
        %v623 = vadd.f32 %v428, %v622
        %624 = vmatmul.bf16.gmra.mxu0 %v546
        %v625 = vpop.f32.mrf.mxu0
        %v626 = vadd.f32 %v428, %v625
        %v627 = vpop.f32.mrf.mxu0
        %v628 = vadd.f32 %v428, %v627
        %629 = vmatmul.bf16.gmra.mxu0 %v549
        %v630 = vpop.f32.mrf.mxu0
        %v631 = vadd.f32 %v428, %v630
        %v632 = vpop.f32.mrf.mxu0
        %v633 = vadd.f32 %v428, %v632
        %634 = vmatmul.bf16.gmra.mxu0 %v552
        %v635 = vpop.f32.mrf.mxu0
        %v636 = vadd.f32 %v428, %v635
        %v637 = vpop.f32.mrf.mxu0
        %v638 = vadd.f32 %v428, %v637
        %639 = vdwg.mxu0
        %v640 = vmax.f32 %v571, 0.0
        %v641 = vmax.f32 %v573, 0.0
        %v642 = vmax.f32 %v576, 0.0
        %v643 = vmax.f32 %v578, 0.0
        %v644 = vmax.f32 %v581, 0.0
        %v645 = vmax.f32 %v583, 0.0
        %v646 = vmax.f32 %v586, 0.0
        %v647 = vmax.f32 %v588, 0.0
        %v648 = vmax.f32 %v591, 0.0
        %v649 = vmax.f32 %v593, 0.0
        %v650 = vmax.f32 %v596, 0.0
        %v651 = vmax.f32 %v598, 0.0
        %v652 = vmax.f32 %v601, 0.0
        %v653 = vmax.f32 %v603, 0.0
        %v654 = vmax.f32 %v606, 0.0
        %v655 = vmax.f32 %v608, 0.0
        %v656 = vmax.f32 %v611, 0.0
        %v657 = vmax.f32 %v613, 0.0
        %v658 = vmax.f32 %v616, 0.0
        %v659 = vmax.f32 %v618, 0.0
        %v660 = vmax.f32 %v621, 0.0
        %v661 = vmax.f32 %v623, 0.0
        %v662 = vmax.f32 %v626, 0.0
        %v663 = vmax.f32 %v628, 0.0
        %v664 = vmax.f32 %v631, 0.0
        %v665 = vmax.f32 %v633, 0.0
        %v666 = vmax.f32 %v636, 0.0
        %v667 = vmax.f32 %v638, 0.0
        %s668 = ssub.s32 %s393, 3
        %v669 = vstv %s668
        %v670 = vadd.s32 %v669, 1
        %v671 = vadd.s32 %v669, 2
        %v672 = vadd.s32 %v669, 3
        %v673 = vadd.s32 %v669, 4
        %v674 = vadd.s32 %v669, 5
        %v675 = vadd.s32 %v669, 6
        %v676 = vadd.s32 %v669, 7
        %v677 = vadd.s32 %v669, 8
        %v678 = vadd.s32 %v669, 9
        %v679 = vadd.s32 %v669, 10
        %v680 = vadd.s32 %v669, 11
        %v681 = vadd.s32 %v669, 12
        %v682 = vadd.s32 %v669, 13
        %vm683 = vcmp.ge.s32.totalorder %v669, 0
        %vm684 = vcmp.ge.s32.totalorder %v670, 0
        %vm685 = vcmp.ge.s32.totalorder %v671, 0
        %vm686 = vcmp.ge.s32.totalorder %v672, 0
        %vm687 = vcmp.ge.s32.totalorder %v673, 0
        %vm688 = vcmp.ge.s32.totalorder %v674, 0
        %vm689 = vcmp.ge.s32.totalorder %v675, 0
        %vm690 = vcmp.ge.s32.totalorder %v676, 0
        %vm691 = vcmp.ge.s32.totalorder %v677, 0
        %vm692 = vcmp.ge.s32.totalorder %v678, 0
        %vm693 = vcmp.ge.s32.totalorder %v679, 0
        %vm694 = vcmp.ge.s32.totalorder %v680, 0
        %vm695 = vcmp.ge.s32.totalorder %v681, 0
        %vm696 = vcmp.ge.s32.totalorder %v682, 0
        %vm697 = vcmp.lt.s32.totalorder %v669, 16
        %vm698 = vcmp.lt.s32.totalorder %v670, 16
        %vm699 = vcmp.lt.s32.totalorder %v671, 16
        %vm700 = vcmp.lt.s32.totalorder %v672, 16
        %vm701 = vcmp.lt.s32.totalorder %v673, 16
        %vm702 = vcmp.lt.s32.totalorder %v674, 16
        %vm703 = vcmp.lt.s32.totalorder %v675, 16
        %vm704 = vcmp.lt.s32.totalorder %v676, 16
        %vm705 = vcmp.lt.s32.totalorder %v677, 16
        %vm706 = vcmp.lt.s32.totalorder %v678, 16
        %vm707 = vcmp.lt.s32.totalorder %v679, 16
        %vm708 = vcmp.lt.s32.totalorder %v680, 16
        %vm709 = vcmp.lt.s32.totalorder %v681, 16
        %vm710 = vcmp.lt.s32.totalorder %v682, 16
        %vm711 = vmand %vm683, %vm697
        %vm712 = vmand %vm684, %vm698
        %vm713 = vmand %vm685, %vm699
        %vm714 = vmand %vm686, %vm700
        %vm715 = vmand %vm687, %vm701
        %vm716 = vmand %vm688, %vm702
        %vm717 = vmand %vm689, %vm703
        %vm718 = vmand %vm690, %vm704
        %vm719 = vmand %vm691, %vm705
        %vm720 = vmand %vm692, %vm706
        %vm721 = vmand %vm693, %vm707
        %vm722 = vmand %vm694, %vm708
        %vm723 = vmand %vm695, %vm709
        %vm724 = vmand %vm696, %vm710
        %v725 = vsel %vm711, %v640, 0.0
        %v726 = vsel %vm711, %v641, 0.0
        %v727 = vsel %vm712, %v642, 0.0
        %v728 = vsel %vm712, %v643, 0.0
        %v729 = vsel %vm713, %v644, 0.0
        %v730 = vsel %vm713, %v645, 0.0
        %v731 = vsel %vm714, %v646, 0.0
        %v732 = vsel %vm714, %v647, 0.0
        %v733 = vsel %vm715, %v648, 0.0
        %v734 = vsel %vm715, %v649, 0.0
        %v735 = vsel %vm716, %v650, 0.0
        %v736 = vsel %vm716, %v651, 0.0
        %v737 = vsel %vm717, %v652, 0.0
        %v738 = vsel %vm717, %v653, 0.0
        %v739 = vsel %vm718, %v654, 0.0
        %v740 = vsel %vm718, %v655, 0.0
        %v741 = vsel %vm719, %v656, 0.0
        %v742 = vsel %vm719, %v657, 0.0
        %v743 = vsel %vm720, %v658, 0.0
        %v744 = vsel %vm720, %v659, 0.0
        %v745 = vsel %vm721, %v660, 0.0
        %v746 = vsel %vm721, %v661, 0.0
        %v747 = vsel %vm722, %v662, 0.0
        %v748 = vsel %vm722, %v663, 0.0
        %v749 = vsel %vm723, %v664, 0.0
        %v750 = vsel %vm723, %v665, 0.0
        %v751 = vsel %vm724, %v666, 0.0
        %v752 = vsel %vm724, %v667, 0.0
        %v753 = vpack.c.bf16 %v725, %v725
        %v754 = vpack.c.bf16 %v726, %v726
        %v755 = vpack.c.bf16 %v727, %v727
        %v756 = vpack.c.bf16 %v728, %v728
        %v757 = vpack.c.bf16 %v729, %v729
        %v758 = vpack.c.bf16 %v730, %v730
        %v759 = vpack.c.bf16 %v731, %v731
        %v760 = vpack.c.bf16 %v732, %v732
        %v761 = vpack.c.bf16 %v733, %v733
        %v762 = vpack.c.bf16 %v734, %v734
        %v763 = vpack.c.bf16 %v735, %v735
        %v764 = vpack.c.bf16 %v736, %v736
        %v765 = vpack.c.bf16 %v737, %v737
        %v766 = vpack.c.bf16 %v738, %v738
        %v767 = vpack.c.bf16 %v739, %v739
        %v768 = vpack.c.bf16 %v740, %v740
        %v769 = vpack.c.bf16 %v741, %v741
        %v770 = vpack.c.bf16 %v742, %v742
        %v771 = vpack.c.bf16 %v743, %v743
        %v772 = vpack.c.bf16 %v744, %v744
        %v773 = vpack.c.bf16 %v745, %v745
        %v774 = vpack.c.bf16 %v746, %v746
        %v775 = vpack.c.bf16 %v747, %v747
        %v776 = vpack.c.bf16 %v748, %v748
        %v777 = vpack.c.bf16 %v749, %v749
        %v778 = vpack.c.bf16 %v750, %v750
        %v779 = vpack.c.bf16 %v751, %v751
        %v780 = vpack.c.bf16 %v752, %v752
        %v809 = vunpack.c.l.b16 %v753
        %v810 = vunpack.c.l.b16 %v754
        %v811 = vunpack.c.l.b16 %v755
        %v812 = vunpack.c.l.b16 %v756
        %v813 = vunpack.c.l.b16 %v757
        %v814 = vunpack.c.l.b16 %v758
        %v815 = vunpack.c.l.b16 %v759
        %v816 = vunpack.c.l.b16 %v760
        %v817 = vunpack.c.l.b16 %v761
        %v818 = vunpack.c.l.b16 %v762
        %v819 = vunpack.c.l.b16 %v763
        %v820 = vunpack.c.l.b16 %v764
        %v821 = vunpack.c.l.b16 %v765
        %v822 = vunpack.c.l.b16 %v766
        %v823 = vunpack.c.l.b16 %v767
        %v824 = vunpack.c.l.b16 %v768
        %v825 = vunpack.c.l.b16 %v769
        %v826 = vunpack.c.l.b16 %v770
        %v827 = vunpack.c.l.b16 %v771
        %v828 = vunpack.c.l.b16 %v772
        %v829 = vunpack.c.l.b16 %v773
        %v830 = vunpack.c.l.b16 %v774
        %v831 = vunpack.c.l.b16 %v775
        %v832 = vunpack.c.l.b16 %v776
        %v833 = vunpack.c.l.b16 %v777
        %v834 = vunpack.c.l.b16 %v778
        %v835 = vunpack.c.l.b16 %v779
        %v836 = vunpack.c.l.b16 %v780
        %v837 = vpack.c.b16 %v810, %v809
        %v838 = vpack.c.b16 %v812, %v811
        %v839 = vpack.c.b16 %v814, %v813
        %v840 = vpack.c.b16 %v816, %v815
        %v841 = vpack.c.b16 %v818, %v817
        %v842 = vpack.c.b16 %v820, %v819
        %v843 = vpack.c.b16 %v822, %v821
        %v844 = vpack.c.b16 %v824, %v823
        %v845 = vpack.c.b16 %v826, %v825
        %v846 = vpack.c.b16 %v828, %v827
        %v847 = vpack.c.b16 %v830, %v829
        %v848 = vpack.c.b16 %v832, %v831
        %v849 = vpack.c.b16 %v834, %v833
        %v850 = vpack.c.b16 %v836, %v835
        %v852 = vshrl.u32 %v837, 16
        %v854 = vrot.slane %v852, 7
        %v855 = vshll.u32 %v837, 16
        %v857 = vor.u32 %v854, %v855
        %v859 = vshrl.u32 %v838, 16
        %v861 = vrot.slane %v859, 7
        %v862 = vshll.u32 %v838, 16
        %v864 = vor.u32 %v861, %v862
        %v866 = vshrl.u32 %v839, 16
        %v868 = vrot.slane %v866, 7
        %v869 = vshll.u32 %v839, 16
        %v871 = vor.u32 %v868, %v869
        %v873 = vshrl.u32 %v840, 16
        %v875 = vrot.slane %v873, 7
        %v876 = vshll.u32 %v840, 16
        %v878 = vor.u32 %v875, %v876
        %v880 = vshrl.u32 %v841, 16
        %v882 = vrot.slane %v880, 7
        %v883 = vshll.u32 %v841, 16
        %v885 = vor.u32 %v882, %v883
        %v887 = vshrl.u32 %v842, 16
        %v889 = vrot.slane %v887, 7
        %v890 = vshll.u32 %v842, 16
        %v892 = vor.u32 %v889, %v890
        %v894 = vshrl.u32 %v843, 16
        %v896 = vrot.slane %v894, 7
        %v897 = vshll.u32 %v843, 16
        %v899 = vor.u32 %v896, %v897
        %v901 = vshrl.u32 %v844, 16
        %v903 = vrot.slane %v901, 7
        %v904 = vshll.u32 %v844, 16
        %v906 = vor.u32 %v903, %v904
        %v908 = vshrl.u32 %v845, 16
        %v910 = vrot.slane %v908, 7
        %v911 = vshll.u32 %v845, 16
        %v913 = vor.u32 %v910, %v911
        %v915 = vshrl.u32 %v846, 16
        %v917 = vrot.slane %v915, 7
        %v918 = vshll.u32 %v846, 16
        %v920 = vor.u32 %v917, %v918
        %v922 = vshrl.u32 %v847, 16
        %v924 = vrot.slane %v922, 7
        %v925 = vshll.u32 %v847, 16
        %v927 = vor.u32 %v924, %v925
        %v929 = vshrl.u32 %v848, 16
        %v931 = vrot.slane %v929, 7
        %v932 = vshll.u32 %v848, 16
        %v934 = vor.u32 %v931, %v932
        %v936 = vshrl.u32 %v849, 16
        %v938 = vrot.slane %v936, 7
        %v939 = vshll.u32 %v849, 16
        %v941 = vor.u32 %v938, %v939
        %v943 = vshrl.u32 %v850, 16
        %v945 = vrot.slane %v943, 7
        %v946 = vshll.u32 %v850, 16
        %v948 = vor.u32 %v945, %v946
        %vm977 = vcmask 1040384
        %vm978 = vsmask.f32 256
        %vm979 = vmand %vm977, %vm978
        %v980 = vsel %vm979, 0, %v857
        %v981 = vsel %vm979, 0, %v864
        %v982 = vsel %vm979, 0, %v871
        %v983 = vsel %vm979, 0, %v878
        %v984 = vsel %vm979, 0, %v885
        %v985 = vsel %vm979, 0, %v892
        %v986 = vsel %vm979, 0, %v899
        %v987 = vsel %vm979, 0, %v906
        %v988 = vsel %vm979, 0, %v913
        %v989 = vsel %vm979, 0, %v920
        %v990 = vsel %vm979, 0, %v927
        %v991 = vsel %vm979, 0, %v934
        %v992 = vsel %vm979, 0, %v941
        %v993 = vsel %vm979, 0, %v948
        %v994 = vsel %vm979, %v854, 0
        %v995 = vsel %vm979, %v861, 0
        %v996 = vsel %vm979, %v868, 0
        %v997 = vsel %vm979, %v875, 0
        %v998 = vsel %vm979, %v882, 0
        %v999 = vsel %vm979, %v889, 0
        %v1000 = vsel %vm979, %v896, 0
        %v1001 = vsel %vm979, %v903, 0
        %v1002 = vsel %vm979, %v910, 0
        %v1003 = vsel %vm979, %v917, 0
        %v1004 = vsel %vm979, %v924, 0
        %v1005 = vsel %vm979, %v931, 0
        %v1006 = vsel %vm979, %v938, 0
        %v1007 = vsel %vm979, %v945, 0
        %vm1008 = vsmask.f32 7424
        %v1010 = vshrl.u32 %v980, 16
        %v1012 = vshll.u32 %v980, 16
        %v1014 = vrot.slane %v1012, 1
        %v1015 = vor.u32 %v1010, %v1014
        %v1017 = vshll.u32 %v994, 16
        %v1019 = vrot.slane %v1017, 1
        %v1020 = vsel %vm1008, %v1015, %v1019
        %v1022 = vshrl.u32 %v981, 16
        %v1024 = vshll.u32 %v981, 16
        %v1026 = vrot.slane %v1024, 1
        %v1027 = vor.u32 %v1022, %v1026
        %v1029 = vshll.u32 %v995, 16
        %v1031 = vrot.slane %v1029, 1
        %v1032 = vsel %vm1008, %v1027, %v1031
        %v1034 = vshrl.u32 %v982, 16
        %v1036 = vshll.u32 %v982, 16
        %v1038 = vrot.slane %v1036, 1
        %v1039 = vor.u32 %v1034, %v1038
        %v1041 = vshll.u32 %v996, 16
        %v1043 = vrot.slane %v1041, 1
        %v1044 = vsel %vm1008, %v1039, %v1043
        %v1046 = vshrl.u32 %v983, 16
        %v1048 = vshll.u32 %v983, 16
        %v1050 = vrot.slane %v1048, 1
        %v1051 = vor.u32 %v1046, %v1050
        %v1053 = vshll.u32 %v997, 16
        %v1055 = vrot.slane %v1053, 1
        %v1056 = vsel %vm1008, %v1051, %v1055
        %v1058 = vshrl.u32 %v984, 16
        %v1060 = vshll.u32 %v984, 16
        %v1062 = vrot.slane %v1060, 1
        %v1063 = vor.u32 %v1058, %v1062
        %v1065 = vshll.u32 %v998, 16
        %v1067 = vrot.slane %v1065, 1
        %v1068 = vsel %vm1008, %v1063, %v1067
        %v1070 = vshrl.u32 %v985, 16
        %v1072 = vshll.u32 %v985, 16
        %v1074 = vrot.slane %v1072, 1
        %v1075 = vor.u32 %v1070, %v1074
        %v1077 = vshll.u32 %v999, 16
        %v1079 = vrot.slane %v1077, 1
        %v1080 = vsel %vm1008, %v1075, %v1079
        %v1082 = vshrl.u32 %v986, 16
        %v1084 = vshll.u32 %v986, 16
        %v1086 = vrot.slane %v1084, 1
        %v1087 = vor.u32 %v1082, %v1086
        %v1089 = vshll.u32 %v1000, 16
        %v1091 = vrot.slane %v1089, 1
        %v1092 = vsel %vm1008, %v1087, %v1091
        %v1094 = vshrl.u32 %v987, 16
        %v1096 = vshll.u32 %v987, 16
        %v1098 = vrot.slane %v1096, 1
        %v1099 = vor.u32 %v1094, %v1098
        %v1101 = vshll.u32 %v1001, 16
        %v1103 = vrot.slane %v1101, 1
        %v1104 = vsel %vm1008, %v1099, %v1103
        %v1106 = vshrl.u32 %v988, 16
        %v1108 = vshll.u32 %v988, 16
        %v1110 = vrot.slane %v1108, 1
        %v1111 = vor.u32 %v1106, %v1110
        %v1113 = vshll.u32 %v1002, 16
        %v1115 = vrot.slane %v1113, 1
        %v1116 = vsel %vm1008, %v1111, %v1115
        %v1118 = vshrl.u32 %v989, 16
        %v1120 = vshll.u32 %v989, 16
        %v1122 = vrot.slane %v1120, 1
        %v1123 = vor.u32 %v1118, %v1122
        %v1125 = vshll.u32 %v1003, 16
        %v1127 = vrot.slane %v1125, 1
        %v1128 = vsel %vm1008, %v1123, %v1127
        %v1130 = vshrl.u32 %v990, 16
        %v1132 = vshll.u32 %v990, 16
        %v1134 = vrot.slane %v1132, 1
        %v1135 = vor.u32 %v1130, %v1134
        %v1137 = vshll.u32 %v1004, 16
        %v1139 = vrot.slane %v1137, 1
        %v1140 = vsel %vm1008, %v1135, %v1139
        %v1142 = vshrl.u32 %v991, 16
        %v1144 = vshll.u32 %v991, 16
        %v1146 = vrot.slane %v1144, 1
        %v1147 = vor.u32 %v1142, %v1146
        %v1149 = vshll.u32 %v1005, 16
        %v1151 = vrot.slane %v1149, 1
        %v1152 = vsel %vm1008, %v1147, %v1151
        %1153 = vrot.lane.b32.xlu0 %v1020, 64
        %v1154 = vpop.permute.xlu0 %1153
        %1155 = vrot.lane.b32.xlu0 %v1032, 64
        %v1156 = vpop.permute.xlu0 %1155
        %1157 = vrot.lane.b32.xlu0 %v1044, 64
        %v1158 = vpop.permute.xlu0 %1157
        %1159 = vrot.lane.b32.xlu0 %v1056, 64
        %v1160 = vpop.permute.xlu0 %1159
        %1161 = vrot.lane.b32.xlu0 %v1068, 64
        %v1162 = vpop.permute.xlu0 %1161
        %1163 = vrot.lane.b32.xlu0 %v1080, 64
        %v1164 = vpop.permute.xlu0 %1163
        %1165 = vrot.lane.b32.xlu0 %v1092, 64
        %v1166 = vpop.permute.xlu0 %1165
        %1167 = vrot.lane.b32.xlu0 %v1104, 64
        %v1168 = vpop.permute.xlu0 %1167
        %1169 = vrot.lane.b32.xlu0 %v1116, 64
        %v1170 = vpop.permute.xlu0 %1169
        %1171 = vrot.lane.b32.xlu0 %v1128, 64
        %v1172 = vpop.permute.xlu0 %1171
        %1173 = vrot.lane.b32.xlu0 %v1140, 64
        %v1174 = vpop.permute.xlu0 %1173
        %1175 = vrot.lane.b32.xlu0 %v1152, 64
        %v1176 = vpop.permute.xlu0 %1175
        %vm1201 = vcmask 1046528
        %v1202 = vrot.slane %v980, 1
        %v1203 = vrot.slane %v994, 1
        %v1204 = vsel %vm1201, %v1202, %v1203
        %v1205 = vrot.slane %v981, 1
        %v1206 = vrot.slane %v995, 1
        %v1207 = vsel %vm1201, %v1205, %v1206
        %v1208 = vrot.slane %v982, 1
        %v1209 = vrot.slane %v996, 1
        %v1210 = vsel %vm1201, %v1208, %v1209
        %v1211 = vrot.slane %v983, 1
        %v1212 = vrot.slane %v997, 1
        %v1213 = vsel %vm1201, %v1211, %v1212
        %v1214 = vrot.slane %v984, 1
        %v1215 = vrot.slane %v998, 1
        %v1216 = vsel %vm1201, %v1214, %v1215
        %v1217 = vrot.slane %v985, 1
        %v1218 = vrot.slane %v999, 1
        %v1219 = vsel %vm1201, %v1217, %v1218
        %v1220 = vrot.slane %v986, 1
        %v1221 = vrot.slane %v1000, 1
        %v1222 = vsel %vm1201, %v1220, %v1221
        %v1223 = vrot.slane %v987, 1
        %v1224 = vrot.slane %v1001, 1
        %v1225 = vsel %vm1201, %v1223, %v1224
        %v1226 = vrot.slane %v988, 1
        %v1227 = vrot.slane %v1002, 1
        %v1228 = vsel %vm1201, %v1226, %v1227
        %v1229 = vrot.slane %v989, 1
        %v1230 = vrot.slane %v1003, 1
        %v1231 = vsel %vm1201, %v1229, %v1230
        %v1232 = vrot.slane %v990, 1
        %v1233 = vrot.slane %v1004, 1
        %v1234 = vsel %vm1201, %v1232, %v1233
        %v1235 = vrot.slane %v991, 1
        %v1236 = vrot.slane %v1005, 1
        %v1237 = vsel %vm1201, %v1235, %v1236
        %1239 = vrot.lane.b32.xlu0 %v981, 64
        %v1240 = vpop.permute.xlu0 %1239
        %1241 = vrot.lane.b32.xlu0 %v982, 64
        %v1242 = vpop.permute.xlu0 %1241
        %1243 = vrot.lane.b32.xlu0 %v983, 64
        %v1244 = vpop.permute.xlu0 %1243
        %1245 = vrot.lane.b32.xlu0 %v984, 64
        %v1246 = vpop.permute.xlu0 %1245
        %1247 = vrot.lane.b32.xlu0 %v985, 64
        %v1248 = vpop.permute.xlu0 %1247
        %1249 = vrot.lane.b32.xlu0 %v986, 64
        %v1250 = vpop.permute.xlu0 %1249
        %1251 = vrot.lane.b32.xlu0 %v987, 64
        %v1252 = vpop.permute.xlu0 %1251
        %1253 = vrot.lane.b32.xlu0 %v988, 64
        %v1254 = vpop.permute.xlu0 %1253
        %1255 = vrot.lane.b32.xlu0 %v989, 64
        %v1256 = vpop.permute.xlu0 %1255
        %1257 = vrot.lane.b32.xlu0 %v990, 64
        %v1258 = vpop.permute.xlu0 %1257
        %1259 = vrot.lane.b32.xlu0 %v991, 64
        %v1260 = vpop.permute.xlu0 %1259
        %1261 = vrot.lane.b32.xlu0 %v992, 64
        %v1262 = vpop.permute.xlu0 %1261
        %v1264 = vshrl.u32 %v992, 16
        %v1266 = vshll.u32 %v992, 16
        %v1268 = vrot.slane %v1266, 1
        %v1269 = vor.u32 %v1264, %v1268
        %v1271 = vshll.u32 %v1006, 16
        %v1273 = vrot.slane %v1271, 1
        %v1274 = vsel %vm1008, %v1269, %v1273
        %v1276 = vrot.slane %v992, 1
        %v1277 = vrot.slane %v1006, 1
        %v1278 = vsel %vm1201, %v1276, %v1277
        %1279 = vrot.lane.b32.xlu0 %v1207, 64
        %v1280 = vpop.permute.xlu0 %1279
        %1281 = vrot.lane.b32.xlu0 %v1210, 64
        %v1282 = vpop.permute.xlu0 %1281
        %1283 = vrot.lane.b32.xlu0 %v1213, 64
        %v1284 = vpop.permute.xlu0 %1283
        %1285 = vrot.lane.b32.xlu0 %v1216, 64
        %v1286 = vpop.permute.xlu0 %1285
        %1287 = vrot.lane.b32.xlu0 %v1219, 64
        %v1288 = vpop.permute.xlu0 %1287
        %1289 = vrot.lane.b32.xlu0 %v1222, 64
        %v1290 = vpop.permute.xlu0 %1289
        %1291 = vrot.lane.b32.xlu0 %v1225, 64
        %v1292 = vpop.permute.xlu0 %1291
        %1293 = vrot.lane.b32.xlu0 %v1228, 64
        %v1294 = vpop.permute.xlu0 %1293
        %1295 = vrot.lane.b32.xlu0 %v1231, 64
        %v1296 = vpop.permute.xlu0 %1295
        %1297 = vrot.lane.b32.xlu0 %v1234, 64
        %v1298 = vpop.permute.xlu0 %1297
        %1299 = vrot.lane.b32.xlu0 %v1237, 64
        %v1300 = vpop.permute.xlu0 %1299
        %1301 = vrot.lane.b32.xlu0 %v1278, 64
        %v1302 = vpop.permute.xlu0 %1301
        %v1304 = vshrl.u32 %v993, 16
        %v1306 = vshll.u32 %v993, 16
        %v1308 = vrot.slane %v1306, 1
        %v1309 = vor.u32 %v1304, %v1308
        %v1311 = vshll.u32 %v1007, 16
        %v1313 = vrot.slane %v1311, 1
        %v1314 = vsel %vm1008, %v1309, %v1313
        %1315 = vrot.lane.b32.xlu0 %v1274, 64
        %v1316 = vpop.permute.xlu0 %1315
        %1317 = vrot.lane.b32.xlu0 %v1314, 64
        %v1318 = vpop.permute.xlu0 %1317
        %v1321 = vrot.slane %v993, 1
        %v1322 = vrot.slane %v1007, 1
        %v1323 = vsel %vm1201, %v1321, %v1322
        %vm1324 = vcmask 523264
        %v1326 = vsel %vm1324, %v980, %v1154
        %v1329 = vsel %vm1324, %v981, %v1156
        %v1332 = vsel %vm1324, %v982, %v1158
        %v1335 = vsel %vm1324, %v983, %v1160
        %v1338 = vsel %vm1324, %v984, %v1162
        %v1341 = vsel %vm1324, %v985, %v1164
        %v1344 = vsel %vm1324, %v986, %v1166
        %v1347 = vsel %vm1324, %v987, %v1168
        %v1350 = vsel %vm1324, %v988, %v1170
        %v1353 = vsel %vm1324, %v989, %v1172
        %v1356 = vsel %vm1324, %v990, %v1174
        %v1359 = vsel %vm1324, %v991, %v1176
        %v1363 = vsel %vm1324, %v1204, %v1240
        %v1367 = vsel %vm1324, %v1207, %v1242
        %v1371 = vsel %vm1324, %v1210, %v1244
        %v1375 = vsel %vm1324, %v1213, %v1246
        %v1379 = vsel %vm1324, %v1216, %v1248
        %v1383 = vsel %vm1324, %v1219, %v1250
        %v1387 = vsel %vm1324, %v1222, %v1252
        %v1391 = vsel %vm1324, %v1225, %v1254
        %v1395 = vsel %vm1324, %v1228, %v1256
        %v1399 = vsel %vm1324, %v1231, %v1258
        %v1403 = vsel %vm1324, %v1234, %v1260
        %v1407 = vsel %vm1324, %v1237, %v1262
        %v1411 = vsel %vm1324, %v1032, %v1280
        %v1415 = vsel %vm1324, %v1044, %v1282
        %v1419 = vsel %vm1324, %v1056, %v1284
        %v1423 = vsel %vm1324, %v1068, %v1286
        %v1427 = vsel %vm1324, %v1080, %v1288
        %v1431 = vsel %vm1324, %v1092, %v1290
        %v1435 = vsel %vm1324, %v1104, %v1292
        %v1439 = vsel %vm1324, %v1116, %v1294
        %v1443 = vsel %vm1324, %v1128, %v1296
        %v1447 = vsel %vm1324, %v1140, %v1298
        %v1451 = vsel %vm1324, %v1152, %v1300
        %v1455 = vsel %vm1324, %v1274, %v1302
        %v1458 = vsel %vm1324, %v992, %v1316
        %v1461 = vsel %vm1324, %v993, %v1318
        %v1463 = vld [vmem:[%s3] sm:$0xf]
        %v1464 = vld [vmem:[%s3 + $0x4] sm:$0xf]
        %v1465 = vld [vmem:[%s3 + $0x8] sm:$0xf]
        %v1466 = vld [vmem:[%s3 + $0xc] sm:$0xf]
        %v1467 = vld [vmem:[%s3 + $0x10] sm:$0xf]
        %v1468 = vld [vmem:[%s3 + $0x14] sm:$0xf]
        %v1469 = vld [vmem:[%s3 + $0x18] sm:$0xf]
        %v1470 = vld [vmem:[%s3 + $0x1c] sm:$0xf]
        %v1471 = vld [vmem:[%s3 + $0x20] sm:$0xf]
        %v1472 = vld [vmem:[%s3 + $0x24] sm:$0xf]
        %v1473 = vld [vmem:[%s3 + $0x28] sm:$0xf]
        %v1474 = vld [vmem:[%s3 + $0x2c] sm:$0xf]
        %v1475 = vld [vmem:[%s3 + $0x30] sm:$0xf]
        %v1476 = vld [vmem:[%s3 + $0x34] sm:$0xf]
        %v1477 = vld [vmem:[%s3 + $0x38] sm:$0xf]
        %v1478 = vld [vmem:[%s3 + $0x3c] sm:$0xf]
        %v1479 = vld [vmem:[%s3 + $0x40] sm:$0xf]
        %v1480 = vld [vmem:[%s3 + $0x44] sm:$0xf]
        %v1481 = vld [vmem:[%s3 + $0x48] sm:$0xf]
        %v1482 = vld [vmem:[%s3 + $0x4c] sm:$0xf]
        %v1483 = vld [vmem:[%s3 + $0x50] sm:$0xf]
        %v1484 = vld [vmem:[%s3 + $0x54] sm:$0xf]
        %v1485 = vld [vmem:[%s3 + $0x58] sm:$0xf]
        %v1486 = vld [vmem:[%s3 + $0x5c] sm:$0xf]
        %v1487 = vld [vmem:[%s3 + $0x60] sm:$0xf]
        %v1488 = vld [vmem:[%s3 + $0x64] sm:$0xf]
        %v1489 = vld [vmem:[%s3 + $0x68] sm:$0xf]
        %v1490 = vld [vmem:[%s3 + $0x6c] sm:$0xf]
        %v1491 = vld [vmem:[%s3 + $0x70] sm:$0xf]
        %v1492 = vld [vmem:[%s3 + $0x74] sm:$0xf]
        %v1493 = vld [vmem:[%s3 + $0x78] sm:$0xf]
        %v1494 = vld [vmem:[%s3 + $0x7c] sm:$0xf]
        %v1495 = vld [vmem:[%s3 + $0x80] sm:$0xf]
        %v1496 = vld [vmem:[%s3 + $0x84] sm:$0xf]
        %v1497 = vld [vmem:[%s3 + $0x88] sm:$0xf]
        %v1498 = vld [vmem:[%s3 + $0x8c] sm:$0xf]
        %v1499 = vld [vmem:[%s3 + $0x90] sm:$0xf]
        %v1500 = vld [vmem:[%s3 + $0x94] sm:$0xf]
        %v1501 = vld [vmem:[%s3 + $0x98] sm:$0xf]
        %v1502 = vld [vmem:[%s3 + $0x9c] sm:$0xf]
        %v1503 = vld [vmem:[%s3 + $0xa0] sm:$0xf]
        %v1504 = vld [vmem:[%s3 + $0xa4] sm:$0xf]
        %v1505 = vld [vmem:[%s3 + $0xa8] sm:$0xf]
        %v1506 = vld [vmem:[%s3 + $0xac] sm:$0xf]
        %v1507 = vld [vmem:[%s3 + $0xb0] sm:$0xf]
        %v1508 = vld [vmem:[%s3 + $0xb4] sm:$0xf]
        %v1509 = vld [vmem:[%s3 + $0xb8] sm:$0xf]
        %v1510 = vld [vmem:[%s3 + $0xbc] sm:$0xf]
        %v1511 = vld [vmem:[%s3 + $0xc0] sm:$0xf]
        %v1512 = vld [vmem:[%s3 + $0xc4] sm:$0xf]
        %v1513 = vld [vmem:[%s3 + $0xc8] sm:$0xf]
        %v1514 = vld [vmem:[%s3 + $0xcc] sm:$0xf]
        %v1515 = vld [vmem:[%s3 + $0xd0] sm:$0xf]
        %v1516 = vld [vmem:[%s3 + $0xd4] sm:$0xf]
        %v1517 = vld [vmem:[%s3 + $0xd8] sm:$0xf]
        %v1518 = vld [vmem:[%s3 + $0xdc] sm:$0xf]
        %v1519 = vld [vmem:[%s3 + $0xe0] sm:$0xf]
        %v1520 = vld [vmem:[%s3 + $0xe4] sm:$0xf]
        %v1521 = vld [vmem:[%s3 + $0xe8] sm:$0xf]
        %v1522 = vld [vmem:[%s3 + $0xec] sm:$0xf]
        %v1523 = vld [vmem:[%s3 + $0xf0] sm:$0xf]
        %v1524 = vld [vmem:[%s3 + $0xf4] sm:$0xf]
        %v1525 = vld [vmem:[%s3 + $0xf8] sm:$0xf]
        %v1526 = vld [vmem:[%s3 + $0xfc] sm:$0xf]
        %v1527 = vld [vmem:[%s3 + $0x100] sm:$0xf]
        %v1528 = vld [vmem:[%s3 + $0x104] sm:$0xf]
        %v1529 = vld [vmem:[%s3 + $0x108] sm:$0xf]
        %v1530 = vld [vmem:[%s3 + $0x10c] sm:$0xf]
        %v1531 = vld [vmem:[%s3 + $0x110] sm:$0xf]
        %v1532 = vld [vmem:[%s3 + $0x114] sm:$0xf]
        %v1533 = vld [vmem:[%s3 + $0x118] sm:$0xf]
        %v1534 = vld [vmem:[%s3 + $0x11c] sm:$0xf]
        %v1607 = vunpack.c.l.b16 %v1463
        %v1608 = vunpack.c.l.b16 %v1464
        %v1609 = vunpack.c.l.b16 %v1465
        %v1610 = vunpack.c.l.b16 %v1466
        %v1611 = vunpack.c.l.b16 %v1467
        %v1612 = vunpack.c.l.b16 %v1468
        %v1613 = vunpack.c.l.b16 %v1469
        %v1614 = vunpack.c.l.b16 %v1470
        %v1615 = vunpack.c.l.b16 %v1471
        %v1616 = vunpack.c.l.b16 %v1472
        %v1617 = vunpack.c.l.b16 %v1473
        %v1618 = vunpack.c.l.b16 %v1474
        %v1619 = vunpack.c.l.b16 %v1475
        %v1620 = vunpack.c.l.b16 %v1476
        %v1621 = vunpack.c.l.b16 %v1477
        %v1622 = vunpack.c.l.b16 %v1478
        %v1623 = vunpack.c.l.b16 %v1479
        %v1624 = vunpack.c.l.b16 %v1480
        %v1625 = vunpack.c.l.b16 %v1481
        %v1626 = vunpack.c.l.b16 %v1482
        %v1627 = vunpack.c.l.b16 %v1483
        %v1628 = vunpack.c.l.b16 %v1484
        %v1629 = vunpack.c.l.b16 %v1485
        %v1630 = vunpack.c.l.b16 %v1486
        %v1631 = vunpack.c.l.b16 %v1487
        %v1632 = vunpack.c.l.b16 %v1488
        %v1633 = vunpack.c.l.b16 %v1489
        %v1634 = vunpack.c.l.b16 %v1490
        %v1635 = vunpack.c.l.b16 %v1491
        %v1636 = vunpack.c.l.b16 %v1492
        %v1637 = vunpack.c.l.b16 %v1493
        %v1638 = vunpack.c.l.b16 %v1494
        %v1639 = vunpack.c.l.b16 %v1495
        %v1640 = vunpack.c.l.b16 %v1496
        %v1641 = vunpack.c.l.b16 %v1497
        %v1642 = vunpack.c.l.b16 %v1498
        %v1643 = vunpack.c.l.b16 %v1499
        %v1644 = vunpack.c.l.b16 %v1500
        %v1645 = vunpack.c.l.b16 %v1501
        %v1646 = vunpack.c.l.b16 %v1502
        %v1647 = vunpack.c.l.b16 %v1503
        %v1648 = vunpack.c.l.b16 %v1504
        %v1649 = vunpack.c.l.b16 %v1505
        %v1650 = vunpack.c.l.b16 %v1506
        %v1651 = vunpack.c.l.b16 %v1507
        %v1652 = vunpack.c.l.b16 %v1508
        %v1653 = vunpack.c.l.b16 %v1509
        %v1654 = vunpack.c.l.b16 %v1510
        %v1655 = vunpack.c.l.b16 %v1511
        %v1656 = vunpack.c.l.b16 %v1512
        %v1657 = vunpack.c.l.b16 %v1513
        %v1658 = vunpack.c.l.b16 %v1514
        %v1659 = vunpack.c.l.b16 %v1515
        %v1660 = vunpack.c.l.b16 %v1516
        %v1661 = vunpack.c.l.b16 %v1517
        %v1662 = vunpack.c.l.b16 %v1518
        %v1663 = vunpack.c.l.b16 %v1519
        %v1664 = vunpack.c.l.b16 %v1520
        %v1665 = vunpack.c.l.b16 %v1521
        %v1666 = vunpack.c.l.b16 %v1522
        %v1667 = vunpack.c.l.b16 %v1523
        %v1668 = vunpack.c.l.b16 %v1524
        %v1669 = vunpack.c.l.b16 %v1525
        %v1670 = vunpack.c.l.b16 %v1526
        %v1671 = vunpack.c.l.b16 %v1527
        %v1672 = vunpack.c.l.b16 %v1528
        %v1673 = vunpack.c.l.b16 %v1529
        %v1674 = vunpack.c.l.b16 %v1530
        %v1675 = vunpack.c.l.b16 %v1531
        %v1676 = vunpack.c.l.b16 %v1532
        %v1677 = vunpack.c.l.b16 %v1533
        %v1678 = vunpack.c.l.b16 %v1534
        %v1679 = vpack.c.b16 %v1608, %v1607
        %v1680 = vpack.c.b16 %v1610, %v1609
        %v1681 = vpack.c.b16 %v1612, %v1611
        %v1682 = vpack.c.b16 %v1614, %v1613
        %v1683 = vpack.c.b16 %v1616, %v1615
        %v1684 = vpack.c.b16 %v1618, %v1617
        %v1685 = vpack.c.b16 %v1620, %v1619
        %v1686 = vpack.c.b16 %v1622, %v1621
        %v1687 = vpack.c.b16 %v1624, %v1623
        %v1688 = vpack.c.b16 %v1626, %v1625
        %v1689 = vpack.c.b16 %v1628, %v1627
        %v1690 = vpack.c.b16 %v1630, %v1629
        %v1691 = vpack.c.b16 %v1632, %v1631
        %v1692 = vpack.c.b16 %v1634, %v1633
        %v1693 = vpack.c.b16 %v1636, %v1635
        %v1694 = vpack.c.b16 %v1638, %v1637
        %v1695 = vpack.c.b16 %v1640, %v1639
        %v1696 = vpack.c.b16 %v1642, %v1641
        %v1697 = vpack.c.b16 %v1644, %v1643
        %v1698 = vpack.c.b16 %v1646, %v1645
        %v1699 = vpack.c.b16 %v1648, %v1647
        %v1700 = vpack.c.b16 %v1650, %v1649
        %v1701 = vpack.c.b16 %v1652, %v1651
        %v1702 = vpack.c.b16 %v1654, %v1653
        %v1703 = vpack.c.b16 %v1656, %v1655
        %v1704 = vpack.c.b16 %v1658, %v1657
        %v1705 = vpack.c.b16 %v1660, %v1659
        %v1706 = vpack.c.b16 %v1662, %v1661
        %v1707 = vpack.c.b16 %v1664, %v1663
        %v1708 = vpack.c.b16 %v1666, %v1665
        %v1709 = vpack.c.b16 %v1668, %v1667
        %v1710 = vpack.c.b16 %v1670, %v1669
        %v1711 = vpack.c.b16 %v1672, %v1671
        %v1712 = vpack.c.b16 %v1674, %v1673
        %v1713 = vpack.c.b16 %v1676, %v1675
        %v1714 = vpack.c.b16 %v1678, %v1677
        %v1751 = vsel %vm1324, %v1210, 0
        %v1753 = vsel %vm1324, %v1213, 0
        %v1755 = vsel %vm1324, %v1216, 0
        %v1757 = vsel %vm1324, %v1219, 0
        %v1759 = vsel %vm1324, %v1222, 0
        %v1761 = vsel %vm1324, %v1225, 0
        %v1763 = vsel %vm1324, %v1228, 0
        %v1765 = vsel %vm1324, %v1231, 0
        %v1767 = vsel %vm1324, %v1234, 0
        %v1769 = vsel %vm1324, %v1237, 0
        %v1772 = vsel %vm1324, %v1278, 0
        %v1775 = vsel %vm1324, %v1323, 0
        %1777 = vmatpush.bf16.msra.mxu0 %v1686
        %1778 = vmatpush.bf16.msra.mxu0 %v1685
        %1779 = vmatpush.bf16.msra.mxu0 %v1684
        %1780 = vmatpush.bf16.msra.mxu0 %v1683
        %1781 = vmatpush.bf16.msra.mxu0 %v1682
        %1782 = vmatpush.bf16.msra.mxu0 %v1681
        %1783 = vmatpush.bf16.msra.mxu0 %v1680
        %1784 = vmatpush.bf16.msra.mxu0 %v1679
        %1785 = vmatmul.bf16.gmra.mxu0 %v1326
        %v1786 = vpop.f32.mrf.mxu0
        %v1787 = vadd.f32 0.0, %v1786
        %v1788 = vpop.f32.mrf.mxu0
        %v1789 = vadd.f32 0.0, %v1788
        %1790 = vmatmul.bf16.gmra.mxu0 %v1329
        %v1791 = vpop.f32.mrf.mxu0
        %v1792 = vadd.f32 0.0, %v1791
        %v1793 = vpop.f32.mrf.mxu0
        %v1794 = vadd.f32 0.0, %v1793
        %1795 = vmatmul.bf16.gmra.mxu0 %v1332
        %v1796 = vpop.f32.mrf.mxu0
        %v1797 = vadd.f32 0.0, %v1796
        %v1798 = vpop.f32.mrf.mxu0
        %v1799 = vadd.f32 0.0, %v1798
        %1800 = vmatmul.bf16.gmra.mxu0 %v1335
        %v1801 = vpop.f32.mrf.mxu0
        %v1802 = vadd.f32 0.0, %v1801
        %v1803 = vpop.f32.mrf.mxu0
        %v1804 = vadd.f32 0.0, %v1803
        %1805 = vmatmul.bf16.gmra.mxu0 %v1338
        %v1806 = vpop.f32.mrf.mxu0
        %v1807 = vadd.f32 0.0, %v1806
        %v1808 = vpop.f32.mrf.mxu0
        %v1809 = vadd.f32 0.0, %v1808
        %1810 = vmatmul.bf16.gmra.mxu0 %v1341
        %v1811 = vpop.f32.mrf.mxu0
        %v1812 = vadd.f32 0.0, %v1811
        %v1813 = vpop.f32.mrf.mxu0
        %v1814 = vadd.f32 0.0, %v1813
        %1815 = vmatmul.bf16.gmra.mxu0 %v1344
        %v1816 = vpop.f32.mrf.mxu0
        %v1817 = vadd.f32 0.0, %v1816
        %v1818 = vpop.f32.mrf.mxu0
        %v1819 = vadd.f32 0.0, %v1818
        %1820 = vmatmul.bf16.gmra.mxu0 %v1347
        %v1821 = vpop.f32.mrf.mxu0
        %v1822 = vadd.f32 0.0, %v1821
        %v1823 = vpop.f32.mrf.mxu0
        %v1824 = vadd.f32 0.0, %v1823
        %1825 = vmatmul.bf16.gmra.mxu0 %v1350
        %v1826 = vpop.f32.mrf.mxu0
        %v1827 = vadd.f32 0.0, %v1826
        %v1828 = vpop.f32.mrf.mxu0
        %v1829 = vadd.f32 0.0, %v1828
        %1830 = vmatmul.bf16.gmra.mxu0 %v1353
        %v1831 = vpop.f32.mrf.mxu0
        %v1832 = vadd.f32 0.0, %v1831
        %v1833 = vpop.f32.mrf.mxu0
        %v1834 = vadd.f32 0.0, %v1833
        %1835 = vmatmul.bf16.gmra.mxu0 %v1356
        %v1836 = vpop.f32.mrf.mxu0
        %v1837 = vadd.f32 0.0, %v1836
        %v1838 = vpop.f32.mrf.mxu0
        %v1839 = vadd.f32 0.0, %v1838
        %1840 = vmatmul.bf16.gmra.mxu0 %v1359
        %v1841 = vpop.f32.mrf.mxu0
        %v1842 = vadd.f32 0.0, %v1841
        %v1843 = vpop.f32.mrf.mxu0
        %v1844 = vadd.f32 0.0, %v1843
        %1845 = vdwg.mxu0
        %1846 = vmatpush.bf16.msra.mxu0 %v1694
        %1847 = vmatpush.bf16.msra.mxu0 %v1693
        %1848 = vmatpush.bf16.msra.mxu0 %v1692
        %1849 = vmatpush.bf16.msra.mxu0 %v1691
        %1850 = vmatpush.bf16.msra.mxu0 %v1690
        %1851 = vmatpush.bf16.msra.mxu0 %v1689
        %1852 = vmatpush.bf16.msra.mxu0 %v1688
        %1853 = vmatpush.bf16.msra.mxu0 %v1687
        %1854 = vmatmul.bf16.gmra.mxu0 %v1363
        %v1855 = vpop.f32.mrf.mxu0
        %v1856 = vadd.f32 %v1787, %v1855
        %v1857 = vpop.f32.mrf.mxu0
        %v1858 = vadd.f32 %v1789, %v1857
        %1859 = vmatmul.bf16.gmra.mxu0 %v1367
        %v1860 = vpop.f32.mrf.mxu0
        %v1861 = vadd.f32 %v1792, %v1860
        %v1862 = vpop.f32.mrf.mxu0
        %v1863 = vadd.f32 %v1794, %v1862
        %1864 = vmatmul.bf16.gmra.mxu0 %v1371
        %v1865 = vpop.f32.mrf.mxu0
        %v1866 = vadd.f32 %v1797, %v1865
        %v1867 = vpop.f32.mrf.mxu0
        %v1868 = vadd.f32 %v1799, %v1867
        %1869 = vmatmul.bf16.gmra.mxu0 %v1375
        %v1870 = vpop.f32.mrf.mxu0
        %v1871 = vadd.f32 %v1802, %v1870
        %v1872 = vpop.f32.mrf.mxu0
        %v1873 = vadd.f32 %v1804, %v1872
        %1874 = vmatmul.bf16.gmra.mxu0 %v1379
        %v1875 = vpop.f32.mrf.mxu0
        %v1876 = vadd.f32 %v1807, %v1875
        %v1877 = vpop.f32.mrf.mxu0
        %v1878 = vadd.f32 %v1809, %v1877
        %1879 = vmatmul.bf16.gmra.mxu0 %v1383
        %v1880 = vpop.f32.mrf.mxu0
        %v1881 = vadd.f32 %v1812, %v1880
        %v1882 = vpop.f32.mrf.mxu0
        %v1883 = vadd.f32 %v1814, %v1882
        %1884 = vmatmul.bf16.gmra.mxu0 %v1387
        %v1885 = vpop.f32.mrf.mxu0
        %v1886 = vadd.f32 %v1817, %v1885
        %v1887 = vpop.f32.mrf.mxu0
        %v1888 = vadd.f32 %v1819, %v1887
        %1889 = vmatmul.bf16.gmra.mxu0 %v1391
        %v1890 = vpop.f32.mrf.mxu0
        %v1891 = vadd.f32 %v1822, %v1890
        %v1892 = vpop.f32.mrf.mxu0
        %v1893 = vadd.f32 %v1824, %v1892
        %1894 = vmatmul.bf16.gmra.mxu0 %v1395
        %v1895 = vpop.f32.mrf.mxu0
        %v1896 = vadd.f32 %v1827, %v1895
        %v1897 = vpop.f32.mrf.mxu0
        %v1898 = vadd.f32 %v1829, %v1897
        %1899 = vmatmul.bf16.gmra.mxu0 %v1399
        %v1900 = vpop.f32.mrf.mxu0
        %v1901 = vadd.f32 %v1832, %v1900
        %v1902 = vpop.f32.mrf.mxu0
        %v1903 = vadd.f32 %v1834, %v1902
        %1904 = vmatmul.bf16.gmra.mxu0 %v1403
        %v1905 = vpop.f32.mrf.mxu0
        %v1906 = vadd.f32 %v1837, %v1905
        %v1907 = vpop.f32.mrf.mxu0
        %v1908 = vadd.f32 %v1839, %v1907
        %1909 = vmatmul.bf16.gmra.mxu0 %v1407
        %v1910 = vpop.f32.mrf.mxu0
        %v1911 = vadd.f32 %v1842, %v1910
        %v1912 = vpop.f32.mrf.mxu0
        %v1913 = vadd.f32 %v1844, %v1912
        %1914 = vdwg.mxu0
        %1915 = vmatpush.bf16.msra.mxu0 %v1702
        %1916 = vmatpush.bf16.msra.mxu0 %v1701
        %1917 = vmatpush.bf16.msra.mxu0 %v1700
        %1918 = vmatpush.bf16.msra.mxu0 %v1699
        %1919 = vmatpush.bf16.msra.mxu0 %v1698
        %1920 = vmatpush.bf16.msra.mxu0 %v1697
        %1921 = vmatpush.bf16.msra.mxu0 %v1696
        %1922 = vmatpush.bf16.msra.mxu0 %v1695
        %1923 = vmatmul.bf16.gmra.mxu0 %v1411
        %v1924 = vpop.f32.mrf.mxu0
        %v1925 = vadd.f32 %v1856, %v1924
        %v1926 = vpop.f32.mrf.mxu0
        %v1927 = vadd.f32 %v1858, %v1926
        %1928 = vmatmul.bf16.gmra.mxu0 %v1415
        %v1929 = vpop.f32.mrf.mxu0
        %v1930 = vadd.f32 %v1861, %v1929
        %v1931 = vpop.f32.mrf.mxu0
        %v1932 = vadd.f32 %v1863, %v1931
        %1933 = vmatmul.bf16.gmra.mxu0 %v1419
        %v1934 = vpop.f32.mrf.mxu0
        %v1935 = vadd.f32 %v1866, %v1934
        %v1936 = vpop.f32.mrf.mxu0
        %v1937 = vadd.f32 %v1868, %v1936
        %1938 = vmatmul.bf16.gmra.mxu0 %v1423
        %v1939 = vpop.f32.mrf.mxu0
        %v1940 = vadd.f32 %v1871, %v1939
        %v1941 = vpop.f32.mrf.mxu0
        %v1942 = vadd.f32 %v1873, %v1941
        %1943 = vmatmul.bf16.gmra.mxu0 %v1427
        %v1944 = vpop.f32.mrf.mxu0
        %v1945 = vadd.f32 %v1876, %v1944
        %v1946 = vpop.f32.mrf.mxu0
        %v1947 = vadd.f32 %v1878, %v1946
        %1948 = vmatmul.bf16.gmra.mxu0 %v1431
        %v1949 = vpop.f32.mrf.mxu0
        %v1950 = vadd.f32 %v1881, %v1949
        %v1951 = vpop.f32.mrf.mxu0
        %v1952 = vadd.f32 %v1883, %v1951
        %1953 = vmatmul.bf16.gmra.mxu0 %v1435
        %v1954 = vpop.f32.mrf.mxu0
        %v1955 = vadd.f32 %v1886, %v1954
        %v1956 = vpop.f32.mrf.mxu0
        %v1957 = vadd.f32 %v1888, %v1956
        %1958 = vmatmul.bf16.gmra.mxu0 %v1439
        %v1959 = vpop.f32.mrf.mxu0
        %v1960 = vadd.f32 %v1891, %v1959
        %v1961 = vpop.f32.mrf.mxu0
        %v1962 = vadd.f32 %v1893, %v1961
        %1963 = vmatmul.bf16.gmra.mxu0 %v1443
        %v1964 = vpop.f32.mrf.mxu0
        %v1965 = vadd.f32 %v1896, %v1964
        %v1966 = vpop.f32.mrf.mxu0
        %v1967 = vadd.f32 %v1898, %v1966
        %1968 = vmatmul.bf16.gmra.mxu0 %v1447
        %v1969 = vpop.f32.mrf.mxu0
        %v1970 = vadd.f32 %v1901, %v1969
        %v1971 = vpop.f32.mrf.mxu0
        %v1972 = vadd.f32 %v1903, %v1971
        %1973 = vmatmul.bf16.gmra.mxu0 %v1451
        %v1974 = vpop.f32.mrf.mxu0
        %v1975 = vadd.f32 %v1906, %v1974
        %v1976 = vpop.f32.mrf.mxu0
        %v1977 = vadd.f32 %v1908, %v1976
        %1978 = vmatmul.bf16.gmra.mxu0 %v1455
        %v1979 = vpop.f32.mrf.mxu0
        %v1980 = vadd.f32 %v1911, %v1979
        %v1981 = vpop.f32.mrf.mxu0
        %v1982 = vadd.f32 %v1913, %v1981
        %1983 = vdwg.mxu0
        %1984 = vmatpush.bf16.msra.mxu0 %v1710
        %1985 = vmatpush.bf16.msra.mxu0 %v1709
        %1986 = vmatpush.bf16.msra.mxu0 %v1708
        %1987 = vmatpush.bf16.msra.mxu0 %v1707
        %1988 = vmatpush.bf16.msra.mxu0 %v1706
        %1989 = vmatpush.bf16.msra.mxu0 %v1705
        %1990 = vmatpush.bf16.msra.mxu0 %v1704
        %1991 = vmatpush.bf16.msra.mxu0 %v1703
        %1992 = vmatmul.bf16.gmra.mxu0 %v1332
        %v1993 = vpop.f32.mrf.mxu0
        %v1994 = vadd.f32 %v1925, %v1993
        %v1995 = vpop.f32.mrf.mxu0
        %v1996 = vadd.f32 %v1927, %v1995
        %1997 = vmatmul.bf16.gmra.mxu0 %v1335
        %v1998 = vpop.f32.mrf.mxu0
        %v1999 = vadd.f32 %v1930, %v1998
        %v2000 = vpop.f32.mrf.mxu0
        %v2001 = vadd.f32 %v1932, %v2000
        %2002 = vmatmul.bf16.gmra.mxu0 %v1338
        %v2003 = vpop.f32.mrf.mxu0
        %v2004 = vadd.f32 %v1935, %v2003
        %v2005 = vpop.f32.mrf.mxu0
        %v2006 = vadd.f32 %v1937, %v2005
        %2007 = vmatmul.bf16.gmra.mxu0 %v1341
        %v2008 = vpop.f32.mrf.mxu0
        %v2009 = vadd.f32 %v1940, %v2008
        %v2010 = vpop.f32.mrf.mxu0
        %v2011 = vadd.f32 %v1942, %v2010
        %2012 = vmatmul.bf16.gmra.mxu0 %v1344
        %v2013 = vpop.f32.mrf.mxu0
        %v2014 = vadd.f32 %v1945, %v2013
        %v2015 = vpop.f32.mrf.mxu0
        %v2016 = vadd.f32 %v1947, %v2015
        %2017 = vmatmul.bf16.gmra.mxu0 %v1347
        %v2018 = vpop.f32.mrf.mxu0
        %v2019 = vadd.f32 %v1950, %v2018
        %v2020 = vpop.f32.mrf.mxu0
        %v2021 = vadd.f32 %v1952, %v2020
        %2022 = vmatmul.bf16.gmra.mxu0 %v1350
        %v2023 = vpop.f32.mrf.mxu0
        %v2024 = vadd.f32 %v1955, %v2023
        %v2025 = vpop.f32.mrf.mxu0
        %v2026 = vadd.f32 %v1957, %v2025
        %2027 = vmatmul.bf16.gmra.mxu0 %v1353
        %v2028 = vpop.f32.mrf.mxu0
        %v2029 = vadd.f32 %v1960, %v2028
        %v2030 = vpop.f32.mrf.mxu0
        %v2031 = vadd.f32 %v1962, %v2030
        %2032 = vmatmul.bf16.gmra.mxu0 %v1356
        %v2033 = vpop.f32.mrf.mxu0
        %v2034 = vadd.f32 %v1965, %v2033
        %v2035 = vpop.f32.mrf.mxu0
        %v2036 = vadd.f32 %v1967, %v2035
        %2037 = vmatmul.bf16.gmra.mxu0 %v1359
        %v2038 = vpop.f32.mrf.mxu0
        %v2039 = vadd.f32 %v1970, %v2038
        %v2040 = vpop.f32.mrf.mxu0
        %v2041 = vadd.f32 %v1972, %v2040
        %2042 = vmatmul.bf16.gmra.mxu0 %v1458
        %v2043 = vpop.f32.mrf.mxu0
        %v2044 = vadd.f32 %v1975, %v2043
        %v2045 = vpop.f32.mrf.mxu0
        %v2046 = vadd.f32 %v1977, %v2045
        %2047 = vmatmul.bf16.gmra.mxu0 %v1461
        %v2048 = vpop.f32.mrf.mxu0
        %v2049 = vadd.f32 %v1980, %v2048
        %v2050 = vpop.f32.mrf.mxu0
        %v2051 = vadd.f32 %v1982, %v2050
        %2052 = vdwg.mxu0
        %2053 = vmatpush.bf16.msra.mxu0 0
        %2054 = vmatpush.bf16.msra.mxu0 0
        %2055 = vmatpush.bf16.msra.mxu0 0
        %2056 = vmatpush.bf16.msra.mxu0 0
        %2057 = vmatpush.bf16.msra.mxu0 %v1714
        %2058 = vmatpush.bf16.msra.mxu0 %v1713
        %2059 = vmatpush.bf16.msra.mxu0 %v1712
        %2060 = vmatpush.bf16.msra.mxu0 %v1711
        %2061 = vmatmul.bf16.gmra.mxu0 %v1751
        %v2062 = vpop.f32.mrf.mxu0
        %v2063 = vadd.f32 %v1994, %v2062
        %v2064 = vpop.f32.mrf.mxu0
        %v2065 = vadd.f32 %v1996, %v2064
        %2066 = vmatmul.bf16.gmra.mxu0 %v1753
        %v2067 = vpop.f32.mrf.mxu0
        %v2068 = vadd.f32 %v1999, %v2067
        %v2069 = vpop.f32.mrf.mxu0
        %v2070 = vadd.f32 %v2001, %v2069
        %2071 = vmatmul.bf16.gmra.mxu0 %v1755
        %v2072 = vpop.f32.mrf.mxu0
        %v2073 = vadd.f32 %v2004, %v2072
        %v2074 = vpop.f32.mrf.mxu0
        %v2075 = vadd.f32 %v2006, %v2074
        %2076 = vmatmul.bf16.gmra.mxu0 %v1757
        %v2077 = vpop.f32.mrf.mxu0
        %v2078 = vadd.f32 %v2009, %v2077
        %v2079 = vpop.f32.mrf.mxu0
        %v2080 = vadd.f32 %v2011, %v2079
        %2081 = vmatmul.bf16.gmra.mxu0 %v1759
        %v2082 = vpop.f32.mrf.mxu0
        %v2083 = vadd.f32 %v2014, %v2082
        %v2084 = vpop.f32.mrf.mxu0
        %v2085 = vadd.f32 %v2016, %v2084
        %2086 = vmatmul.bf16.gmra.mxu0 %v1761
        %v2087 = vpop.f32.mrf.mxu0
        %v2088 = vadd.f32 %v2019, %v2087
        %v2089 = vpop.f32.mrf.mxu0
        %v2090 = vadd.f32 %v2021, %v2089
        %2091 = vmatmul.bf16.gmra.mxu0 %v1763
        %v2092 = vpop.f32.mrf.mxu0
        %v2093 = vadd.f32 %v2024, %v2092
        %v2094 = vpop.f32.mrf.mxu0
        %v2095 = vadd.f32 %v2026, %v2094
        %2096 = vmatmul.bf16.gmra.mxu0 %v1765
        %v2097 = vpop.f32.mrf.mxu0
        %v2098 = vadd.f32 %v2029, %v2097
        %v2099 = vpop.f32.mrf.mxu0
        %v2100 = vadd.f32 %v2031, %v2099
        %2101 = vmatmul.bf16.gmra.mxu0 %v1767
        %v2102 = vpop.f32.mrf.mxu0
        %v2103 = vadd.f32 %v2034, %v2102
        %v2104 = vpop.f32.mrf.mxu0
        %v2105 = vadd.f32 %v2036, %v2104
        %2106 = vmatmul.bf16.gmra.mxu0 %v1769
        %v2107 = vpop.f32.mrf.mxu0
        %v2108 = vadd.f32 %v2039, %v2107
        %v2109 = vpop.f32.mrf.mxu0
        %v2110 = vadd.f32 %v2041, %v2109
        %2111 = vmatmul.bf16.gmra.mxu0 %v1772
        %v2112 = vpop.f32.mrf.mxu0
        %v2113 = vadd.f32 %v2044, %v2112
        %v2114 = vpop.f32.mrf.mxu0
        %v2115 = vadd.f32 %v2046, %v2114
        %2116 = vmatmul.bf16.gmra.mxu0 %v1775
        %v2117 = vpop.f32.mrf.mxu0
        %v2118 = vadd.f32 %v2049, %v2117
        %v2119 = vpop.f32.mrf.mxu0
        %v2120 = vadd.f32 %v2051, %v2119
        %2121 = vdwg.mxu0
        %v2122 = vld [vmem:[%s4] sm:$0x1]
        %v2124 = vperm.slane %v2122, 0
        %v2126 = vadd.f32 %v2063, %v2124
        %v2127 = vadd.f32 %v2065, %v2124
        %v2128 = vadd.f32 %v2068, %v2124
        %v2129 = vadd.f32 %v2070, %v2124
        %v2130 = vadd.f32 %v2073, %v2124
        %v2131 = vadd.f32 %v2075, %v2124
        %v2132 = vadd.f32 %v2078, %v2124
        %v2133 = vadd.f32 %v2080, %v2124
        %v2134 = vadd.f32 %v2083, %v2124
        %v2135 = vadd.f32 %v2085, %v2124
        %v2136 = vadd.f32 %v2088, %v2124
        %v2137 = vadd.f32 %v2090, %v2124
        %v2138 = vadd.f32 %v2093, %v2124
        %v2139 = vadd.f32 %v2095, %v2124
        %v2140 = vadd.f32 %v2098, %v2124
        %v2141 = vadd.f32 %v2100, %v2124
        %v2142 = vadd.f32 %v2103, %v2124
        %v2143 = vadd.f32 %v2105, %v2124
        %v2144 = vadd.f32 %v2108, %v2124
        %v2145 = vadd.f32 %v2110, %v2124
        %v2146 = vadd.f32 %v2113, %v2124
        %v2147 = vadd.f32 %v2115, %v2124
        %v2148 = vadd.f32 %v2118, %v2124
        %v2149 = vadd.f32 %v2120, %v2124
        %vm2150 = vcmp.ge.f32.partialorder %v2126, 0.0
        %vm2151 = vcmp.ge.f32.partialorder %v2127, 0.0
        %vm2152 = vcmp.ge.f32.partialorder %v2128, 0.0
        %vm2153 = vcmp.ge.f32.partialorder %v2129, 0.0
        %vm2154 = vcmp.ge.f32.partialorder %v2130, 0.0
        %vm2155 = vcmp.ge.f32.partialorder %v2131, 0.0
        %vm2156 = vcmp.ge.f32.partialorder %v2132, 0.0
        %vm2157 = vcmp.ge.f32.partialorder %v2133, 0.0
        %vm2158 = vcmp.ge.f32.partialorder %v2134, 0.0
        %vm2159 = vcmp.ge.f32.partialorder %v2135, 0.0
        %vm2160 = vcmp.ge.f32.partialorder %v2136, 0.0
        %vm2161 = vcmp.ge.f32.partialorder %v2137, 0.0
        %vm2162 = vcmp.ge.f32.partialorder %v2138, 0.0
        %vm2163 = vcmp.ge.f32.partialorder %v2139, 0.0
        %vm2164 = vcmp.ge.f32.partialorder %v2140, 0.0
        %vm2165 = vcmp.ge.f32.partialorder %v2141, 0.0
        %vm2166 = vcmp.ge.f32.partialorder %v2142, 0.0
        %vm2167 = vcmp.ge.f32.partialorder %v2143, 0.0
        %vm2168 = vcmp.ge.f32.partialorder %v2144, 0.0
        %vm2169 = vcmp.ge.f32.partialorder %v2145, 0.0
        %vm2170 = vcmp.ge.f32.partialorder %v2146, 0.0
        %vm2171 = vcmp.ge.f32.partialorder %v2147, 0.0
        %vm2172 = vcmp.ge.f32.partialorder %v2148, 0.0
        %vm2173 = vcmp.ge.f32.partialorder %v2149, 0.0
        %v2174 = vld [vmem:[%s5] sm:$0x1]
        %v2176 = vperm.slane %v2174, 0
        %v2178 = vmul.f32 %v2126, %v2176
        %v2179 = vmul.f32 %v2127, %v2176
        %v2180 = vmul.f32 %v2128, %v2176
        %v2181 = vmul.f32 %v2129, %v2176
        %v2182 = vmul.f32 %v2130, %v2176
        %v2183 = vmul.f32 %v2131, %v2176
        %v2184 = vmul.f32 %v2132, %v2176
        %v2185 = vmul.f32 %v2133, %v2176
        %v2186 = vmul.f32 %v2134, %v2176
        %v2187 = vmul.f32 %v2135, %v2176
        %v2188 = vmul.f32 %v2136, %v2176
        %v2189 = vmul.f32 %v2137, %v2176
        %v2190 = vmul.f32 %v2138, %v2176
        %v2191 = vmul.f32 %v2139, %v2176
        %v2192 = vmul.f32 %v2140, %v2176
        %v2193 = vmul.f32 %v2141, %v2176
        %v2194 = vmul.f32 %v2142, %v2176
        %v2195 = vmul.f32 %v2143, %v2176
        %v2196 = vmul.f32 %v2144, %v2176
        %v2197 = vmul.f32 %v2145, %v2176
        %v2198 = vmul.f32 %v2146, %v2176
        %v2199 = vmul.f32 %v2147, %v2176
        %v2200 = vmul.f32 %v2148, %v2176
        %v2201 = vmul.f32 %v2149, %v2176
        %v2202 = vsel %vm2150, %v2126, %v2178
        %v2203 = vsel %vm2151, %v2127, %v2179
        %v2204 = vsel %vm2152, %v2128, %v2180
        %v2205 = vsel %vm2153, %v2129, %v2181
        %v2206 = vsel %vm2154, %v2130, %v2182
        %v2207 = vsel %vm2155, %v2131, %v2183
        %v2208 = vsel %vm2156, %v2132, %v2184
        %v2209 = vsel %vm2157, %v2133, %v2185
        %v2210 = vsel %vm2158, %v2134, %v2186
        %v2211 = vsel %vm2159, %v2135, %v2187
        %v2212 = vsel %vm2160, %v2136, %v2188
        %v2213 = vsel %vm2161, %v2137, %v2189
        %v2214 = vsel %vm2162, %v2138, %v2190
        %v2215 = vsel %vm2163, %v2139, %v2191
        %v2216 = vsel %vm2164, %v2140, %v2192
        %v2217 = vsel %vm2165, %v2141, %v2193
        %v2218 = vsel %vm2166, %v2142, %v2194
        %v2219 = vsel %vm2167, %v2143, %v2195
        %v2220 = vsel %vm2168, %v2144, %v2196
        %v2221 = vsel %vm2169, %v2145, %v2197
        %v2222 = vsel %vm2170, %v2146, %v2198
        %v2223 = vsel %vm2171, %v2147, %v2199
        %v2224 = vsel %vm2172, %v2148, %v2200
        %v2225 = vsel %vm2173, %v2149, %v2201
        %s2226 = ssub.s32 %s393, 2
        %v2227 = vstv %s2226
        %v2228 = vadd.s32 %v2227, 1
        %v2229 = vadd.s32 %v2227, 2
        %v2230 = vadd.s32 %v2227, 3
        %v2231 = vadd.s32 %v2227, 4
        %v2232 = vadd.s32 %v2227, 5
        %v2233 = vadd.s32 %v2227, 6
        %v2234 = vadd.s32 %v2227, 7
        %v2235 = vadd.s32 %v2227, 8
        %v2236 = vadd.s32 %v2227, 9
        %v2237 = vadd.s32 %v2227, 10
        %v2238 = vadd.s32 %v2227, 11
        %vm2239 = vcmp.ge.s32.totalorder %v2227, 0
        %vm2240 = vcmp.ge.s32.totalorder %v2228, 0
        %vm2241 = vcmp.ge.s32.totalorder %v2229, 0
        %vm2242 = vcmp.ge.s32.totalorder %v2230, 0
        %vm2243 = vcmp.ge.s32.totalorder %v2231, 0
        %vm2244 = vcmp.ge.s32.totalorder %v2232, 0
        %vm2245 = vcmp.ge.s32.totalorder %v2233, 0
        %vm2246 = vcmp.ge.s32.totalorder %v2234, 0
        %vm2247 = vcmp.ge.s32.totalorder %v2235, 0
        %vm2248 = vcmp.ge.s32.totalorder %v2236, 0
        %vm2249 = vcmp.ge.s32.totalorder %v2237, 0
        %vm2250 = vcmp.ge.s32.totalorder %v2238, 0
        %vm2251 = vcmp.lt.s32.totalorder %v2227, 16
        %vm2252 = vcmp.lt.s32.totalorder %v2228, 16
        %vm2253 = vcmp.lt.s32.totalorder %v2229, 16
        %vm2254 = vcmp.lt.s32.totalorder %v2230, 16
        %vm2255 = vcmp.lt.s32.totalorder %v2231, 16
        %vm2256 = vcmp.lt.s32.totalorder %v2232, 16
        %vm2257 = vcmp.lt.s32.totalorder %v2233, 16
        %vm2258 = vcmp.lt.s32.totalorder %v2234, 16
        %vm2259 = vcmp.lt.s32.totalorder %v2235, 16
        %vm2260 = vcmp.lt.s32.totalorder %v2236, 16
        %vm2261 = vcmp.lt.s32.totalorder %v2237, 16
        %vm2262 = vcmp.lt.s32.totalorder %v2238, 16
        %vm2263 = vmand %vm2239, %vm2251
        %vm2264 = vmand %vm2240, %vm2252
        %vm2265 = vmand %vm2241, %vm2253
        %vm2266 = vmand %vm2242, %vm2254
        %vm2267 = vmand %vm2243, %vm2255
        %vm2268 = vmand %vm2244, %vm2256
        %vm2269 = vmand %vm2245, %vm2257
        %vm2270 = vmand %vm2246, %vm2258
        %vm2271 = vmand %vm2247, %vm2259
        %vm2272 = vmand %vm2248, %vm2260
        %vm2273 = vmand %vm2249, %vm2261
        %vm2274 = vmand %vm2250, %vm2262
        %v2275 = vsel %vm2263, %v2202, 0.0
        %v2276 = vsel %vm2263, %v2203, 0.0
        %v2277 = vsel %vm2264, %v2204, 0.0
        %v2278 = vsel %vm2264, %v2205, 0.0
        %v2279 = vsel %vm2265, %v2206, 0.0
        %v2280 = vsel %vm2265, %v2207, 0.0
        %v2281 = vsel %vm2266, %v2208, 0.0
        %v2282 = vsel %vm2266, %v2209, 0.0
        %v2283 = vsel %vm2267, %v2210, 0.0
        %v2284 = vsel %vm2267, %v2211, 0.0
        %v2285 = vsel %vm2268, %v2212, 0.0
        %v2286 = vsel %vm2268, %v2213, 0.0
        %v2287 = vsel %vm2269, %v2214, 0.0
        %v2288 = vsel %vm2269, %v2215, 0.0
        %v2289 = vsel %vm2270, %v2216, 0.0
        %v2290 = vsel %vm2270, %v2217, 0.0
        %v2291 = vsel %vm2271, %v2218, 0.0
        %v2292 = vsel %vm2271, %v2219, 0.0
        %v2293 = vsel %vm2272, %v2220, 0.0
        %v2294 = vsel %vm2272, %v2221, 0.0
        %v2295 = vsel %vm2273, %v2222, 0.0
        %v2296 = vsel %vm2273, %v2223, 0.0
        %v2297 = vsel %vm2274, %v2224, 0.0
        %v2298 = vsel %vm2274, %v2225, 0.0
        %v2299 = vpack.c.bf16 %v2275, %v2275
        %v2300 = vpack.c.bf16 %v2276, %v2276
        %v2301 = vpack.c.bf16 %v2277, %v2277
        %v2302 = vpack.c.bf16 %v2278, %v2278
        %v2303 = vpack.c.bf16 %v2279, %v2279
        %v2304 = vpack.c.bf16 %v2280, %v2280
        %v2305 = vpack.c.bf16 %v2281, %v2281
        %v2306 = vpack.c.bf16 %v2282, %v2282
        %v2307 = vpack.c.bf16 %v2283, %v2283
        %v2308 = vpack.c.bf16 %v2284, %v2284
        %v2309 = vpack.c.bf16 %v2285, %v2285
        %v2310 = vpack.c.bf16 %v2286, %v2286
        %v2311 = vpack.c.bf16 %v2287, %v2287
        %v2312 = vpack.c.bf16 %v2288, %v2288
        %v2313 = vpack.c.bf16 %v2289, %v2289
        %v2314 = vpack.c.bf16 %v2290, %v2290
        %v2315 = vpack.c.bf16 %v2291, %v2291
        %v2316 = vpack.c.bf16 %v2292, %v2292
        %v2317 = vpack.c.bf16 %v2293, %v2293
        %v2318 = vpack.c.bf16 %v2294, %v2294
        %v2319 = vpack.c.bf16 %v2295, %v2295
        %v2320 = vpack.c.bf16 %v2296, %v2296
        %v2321 = vpack.c.bf16 %v2297, %v2297
        %v2322 = vpack.c.bf16 %v2298, %v2298
        %v2347 = vunpack.c.l.b16 %v2299
        %v2348 = vunpack.c.l.b16 %v2300
        %v2349 = vunpack.c.l.b16 %v2301
        %v2350 = vunpack.c.l.b16 %v2302
        %v2351 = vunpack.c.l.b16 %v2303
        %v2352 = vunpack.c.l.b16 %v2304
        %v2353 = vunpack.c.l.b16 %v2305
        %v2354 = vunpack.c.l.b16 %v2306
        %v2355 = vunpack.c.l.b16 %v2307
        %v2356 = vunpack.c.l.b16 %v2308
        %v2357 = vunpack.c.l.b16 %v2309
        %v2358 = vunpack.c.l.b16 %v2310
        %v2359 = vunpack.c.l.b16 %v2311
        %v2360 = vunpack.c.l.b16 %v2312
        %v2361 = vunpack.c.l.b16 %v2313
        %v2362 = vunpack.c.l.b16 %v2314
        %v2363 = vunpack.c.l.b16 %v2315
        %v2364 = vunpack.c.l.b16 %v2316
        %v2365 = vunpack.c.l.b16 %v2317
        %v2366 = vunpack.c.l.b16 %v2318
        %v2367 = vunpack.c.l.b16 %v2319
        %v2368 = vunpack.c.l.b16 %v2320
        %v2369 = vunpack.c.l.b16 %v2321
        %v2370 = vunpack.c.l.b16 %v2322
        %v2371 = vpack.c.b16 %v2348, %v2347
        %v2372 = vpack.c.b16 %v2350, %v2349
        %v2373 = vpack.c.b16 %v2352, %v2351
        %v2374 = vpack.c.b16 %v2354, %v2353
        %v2375 = vpack.c.b16 %v2356, %v2355
        %v2376 = vpack.c.b16 %v2358, %v2357
        %v2377 = vpack.c.b16 %v2360, %v2359
        %v2378 = vpack.c.b16 %v2362, %v2361
        %v2379 = vpack.c.b16 %v2364, %v2363
        %v2380 = vpack.c.b16 %v2366, %v2365
        %v2381 = vpack.c.b16 %v2368, %v2367
        %v2382 = vpack.c.b16 %v2370, %v2369
        %v2384 = vshrl.u32 %v2371, 16
        %v2386 = vrot.slane %v2384, 7
        %v2387 = vshll.u32 %v2371, 16
        %v2389 = vor.u32 %v2386, %v2387
        %v2391 = vshrl.u32 %v2372, 16
        %v2393 = vrot.slane %v2391, 7
        %v2394 = vshll.u32 %v2372, 16
        %v2396 = vor.u32 %v2393, %v2394
        %v2398 = vshrl.u32 %v2373, 16
        %v2400 = vrot.slane %v2398, 7
        %v2401 = vshll.u32 %v2373, 16
        %v2403 = vor.u32 %v2400, %v2401
        %v2405 = vshrl.u32 %v2374, 16
        %v2407 = vrot.slane %v2405, 7
        %v2408 = vshll.u32 %v2374, 16
        %v2410 = vor.u32 %v2407, %v2408
        %v2412 = vshrl.u32 %v2375, 16
        %v2414 = vrot.slane %v2412, 7
        %v2415 = vshll.u32 %v2375, 16
        %v2417 = vor.u32 %v2414, %v2415
        %v2419 = vshrl.u32 %v2376, 16
        %v2421 = vrot.slane %v2419, 7
        %v2422 = vshll.u32 %v2376, 16
        %v2424 = vor.u32 %v2421, %v2422
        %v2426 = vshrl.u32 %v2377, 16
        %v2428 = vrot.slane %v2426, 7
        %v2429 = vshll.u32 %v2377, 16
        %v2431 = vor.u32 %v2428, %v2429
        %v2433 = vshrl.u32 %v2378, 16
        %v2435 = vrot.slane %v2433, 7
        %v2436 = vshll.u32 %v2378, 16
        %v2438 = vor.u32 %v2435, %v2436
        %v2440 = vshrl.u32 %v2379, 16
        %v2442 = vrot.slane %v2440, 7
        %v2443 = vshll.u32 %v2379, 16
        %v2445 = vor.u32 %v2442, %v2443
        %v2447 = vshrl.u32 %v2380, 16
        %v2449 = vrot.slane %v2447, 7
        %v2450 = vshll.u32 %v2380, 16
        %v2452 = vor.u32 %v2449, %v2450
        %v2454 = vshrl.u32 %v2381, 16
        %v2456 = vrot.slane %v2454, 7
        %v2457 = vshll.u32 %v2381, 16
        %v2459 = vor.u32 %v2456, %v2457
        %v2461 = vshrl.u32 %v2382, 16
        %v2463 = vrot.slane %v2461, 7
        %v2464 = vshll.u32 %v2382, 16
        %v2466 = vor.u32 %v2463, %v2464
        %v2491 = vsel %vm979, 0, %v2389
        %v2492 = vsel %vm979, 0, %v2396
        %v2493 = vsel %vm979, 0, %v2403
        %v2494 = vsel %vm979, 0, %v2410
        %v2495 = vsel %vm979, 0, %v2417
        %v2496 = vsel %vm979, 0, %v2424
        %v2497 = vsel %vm979, 0, %v2431
        %v2498 = vsel %vm979, 0, %v2438
        %v2499 = vsel %vm979, 0, %v2445
        %v2500 = vsel %vm979, 0, %v2452
        %v2501 = vsel %vm979, 0, %v2459
        %v2502 = vsel %vm979, 0, %v2466
        %v2503 = vsel %vm979, %v2386, 0
        %v2504 = vsel %vm979, %v2393, 0
        %v2505 = vsel %vm979, %v2400, 0
        %v2506 = vsel %vm979, %v2407, 0
        %v2507 = vsel %vm979, %v2414, 0
        %v2508 = vsel %vm979, %v2421, 0
        %v2509 = vsel %vm979, %v2428, 0
        %v2510 = vsel %vm979, %v2435, 0
        %v2511 = vsel %vm979, %v2442, 0
        %v2512 = vsel %vm979, %v2449, 0
        %v2513 = vsel %vm979, %v2456, 0
        %v2514 = vsel %vm979, %v2463, 0
        %v2516 = vshrl.u32 %v2491, 16
        %v2518 = vshll.u32 %v2491, 16
        %v2520 = vrot.slane %v2518, 1
        %v2521 = vor.u32 %v2516, %v2520
        %v2523 = vshll.u32 %v2503, 16
        %v2525 = vrot.slane %v2523, 1
        %v2526 = vsel %vm1008, %v2521, %v2525
        %v2528 = vshrl.u32 %v2492, 16
        %v2530 = vshll.u32 %v2492, 16
        %v2532 = vrot.slane %v2530, 1
        %v2533 = vor.u32 %v2528, %v2532
        %v2535 = vshll.u32 %v2504, 16
        %v2537 = vrot.slane %v2535, 1
        %v2538 = vsel %vm1008, %v2533, %v2537
        %v2540 = vshrl.u32 %v2493, 16
        %v2542 = vshll.u32 %v2493, 16
        %v2544 = vrot.slane %v2542, 1
        %v2545 = vor.u32 %v2540, %v2544
        %v2547 = vshll.u32 %v2505, 16
        %v2549 = vrot.slane %v2547, 1
        %v2550 = vsel %vm1008, %v2545, %v2549
        %v2552 = vshrl.u32 %v2494, 16
        %v2554 = vshll.u32 %v2494, 16
        %v2556 = vrot.slane %v2554, 1
        %v2557 = vor.u32 %v2552, %v2556
        %v2559 = vshll.u32 %v2506, 16
        %v2561 = vrot.slane %v2559, 1
        %v2562 = vsel %vm1008, %v2557, %v2561
        %v2564 = vshrl.u32 %v2495, 16
        %v2566 = vshll.u32 %v2495, 16
        %v2568 = vrot.slane %v2566, 1
        %v2569 = vor.u32 %v2564, %v2568
        %v2571 = vshll.u32 %v2507, 16
        %v2573 = vrot.slane %v2571, 1
        %v2574 = vsel %vm1008, %v2569, %v2573
        %v2576 = vshrl.u32 %v2496, 16
        %v2578 = vshll.u32 %v2496, 16
        %v2580 = vrot.slane %v2578, 1
        %v2581 = vor.u32 %v2576, %v2580
        %v2583 = vshll.u32 %v2508, 16
        %v2585 = vrot.slane %v2583, 1
        %v2586 = vsel %vm1008, %v2581, %v2585
        %v2588 = vshrl.u32 %v2497, 16
        %v2590 = vshll.u32 %v2497, 16
        %v2592 = vrot.slane %v2590, 1
        %v2593 = vor.u32 %v2588, %v2592
        %v2595 = vshll.u32 %v2509, 16
        %v2597 = vrot.slane %v2595, 1
        %v2598 = vsel %vm1008, %v2593, %v2597
        %v2600 = vshrl.u32 %v2498, 16
        %v2602 = vshll.u32 %v2498, 16
        %v2604 = vrot.slane %v2602, 1
        %v2605 = vor.u32 %v2600, %v2604
        %v2607 = vshll.u32 %v2510, 16
        %v2609 = vrot.slane %v2607, 1
        %v2610 = vsel %vm1008, %v2605, %v2609
        %v2612 = vshrl.u32 %v2499, 16
        %v2614 = vshll.u32 %v2499, 16
        %v2616 = vrot.slane %v2614, 1
        %v2617 = vor.u32 %v2612, %v2616
        %v2619 = vshll.u32 %v2511, 16
        %v2621 = vrot.slane %v2619, 1
        %v2622 = vsel %vm1008, %v2617, %v2621
        %v2624 = vshrl.u32 %v2500, 16
        %v2626 = vshll.u32 %v2500, 16
        %v2628 = vrot.slane %v2626, 1
        %v2629 = vor.u32 %v2624, %v2628
        %v2631 = vshll.u32 %v2512, 16
        %v2633 = vrot.slane %v2631, 1
        %v2634 = vsel %vm1008, %v2629, %v2633
        %2635 = vrot.lane.b32.xlu0 %v2526, 64
        %v2636 = vpop.permute.xlu0 %2635
        %2637 = vrot.lane.b32.xlu0 %v2538, 64
        %v2638 = vpop.permute.xlu0 %2637
        %2639 = vrot.lane.b32.xlu0 %v2550, 64
        %v2640 = vpop.permute.xlu0 %2639
        %2641 = vrot.lane.b32.xlu0 %v2562, 64
        %v2642 = vpop.permute.xlu0 %2641
        %2643 = vrot.lane.b32.xlu0 %v2574, 64
        %v2644 = vpop.permute.xlu0 %2643
        %2645 = vrot.lane.b32.xlu0 %v2586, 64
        %v2646 = vpop.permute.xlu0 %2645
        %2647 = vrot.lane.b32.xlu0 %v2598, 64
        %v2648 = vpop.permute.xlu0 %2647
        %2649 = vrot.lane.b32.xlu0 %v2610, 64
        %v2650 = vpop.permute.xlu0 %2649
        %2651 = vrot.lane.b32.xlu0 %v2622, 64
        %v2652 = vpop.permute.xlu0 %2651
        %2653 = vrot.lane.b32.xlu0 %v2634, 64
        %v2654 = vpop.permute.xlu0 %2653
        %v2675 = vrot.slane %v2491, 1
        %v2676 = vrot.slane %v2503, 1
        %v2677 = vsel %vm1201, %v2675, %v2676
        %v2678 = vrot.slane %v2492, 1
        %v2679 = vrot.slane %v2504, 1
        %v2680 = vsel %vm1201, %v2678, %v2679
        %v2681 = vrot.slane %v2493, 1
        %v2682 = vrot.slane %v2505, 1
        %v2683 = vsel %vm1201, %v2681, %v2682
        %v2684 = vrot.slane %v2494, 1
        %v2685 = vrot.slane %v2506, 1
        %v2686 = vsel %vm1201, %v2684, %v2685
        %v2687 = vrot.slane %v2495, 1
        %v2688 = vrot.slane %v2507, 1
        %v2689 = vsel %vm1201, %v2687, %v2688
        %v2690 = vrot.slane %v2496, 1
        %v2691 = vrot.slane %v2508, 1
        %v2692 = vsel %vm1201, %v2690, %v2691
        %v2693 = vrot.slane %v2497, 1
        %v2694 = vrot.slane %v2509, 1
        %v2695 = vsel %vm1201, %v2693, %v2694
        %v2696 = vrot.slane %v2498, 1
        %v2697 = vrot.slane %v2510, 1
        %v2698 = vsel %vm1201, %v2696, %v2697
        %v2699 = vrot.slane %v2499, 1
        %v2700 = vrot.slane %v2511, 1
        %v2701 = vsel %vm1201, %v2699, %v2700
        %v2702 = vrot.slane %v2500, 1
        %v2703 = vrot.slane %v2512, 1
        %v2704 = vsel %vm1201, %v2702, %v2703
        %2706 = vrot.lane.b32.xlu0 %v2492, 64
        %v2707 = vpop.permute.xlu0 %2706
        %2708 = vrot.lane.b32.xlu0 %v2493, 64
        %v2709 = vpop.permute.xlu0 %2708
        %2710 = vrot.lane.b32.xlu0 %v2494, 64
        %v2711 = vpop.permute.xlu0 %2710
        %2712 = vrot.lane.b32.xlu0 %v2495, 64
        %v2713 = vpop.permute.xlu0 %2712
        %2714 = vrot.lane.b32.xlu0 %v2496, 64
        %v2715 = vpop.permute.xlu0 %2714
        %2716 = vrot.lane.b32.xlu0 %v2497, 64
        %v2717 = vpop.permute.xlu0 %2716
        %2718 = vrot.lane.b32.xlu0 %v2498, 64
        %v2719 = vpop.permute.xlu0 %2718
        %2720 = vrot.lane.b32.xlu0 %v2499, 64
        %v2721 = vpop.permute.xlu0 %2720
        %2722 = vrot.lane.b32.xlu0 %v2500, 64
        %v2723 = vpop.permute.xlu0 %2722
        %2724 = vrot.lane.b32.xlu0 %v2501, 64
        %v2725 = vpop.permute.xlu0 %2724
        %v2727 = vshrl.u32 %v2501, 16
        %v2729 = vshll.u32 %v2501, 16
        %v2731 = vrot.slane %v2729, 1
        %v2732 = vor.u32 %v2727, %v2731
        %v2734 = vshll.u32 %v2513, 16
        %v2736 = vrot.slane %v2734, 1
        %v2737 = vsel %vm1008, %v2732, %v2736
        %v2739 = vrot.slane %v2501, 1
        %v2740 = vrot.slane %v2513, 1
        %v2741 = vsel %vm1201, %v2739, %v2740
        %2742 = vrot.lane.b32.xlu0 %v2680, 64
        %v2743 = vpop.permute.xlu0 %2742
        %2744 = vrot.lane.b32.xlu0 %v2683, 64
        %v2745 = vpop.permute.xlu0 %2744
        %2746 = vrot.lane.b32.xlu0 %v2686, 64
        %v2747 = vpop.permute.xlu0 %2746
        %2748 = vrot.lane.b32.xlu0 %v2689, 64
        %v2749 = vpop.permute.xlu0 %2748
        %2750 = vrot.lane.b32.xlu0 %v2692, 64
        %v2751 = vpop.permute.xlu0 %2750
        %2752 = vrot.lane.b32.xlu0 %v2695, 64
        %v2753 = vpop.permute.xlu0 %2752
        %2754 = vrot.lane.b32.xlu0 %v2698, 64
        %v2755 = vpop.permute.xlu0 %2754
        %2756 = vrot.lane.b32.xlu0 %v2701, 64
        %v2757 = vpop.permute.xlu0 %2756
        %2758 = vrot.lane.b32.xlu0 %v2704, 64
        %v2759 = vpop.permute.xlu0 %2758
        %2760 = vrot.lane.b32.xlu0 %v2741, 64
        %v2761 = vpop.permute.xlu0 %2760
        %v2763 = vshrl.u32 %v2502, 16
        %v2765 = vshll.u32 %v2502, 16
        %v2767 = vrot.slane %v2765, 1
        %v2768 = vor.u32 %v2763, %v2767
        %v2770 = vshll.u32 %v2514, 16
        %v2772 = vrot.slane %v2770, 1
        %v2773 = vsel %vm1008, %v2768, %v2772
        %2774 = vrot.lane.b32.xlu0 %v2737, 64
        %v2775 = vpop.permute.xlu0 %2774
        %2776 = vrot.lane.b32.xlu0 %v2773, 64
        %v2777 = vpop.permute.xlu0 %2776
        %v2780 = vrot.slane %v2502, 1
        %v2781 = vrot.slane %v2514, 1
        %v2782 = vsel %vm1201, %v2780, %v2781
        %v2784 = vsel %vm1324, %v2491, %v2636
        %v2787 = vsel %vm1324, %v2492, %v2638
        %v2790 = vsel %vm1324, %v2493, %v2640
        %v2793 = vsel %vm1324, %v2494, %v2642
        %v2796 = vsel %vm1324, %v2495, %v2644
        %v2799 = vsel %vm1324, %v2496, %v2646
        %v2802 = vsel %vm1324, %v2497, %v2648
        %v2805 = vsel %vm1324, %v2498, %v2650
        %v2808 = vsel %vm1324, %v2499, %v2652
        %v2811 = vsel %vm1324, %v2500, %v2654
        %v2815 = vsel %vm1324, %v2677, %v2707
        %v2819 = vsel %vm1324, %v2680, %v2709
        %v2823 = vsel %vm1324, %v2683, %v2711
        %v2827 = vsel %vm1324, %v2686, %v2713
        %v2831 = vsel %vm1324, %v2689, %v2715
        %v2835 = vsel %vm1324, %v2692, %v2717
        %v2839 = vsel %vm1324, %v2695, %v2719
        %v2843 = vsel %vm1324, %v2698, %v2721
        %v2847 = vsel %vm1324, %v2701, %v2723
        %v2851 = vsel %vm1324, %v2704, %v2725
        %v2855 = vsel %vm1324, %v2538, %v2743
        %v2859 = vsel %vm1324, %v2550, %v2745
        %v2863 = vsel %vm1324, %v2562, %v2747
        %v2867 = vsel %vm1324, %v2574, %v2749
        %v2871 = vsel %vm1324, %v2586, %v2751
        %v2875 = vsel %vm1324, %v2598, %v2753
        %v2879 = vsel %vm1324, %v2610, %v2755
        %v2883 = vsel %vm1324, %v2622, %v2757
        %v2887 = vsel %vm1324, %v2634, %v2759
        %v2891 = vsel %vm1324, %v2737, %v2761
        %v2894 = vsel %vm1324, %v2501, %v2775
        %v2897 = vsel %vm1324, %v2502, %v2777
        %v2899 = vld [vmem:[%s6] sm:$0xf]
        %v2900 = vld [vmem:[%s6 + $0x4] sm:$0xf]
        %v2901 = vld [vmem:[%s6 + $0x8] sm:$0xf]
        %v2902 = vld [vmem:[%s6 + $0xc] sm:$0xf]
        %v2903 = vld [vmem:[%s6 + $0x10] sm:$0xf]
        %v2904 = vld [vmem:[%s6 + $0x14] sm:$0xf]
        %v2905 = vld [vmem:[%s6 + $0x18] sm:$0xf]
        %v2906 = vld [vmem:[%s6 + $0x1c] sm:$0xf]
        %v2907 = vld [vmem:[%s6 + $0x20] sm:$0xf]
        %v2908 = vld [vmem:[%s6 + $0x24] sm:$0xf]
        %v2909 = vld [vmem:[%s6 + $0x28] sm:$0xf]
        %v2910 = vld [vmem:[%s6 + $0x2c] sm:$0xf]
        %v2911 = vld [vmem:[%s6 + $0x30] sm:$0xf]
        %v2912 = vld [vmem:[%s6 + $0x34] sm:$0xf]
        %v2913 = vld [vmem:[%s6 + $0x38] sm:$0xf]
        %v2914 = vld [vmem:[%s6 + $0x3c] sm:$0xf]
        %v2915 = vld [vmem:[%s6 + $0x40] sm:$0xf]
        %v2916 = vld [vmem:[%s6 + $0x44] sm:$0xf]
        %v2917 = vld [vmem:[%s6 + $0x48] sm:$0xf]
        %v2918 = vld [vmem:[%s6 + $0x4c] sm:$0xf]
        %v2919 = vld [vmem:[%s6 + $0x50] sm:$0xf]
        %v2920 = vld [vmem:[%s6 + $0x54] sm:$0xf]
        %v2921 = vld [vmem:[%s6 + $0x58] sm:$0xf]
        %v2922 = vld [vmem:[%s6 + $0x5c] sm:$0xf]
        %v2923 = vld [vmem:[%s6 + $0x60] sm:$0xf]
        %v2924 = vld [vmem:[%s6 + $0x64] sm:$0xf]
        %v2925 = vld [vmem:[%s6 + $0x68] sm:$0xf]
        %v2926 = vld [vmem:[%s6 + $0x6c] sm:$0xf]
        %v2927 = vld [vmem:[%s6 + $0x70] sm:$0xf]
        %v2928 = vld [vmem:[%s6 + $0x74] sm:$0xf]
        %v2929 = vld [vmem:[%s6 + $0x78] sm:$0xf]
        %v2930 = vld [vmem:[%s6 + $0x7c] sm:$0xf]
        %v2931 = vld [vmem:[%s6 + $0x80] sm:$0xf]
        %v2932 = vld [vmem:[%s6 + $0x84] sm:$0xf]
        %v2933 = vld [vmem:[%s6 + $0x88] sm:$0xf]
        %v2934 = vld [vmem:[%s6 + $0x8c] sm:$0xf]
        %v2935 = vld [vmem:[%s6 + $0x90] sm:$0xf]
        %v2936 = vld [vmem:[%s6 + $0x94] sm:$0xf]
        %v2937 = vld [vmem:[%s6 + $0x98] sm:$0xf]
        %v2938 = vld [vmem:[%s6 + $0x9c] sm:$0xf]
        %v2939 = vld [vmem:[%s6 + $0xa0] sm:$0xf]
        %v2940 = vld [vmem:[%s6 + $0xa4] sm:$0xf]
        %v2941 = vld [vmem:[%s6 + $0xa8] sm:$0xf]
        %v2942 = vld [vmem:[%s6 + $0xac] sm:$0xf]
        %v2943 = vld [vmem:[%s6 + $0xb0] sm:$0xf]
        %v2944 = vld [vmem:[%s6 + $0xb4] sm:$0xf]
        %v2945 = vld [vmem:[%s6 + $0xb8] sm:$0xf]
        %v2946 = vld [vmem:[%s6 + $0xbc] sm:$0xf]
        %v2947 = vld [vmem:[%s6 + $0xc0] sm:$0xf]
        %v2948 = vld [vmem:[%s6 + $0xc4] sm:$0xf]
        %v2949 = vld [vmem:[%s6 + $0xc8] sm:$0xf]
        %v2950 = vld [vmem:[%s6 + $0xcc] sm:$0xf]
        %v2951 = vld [vmem:[%s6 + $0xd0] sm:$0xf]
        %v2952 = vld [vmem:[%s6 + $0xd4] sm:$0xf]
        %v2953 = vld [vmem:[%s6 + $0xd8] sm:$0xf]
        %v2954 = vld [vmem:[%s6 + $0xdc] sm:$0xf]
        %v2955 = vld [vmem:[%s6 + $0xe0] sm:$0xf]
        %v2956 = vld [vmem:[%s6 + $0xe4] sm:$0xf]
        %v2957 = vld [vmem:[%s6 + $0xe8] sm:$0xf]
        %v2958 = vld [vmem:[%s6 + $0xec] sm:$0xf]
        %v2959 = vld [vmem:[%s6 + $0xf0] sm:$0xf]
        %v2960 = vld [vmem:[%s6 + $0xf4] sm:$0xf]
        %v2961 = vld [vmem:[%s6 + $0xf8] sm:$0xf]
        %v2962 = vld [vmem:[%s6 + $0xfc] sm:$0xf]
        %v2963 = vld [vmem:[%s6 + $0x100] sm:$0xf]
        %v2964 = vld [vmem:[%s6 + $0x104] sm:$0xf]
        %v2965 = vld [vmem:[%s6 + $0x108] sm:$0xf]
        %v2966 = vld [vmem:[%s6 + $0x10c] sm:$0xf]
        %v2967 = vld [vmem:[%s6 + $0x110] sm:$0xf]
        %v2968 = vld [vmem:[%s6 + $0x114] sm:$0xf]
        %v2969 = vld [vmem:[%s6 + $0x118] sm:$0xf]
        %v2970 = vld [vmem:[%s6 + $0x11c] sm:$0xf]
        %v3043 = vunpack.c.l.b16 %v2899
        %v3044 = vunpack.c.l.b16 %v2900
        %v3045 = vunpack.c.l.b16 %v2901
        %v3046 = vunpack.c.l.b16 %v2902
        %v3047 = vunpack.c.l.b16 %v2903
        %v3048 = vunpack.c.l.b16 %v2904
        %v3049 = vunpack.c.l.b16 %v2905
        %v3050 = vunpack.c.l.b16 %v2906
        %v3051 = vunpack.c.l.b16 %v2907
        %v3052 = vunpack.c.l.b16 %v2908
        %v3053 = vunpack.c.l.b16 %v2909
        %v3054 = vunpack.c.l.b16 %v2910
        %v3055 = vunpack.c.l.b16 %v2911
        %v3056 = vunpack.c.l.b16 %v2912
        %v3057 = vunpack.c.l.b16 %v2913
        %v3058 = vunpack.c.l.b16 %v2914
        %v3059 = vunpack.c.l.b16 %v2915
        %v3060 = vunpack.c.l.b16 %v2916
        %v3061 = vunpack.c.l.b16 %v2917
        %v3062 = vunpack.c.l.b16 %v2918
        %v3063 = vunpack.c.l.b16 %v2919
        %v3064 = vunpack.c.l.b16 %v2920
        %v3065 = vunpack.c.l.b16 %v2921
        %v3066 = vunpack.c.l.b16 %v2922
        %v3067 = vunpack.c.l.b16 %v2923
        %v3068 = vunpack.c.l.b16 %v2924
        %v3069 = vunpack.c.l.b16 %v2925
        %v3070 = vunpack.c.l.b16 %v2926
        %v3071 = vunpack.c.l.b16 %v2927
        %v3072 = vunpack.c.l.b16 %v2928
        %v3073 = vunpack.c.l.b16 %v2929
        %v3074 = vunpack.c.l.b16 %v2930
        %v3075 = vunpack.c.l.b16 %v2931
        %v3076 = vunpack.c.l.b16 %v2932
        %v3077 = vunpack.c.l.b16 %v2933
        %v3078 = vunpack.c.l.b16 %v2934
        %v3079 = vunpack.c.l.b16 %v2935
        %v3080 = vunpack.c.l.b16 %v2936
        %v3081 = vunpack.c.l.b16 %v2937
        %v3082 = vunpack.c.l.b16 %v2938
        %v3083 = vunpack.c.l.b16 %v2939
        %v3084 = vunpack.c.l.b16 %v2940
        %v3085 = vunpack.c.l.b16 %v2941
        %v3086 = vunpack.c.l.b16 %v2942
        %v3087 = vunpack.c.l.b16 %v2943
        %v3088 = vunpack.c.l.b16 %v2944
        %v3089 = vunpack.c.l.b16 %v2945
        %v3090 = vunpack.c.l.b16 %v2946
        %v3091 = vunpack.c.l.b16 %v2947
        %v3092 = vunpack.c.l.b16 %v2948
        %v3093 = vunpack.c.l.b16 %v2949
        %v3094 = vunpack.c.l.b16 %v2950
        %v3095 = vunpack.c.l.b16 %v2951
        %v3096 = vunpack.c.l.b16 %v2952
        %v3097 = vunpack.c.l.b16 %v2953
        %v3098 = vunpack.c.l.b16 %v2954
        %v3099 = vunpack.c.l.b16 %v2955
        %v3100 = vunpack.c.l.b16 %v2956
        %v3101 = vunpack.c.l.b16 %v2957
        %v3102 = vunpack.c.l.b16 %v2958
        %v3103 = vunpack.c.l.b16 %v2959
        %v3104 = vunpack.c.l.b16 %v2960
        %v3105 = vunpack.c.l.b16 %v2961
        %v3106 = vunpack.c.l.b16 %v2962
        %v3107 = vunpack.c.l.b16 %v2963
        %v3108 = vunpack.c.l.b16 %v2964
        %v3109 = vunpack.c.l.b16 %v2965
        %v3110 = vunpack.c.l.b16 %v2966
        %v3111 = vunpack.c.l.b16 %v2967
        %v3112 = vunpack.c.l.b16 %v2968
        %v3113 = vunpack.c.l.b16 %v2969
        %v3114 = vunpack.c.l.b16 %v2970
        %v3115 = vpack.c.b16 %v3044, %v3043
        %v3116 = vpack.c.b16 %v3046, %v3045
        %v3117 = vpack.c.b16 %v3048, %v3047
        %v3118 = vpack.c.b16 %v3050, %v3049
        %v3119 = vpack.c.b16 %v3052, %v3051
        %v3120 = vpack.c.b16 %v3054, %v3053
        %v3121 = vpack.c.b16 %v3056, %v3055
        %v3122 = vpack.c.b16 %v3058, %v3057
        %v3123 = vpack.c.b16 %v3060, %v3059
        %v3124 = vpack.c.b16 %v3062, %v3061
        %v3125 = vpack.c.b16 %v3064, %v3063
        %v3126 = vpack.c.b16 %v3066, %v3065
        %v3127 = vpack.c.b16 %v3068, %v3067
        %v3128 = vpack.c.b16 %v3070, %v3069
        %v3129 = vpack.c.b16 %v3072, %v3071
        %v3130 = vpack.c.b16 %v3074, %v3073
        %v3131 = vpack.c.b16 %v3076, %v3075
        %v3132 = vpack.c.b16 %v3078, %v3077
        %v3133 = vpack.c.b16 %v3080, %v3079
        %v3134 = vpack.c.b16 %v3082, %v3081
        %v3135 = vpack.c.b16 %v3084, %v3083
        %v3136 = vpack.c.b16 %v3086, %v3085
        %v3137 = vpack.c.b16 %v3088, %v3087
        %v3138 = vpack.c.b16 %v3090, %v3089
        %v3139 = vpack.c.b16 %v3092, %v3091
        %v3140 = vpack.c.b16 %v3094, %v3093
        %v3141 = vpack.c.b16 %v3096, %v3095
        %v3142 = vpack.c.b16 %v3098, %v3097
        %v3143 = vpack.c.b16 %v3100, %v3099
        %v3144 = vpack.c.b16 %v3102, %v3101
        %v3145 = vpack.c.b16 %v3104, %v3103
        %v3146 = vpack.c.b16 %v3106, %v3105
        %v3147 = vpack.c.b16 %v3108, %v3107
        %v3148 = vpack.c.b16 %v3110, %v3109
        %v3149 = vpack.c.b16 %v3112, %v3111
        %v3150 = vpack.c.b16 %v3114, %v3113
        %v3187 = vsel %vm1324, %v2683, 0
        %v3189 = vsel %vm1324, %v2686, 0
        %v3191 = vsel %vm1324, %v2689, 0
        %v3193 = vsel %vm1324, %v2692, 0
        %v3195 = vsel %vm1324, %v2695, 0
        %v3197 = vsel %vm1324, %v2698, 0
        %v3199 = vsel %vm1324, %v2701, 0
        %v3201 = vsel %vm1324, %v2704, 0
        %v3204 = vsel %vm1324, %v2741, 0
        %v3207 = vsel %vm1324, %v2782, 0
        %3209 = vmatpush.bf16.msra.mxu0 %v3122
        %3210 = vmatpush.bf16.msra.mxu0 %v3121
        %3211 = vmatpush.bf16.msra.mxu0 %v3120
        %3212 = vmatpush.bf16.msra.mxu0 %v3119
        %3213 = vmatpush.bf16.msra.mxu0 %v3118
        %3214 = vmatpush.bf16.msra.mxu0 %v3117
        %3215 = vmatpush.bf16.msra.mxu0 %v3116
        %3216 = vmatpush.bf16.msra.mxu0 %v3115
        %3217 = vmatmul.bf16.gmra.mxu0 %v2784
        %v3218 = vpop.f32.mrf.mxu0
        %v3219 = vadd.f32 0.0, %v3218
        %v3220 = vpop.f32.mrf.mxu0
        %v3221 = vadd.f32 0.0, %v3220
        %3222 = vmatmul.bf16.gmra.mxu0 %v2787
        %v3223 = vpop.f32.mrf.mxu0
        %v3224 = vadd.f32 0.0, %v3223
        %v3225 = vpop.f32.mrf.mxu0
        %v3226 = vadd.f32 0.0, %v3225
        %3227 = vmatmul.bf16.gmra.mxu0 %v2790
        %v3228 = vpop.f32.mrf.mxu0
        %v3229 = vadd.f32 0.0, %v3228
        %v3230 = vpop.f32.mrf.mxu0
        %v3231 = vadd.f32 0.0, %v3230
        %3232 = vmatmul.bf16.gmra.mxu0 %v2793
        %v3233 = vpop.f32.mrf.mxu0
        %v3234 = vadd.f32 0.0, %v3233
        %v3235 = vpop.f32.mrf.mxu0
        %v3236 = vadd.f32 0.0, %v3235
        %3237 = vmatmul.bf16.gmra.mxu0 %v2796
        %v3238 = vpop.f32.mrf.mxu0
        %v3239 = vadd.f32 0.0, %v3238
        %v3240 = vpop.f32.mrf.mxu0
        %v3241 = vadd.f32 0.0, %v3240
        %3242 = vmatmul.bf16.gmra.mxu0 %v2799
        %v3243 = vpop.f32.mrf.mxu0
        %v3244 = vadd.f32 0.0, %v3243
        %v3245 = vpop.f32.mrf.mxu0
        %v3246 = vadd.f32 0.0, %v3245
        %3247 = vmatmul.bf16.gmra.mxu0 %v2802
        %v3248 = vpop.f32.mrf.mxu0
        %v3249 = vadd.f32 0.0, %v3248
        %v3250 = vpop.f32.mrf.mxu0
        %v3251 = vadd.f32 0.0, %v3250
        %3252 = vmatmul.bf16.gmra.mxu0 %v2805
        %v3253 = vpop.f32.mrf.mxu0
        %v3254 = vadd.f32 0.0, %v3253
        %v3255 = vpop.f32.mrf.mxu0
        %v3256 = vadd.f32 0.0, %v3255
        %3257 = vmatmul.bf16.gmra.mxu0 %v2808
        %v3258 = vpop.f32.mrf.mxu0
        %v3259 = vadd.f32 0.0, %v3258
        %v3260 = vpop.f32.mrf.mxu0
        %v3261 = vadd.f32 0.0, %v3260
        %3262 = vmatmul.bf16.gmra.mxu0 %v2811
        %v3263 = vpop.f32.mrf.mxu0
        %v3264 = vadd.f32 0.0, %v3263
        %v3265 = vpop.f32.mrf.mxu0
        %v3266 = vadd.f32 0.0, %v3265
        %3267 = vdwg.mxu0
        %3268 = vmatpush.bf16.msra.mxu0 %v3130
        %3269 = vmatpush.bf16.msra.mxu0 %v3129
        %3270 = vmatpush.bf16.msra.mxu0 %v3128
        %3271 = vmatpush.bf16.msra.mxu0 %v3127
        %3272 = vmatpush.bf16.msra.mxu0 %v3126
        %3273 = vmatpush.bf16.msra.mxu0 %v3125
        %3274 = vmatpush.bf16.msra.mxu0 %v3124
        %3275 = vmatpush.bf16.msra.mxu0 %v3123
        %3276 = vmatmul.bf16.gmra.mxu0 %v2815
        %v3277 = vpop.f32.mrf.mxu0
        %v3278 = vadd.f32 %v3219, %v3277
        %v3279 = vpop.f32.mrf.mxu0
        %v3280 = vadd.f32 %v3221, %v3279
        %3281 = vmatmul.bf16.gmra.mxu0 %v2819
        %v3282 = vpop.f32.mrf.mxu0
        %v3283 = vadd.f32 %v3224, %v3282
        %v3284 = vpop.f32.mrf.mxu0
        %v3285 = vadd.f32 %v3226, %v3284
        %3286 = vmatmul.bf16.gmra.mxu0 %v2823
        %v3287 = vpop.f32.mrf.mxu0
        %v3288 = vadd.f32 %v3229, %v3287
        %v3289 = vpop.f32.mrf.mxu0
        %v3290 = vadd.f32 %v3231, %v3289
        %3291 = vmatmul.bf16.gmra.mxu0 %v2827
        %v3292 = vpop.f32.mrf.mxu0
        %v3293 = vadd.f32 %v3234, %v3292
        %v3294 = vpop.f32.mrf.mxu0
        %v3295 = vadd.f32 %v3236, %v3294
        %3296 = vmatmul.bf16.gmra.mxu0 %v2831
        %v3297 = vpop.f32.mrf.mxu0
        %v3298 = vadd.f32 %v3239, %v3297
        %v3299 = vpop.f32.mrf.mxu0
        %v3300 = vadd.f32 %v3241, %v3299
        %3301 = vmatmul.bf16.gmra.mxu0 %v2835
        %v3302 = vpop.f32.mrf.mxu0
        %v3303 = vadd.f32 %v3244, %v3302
        %v3304 = vpop.f32.mrf.mxu0
        %v3305 = vadd.f32 %v3246, %v3304
        %3306 = vmatmul.bf16.gmra.mxu0 %v2839
        %v3307 = vpop.f32.mrf.mxu0
        %v3308 = vadd.f32 %v3249, %v3307
        %v3309 = vpop.f32.mrf.mxu0
        %v3310 = vadd.f32 %v3251, %v3309
        %3311 = vmatmul.bf16.gmra.mxu0 %v2843
        %v3312 = vpop.f32.mrf.mxu0
        %v3313 = vadd.f32 %v3254, %v3312
        %v3314 = vpop.f32.mrf.mxu0
        %v3315 = vadd.f32 %v3256, %v3314
        %3316 = vmatmul.bf16.gmra.mxu0 %v2847
        %v3317 = vpop.f32.mrf.mxu0
        %v3318 = vadd.f32 %v3259, %v3317
        %v3319 = vpop.f32.mrf.mxu0
        %v3320 = vadd.f32 %v3261, %v3319
        %3321 = vmatmul.bf16.gmra.mxu0 %v2851
        %v3322 = vpop.f32.mrf.mxu0
        %v3323 = vadd.f32 %v3264, %v3322
        %v3324 = vpop.f32.mrf.mxu0
        %v3325 = vadd.f32 %v3266, %v3324
        %3326 = vdwg.mxu0
        %3327 = vmatpush.bf16.msra.mxu0 %v3138
        %3328 = vmatpush.bf16.msra.mxu0 %v3137
        %3329 = vmatpush.bf16.msra.mxu0 %v3136
        %3330 = vmatpush.bf16.msra.mxu0 %v3135
        %3331 = vmatpush.bf16.msra.mxu0 %v3134
        %3332 = vmatpush.bf16.msra.mxu0 %v3133
        %3333 = vmatpush.bf16.msra.mxu0 %v3132
        %3334 = vmatpush.bf16.msra.mxu0 %v3131
        %3335 = vmatmul.bf16.gmra.mxu0 %v2855
        %v3336 = vpop.f32.mrf.mxu0
        %v3337 = vadd.f32 %v3278, %v3336
        %v3338 = vpop.f32.mrf.mxu0
        %v3339 = vadd.f32 %v3280, %v3338
        %3340 = vmatmul.bf16.gmra.mxu0 %v2859
        %v3341 = vpop.f32.mrf.mxu0
        %v3342 = vadd.f32 %v3283, %v3341
        %v3343 = vpop.f32.mrf.mxu0
        %v3344 = vadd.f32 %v3285, %v3343
        %3345 = vmatmul.bf16.gmra.mxu0 %v2863
        %v3346 = vpop.f32.mrf.mxu0
        %v3347 = vadd.f32 %v3288, %v3346
        %v3348 = vpop.f32.mrf.mxu0
        %v3349 = vadd.f32 %v3290, %v3348
        %3350 = vmatmul.bf16.gmra.mxu0 %v2867
        %v3351 = vpop.f32.mrf.mxu0
        %v3352 = vadd.f32 %v3293, %v3351
        %v3353 = vpop.f32.mrf.mxu0
        %v3354 = vadd.f32 %v3295, %v3353
        %3355 = vmatmul.bf16.gmra.mxu0 %v2871
        %v3356 = vpop.f32.mrf.mxu0
        %v3357 = vadd.f32 %v3298, %v3356
        %v3358 = vpop.f32.mrf.mxu0
        %v3359 = vadd.f32 %v3300, %v3358
        %3360 = vmatmul.bf16.gmra.mxu0 %v2875
        %v3361 = vpop.f32.mrf.mxu0
        %v3362 = vadd.f32 %v3303, %v3361
        %v3363 = vpop.f32.mrf.mxu0
        %v3364 = vadd.f32 %v3305, %v3363
        %3365 = vmatmul.bf16.gmra.mxu0 %v2879
        %v3366 = vpop.f32.mrf.mxu0
        %v3367 = vadd.f32 %v3308, %v3366
        %v3368 = vpop.f32.mrf.mxu0
        %v3369 = vadd.f32 %v3310, %v3368
        %3370 = vmatmul.bf16.gmra.mxu0 %v2883
        %v3371 = vpop.f32.mrf.mxu0
        %v3372 = vadd.f32 %v3313, %v3371
        %v3373 = vpop.f32.mrf.mxu0
        %v3374 = vadd.f32 %v3315, %v3373
        %3375 = vmatmul.bf16.gmra.mxu0 %v2887
        %v3376 = vpop.f32.mrf.mxu0
        %v3377 = vadd.f32 %v3318, %v3376
        %v3378 = vpop.f32.mrf.mxu0
        %v3379 = vadd.f32 %v3320, %v3378
        %3380 = vmatmul.bf16.gmra.mxu0 %v2891
        %v3381 = vpop.f32.mrf.mxu0
        %v3382 = vadd.f32 %v3323, %v3381
        %v3383 = vpop.f32.mrf.mxu0
        %v3384 = vadd.f32 %v3325, %v3383
        %3385 = vdwg.mxu0
        %3386 = vmatpush.bf16.msra.mxu0 %v3146
        %3387 = vmatpush.bf16.msra.mxu0 %v3145
        %3388 = vmatpush.bf16.msra.mxu0 %v3144
        %3389 = vmatpush.bf16.msra.mxu0 %v3143
        %3390 = vmatpush.bf16.msra.mxu0 %v3142
        %3391 = vmatpush.bf16.msra.mxu0 %v3141
        %3392 = vmatpush.bf16.msra.mxu0 %v3140
        %3393 = vmatpush.bf16.msra.mxu0 %v3139
        %3394 = vmatmul.bf16.gmra.mxu0 %v2790
        %v3395 = vpop.f32.mrf.mxu0
        %v3396 = vadd.f32 %v3337, %v3395
        %v3397 = vpop.f32.mrf.mxu0
        %v3398 = vadd.f32 %v3339, %v3397
        %3399 = vmatmul.bf16.gmra.mxu0 %v2793
        %v3400 = vpop.f32.mrf.mxu0
        %v3401 = vadd.f32 %v3342, %v3400
        %v3402 = vpop.f32.mrf.mxu0
        %v3403 = vadd.f32 %v3344, %v3402
        %3404 = vmatmul.bf16.gmra.mxu0 %v2796
        %v3405 = vpop.f32.mrf.mxu0
        %v3406 = vadd.f32 %v3347, %v3405
        %v3407 = vpop.f32.mrf.mxu0
        %v3408 = vadd.f32 %v3349, %v3407
        %3409 = vmatmul.bf16.gmra.mxu0 %v2799
        %v3410 = vpop.f32.mrf.mxu0
        %v3411 = vadd.f32 %v3352, %v3410
        %v3412 = vpop.f32.mrf.mxu0
        %v3413 = vadd.f32 %v3354, %v3412
        %3414 = vmatmul.bf16.gmra.mxu0 %v2802
        %v3415 = vpop.f32.mrf.mxu0
        %v3416 = vadd.f32 %v3357, %v3415
        %v3417 = vpop.f32.mrf.mxu0
        %v3418 = vadd.f32 %v3359, %v3417
        %3419 = vmatmul.bf16.gmra.mxu0 %v2805
        %v3420 = vpop.f32.mrf.mxu0
        %v3421 = vadd.f32 %v3362, %v3420
        %v3422 = vpop.f32.mrf.mxu0
        %v3423 = vadd.f32 %v3364, %v3422
        %3424 = vmatmul.bf16.gmra.mxu0 %v2808
        %v3425 = vpop.f32.mrf.mxu0
        %v3426 = vadd.f32 %v3367, %v3425
        %v3427 = vpop.f32.mrf.mxu0
        %v3428 = vadd.f32 %v3369, %v3427
        %3429 = vmatmul.bf16.gmra.mxu0 %v2811
        %v3430 = vpop.f32.mrf.mxu0
        %v3431 = vadd.f32 %v3372, %v3430
        %v3432 = vpop.f32.mrf.mxu0
        %v3433 = vadd.f32 %v3374, %v3432
        %3434 = vmatmul.bf16.gmra.mxu0 %v2894
        %v3435 = vpop.f32.mrf.mxu0
        %v3436 = vadd.f32 %v3377, %v3435
        %v3437 = vpop.f32.mrf.mxu0
        %v3438 = vadd.f32 %v3379, %v3437
        %3439 = vmatmul.bf16.gmra.mxu0 %v2897
        %v3440 = vpop.f32.mrf.mxu0
        %v3441 = vadd.f32 %v3382, %v3440
        %v3442 = vpop.f32.mrf.mxu0
        %v3443 = vadd.f32 %v3384, %v3442
        %3444 = vdwg.mxu0
        %3445 = vmatpush.bf16.msra.mxu0 0
        %3446 = vmatpush.bf16.msra.mxu0 0
        %3447 = vmatpush.bf16.msra.mxu0 0
        %3448 = vmatpush.bf16.msra.mxu0 0
        %3449 = vmatpush.bf16.msra.mxu0 %v3150
        %3450 = vmatpush.bf16.msra.mxu0 %v3149
        %3451 = vmatpush.bf16.msra.mxu0 %v3148
        %3452 = vmatpush.bf16.msra.mxu0 %v3147
        %3453 = vmatmul.bf16.gmra.mxu0 %v3187
        %v3454 = vpop.f32.mrf.mxu0
        %v3455 = vadd.f32 %v3396, %v3454
        %v3456 = vpop.f32.mrf.mxu0
        %v3457 = vadd.f32 %v3398, %v3456
        %3458 = vmatmul.bf16.gmra.mxu0 %v3189
        %v3459 = vpop.f32.mrf.mxu0
        %v3460 = vadd.f32 %v3401, %v3459
        %v3461 = vpop.f32.mrf.mxu0
        %v3462 = vadd.f32 %v3403, %v3461
        %3463 = vmatmul.bf16.gmra.mxu0 %v3191
        %v3464 = vpop.f32.mrf.mxu0
        %v3465 = vadd.f32 %v3406, %v3464
        %v3466 = vpop.f32.mrf.mxu0
        %v3467 = vadd.f32 %v3408, %v3466
        %3468 = vmatmul.bf16.gmra.mxu0 %v3193
        %v3469 = vpop.f32.mrf.mxu0
        %v3470 = vadd.f32 %v3411, %v3469
        %v3471 = vpop.f32.mrf.mxu0
        %v3472 = vadd.f32 %v3413, %v3471
        %3473 = vmatmul.bf16.gmra.mxu0 %v3195
        %v3474 = vpop.f32.mrf.mxu0
        %v3475 = vadd.f32 %v3416, %v3474
        %v3476 = vpop.f32.mrf.mxu0
        %v3477 = vadd.f32 %v3418, %v3476
        %3478 = vmatmul.bf16.gmra.mxu0 %v3197
        %v3479 = vpop.f32.mrf.mxu0
        %v3480 = vadd.f32 %v3421, %v3479
        %v3481 = vpop.f32.mrf.mxu0
        %v3482 = vadd.f32 %v3423, %v3481
        %3483 = vmatmul.bf16.gmra.mxu0 %v3199
        %v3484 = vpop.f32.mrf.mxu0
        %v3485 = vadd.f32 %v3426, %v3484
        %v3486 = vpop.f32.mrf.mxu0
        %v3487 = vadd.f32 %v3428, %v3486
        %3488 = vmatmul.bf16.gmra.mxu0 %v3201
        %v3489 = vpop.f32.mrf.mxu0
        %v3490 = vadd.f32 %v3431, %v3489
        %v3491 = vpop.f32.mrf.mxu0
        %v3492 = vadd.f32 %v3433, %v3491
        %3493 = vmatmul.bf16.gmra.mxu0 %v3204
        %v3494 = vpop.f32.mrf.mxu0
        %v3495 = vadd.f32 %v3436, %v3494
        %v3496 = vpop.f32.mrf.mxu0
        %v3497 = vadd.f32 %v3438, %v3496
        %3498 = vmatmul.bf16.gmra.mxu0 %v3207
        %v3499 = vpop.f32.mrf.mxu0
        %v3500 = vadd.f32 %v3441, %v3499
        %v3501 = vpop.f32.mrf.mxu0
        %v3502 = vadd.f32 %v3443, %v3501
        %3503 = vdwg.mxu0
        %v3504 = vld [vmem:[%s7] sm:$0x1]
        %v3506 = vperm.slane %v3504, 0
        %v3508 = vadd.f32 %v3455, %v3506
        %v3509 = vadd.f32 %v3457, %v3506
        %v3510 = vadd.f32 %v3460, %v3506
        %v3511 = vadd.f32 %v3462, %v3506
        %v3512 = vadd.f32 %v3465, %v3506
        %v3513 = vadd.f32 %v3467, %v3506
        %v3514 = vadd.f32 %v3470, %v3506
        %v3515 = vadd.f32 %v3472, %v3506
        %v3516 = vadd.f32 %v3475, %v3506
        %v3517 = vadd.f32 %v3477, %v3506
        %v3518 = vadd.f32 %v3480, %v3506
        %v3519 = vadd.f32 %v3482, %v3506
        %v3520 = vadd.f32 %v3485, %v3506
        %v3521 = vadd.f32 %v3487, %v3506
        %v3522 = vadd.f32 %v3490, %v3506
        %v3523 = vadd.f32 %v3492, %v3506
        %v3524 = vadd.f32 %v3495, %v3506
        %v3525 = vadd.f32 %v3497, %v3506
        %v3526 = vadd.f32 %v3500, %v3506
        %v3527 = vadd.f32 %v3502, %v3506
        %v3528 = vmax.f32 %v3508, 0.0
        %v3529 = vmax.f32 %v3509, 0.0
        %v3530 = vmax.f32 %v3510, 0.0
        %v3531 = vmax.f32 %v3511, 0.0
        %v3532 = vmax.f32 %v3512, 0.0
        %v3533 = vmax.f32 %v3513, 0.0
        %v3534 = vmax.f32 %v3514, 0.0
        %v3535 = vmax.f32 %v3515, 0.0
        %v3536 = vmax.f32 %v3516, 0.0
        %v3537 = vmax.f32 %v3517, 0.0
        %v3538 = vmax.f32 %v3518, 0.0
        %v3539 = vmax.f32 %v3519, 0.0
        %v3540 = vmax.f32 %v3520, 0.0
        %v3541 = vmax.f32 %v3521, 0.0
        %v3542 = vmax.f32 %v3522, 0.0
        %v3543 = vmax.f32 %v3523, 0.0
        %v3544 = vmax.f32 %v3524, 0.0
        %v3545 = vmax.f32 %v3525, 0.0
        %v3546 = vmax.f32 %v3526, 0.0
        %v3547 = vmax.f32 %v3527, 0.0
        %s3548 = ssub.s32 %s393, 1
        %v3549 = vstv %s3548
        %v3550 = vadd.s32 %v3549, 1
        %v3551 = vadd.s32 %v3549, 2
        %v3552 = vadd.s32 %v3549, 3
        %v3553 = vadd.s32 %v3549, 4
        %v3554 = vadd.s32 %v3549, 5
        %v3555 = vadd.s32 %v3549, 6
        %v3556 = vadd.s32 %v3549, 7
        %v3557 = vadd.s32 %v3549, 8
        %v3558 = vadd.s32 %v3549, 9
        %vm3559 = vcmp.ge.s32.totalorder %v3549, 0
        %vm3560 = vcmp.ge.s32.totalorder %v3550, 0
        %vm3561 = vcmp.ge.s32.totalorder %v3551, 0
        %vm3562 = vcmp.ge.s32.totalorder %v3552, 0
        %vm3563 = vcmp.ge.s32.totalorder %v3553, 0
        %vm3564 = vcmp.ge.s32.totalorder %v3554, 0
        %vm3565 = vcmp.ge.s32.totalorder %v3555, 0
        %vm3566 = vcmp.ge.s32.totalorder %v3556, 0
        %vm3567 = vcmp.ge.s32.totalorder %v3557, 0
        %vm3568 = vcmp.ge.s32.totalorder %v3558, 0
        %vm3569 = vcmp.lt.s32.totalorder %v3549, 16
        %vm3570 = vcmp.lt.s32.totalorder %v3550, 16
        %vm3571 = vcmp.lt.s32.totalorder %v3551, 16
        %vm3572 = vcmp.lt.s32.totalorder %v3552, 16
        %vm3573 = vcmp.lt.s32.totalorder %v3553, 16
        %vm3574 = vcmp.lt.s32.totalorder %v3554, 16
        %vm3575 = vcmp.lt.s32.totalorder %v3555, 16
        %vm3576 = vcmp.lt.s32.totalorder %v3556, 16
        %vm3577 = vcmp.lt.s32.totalorder %v3557, 16
        %vm3578 = vcmp.lt.s32.totalorder %v3558, 16
        %vm3579 = vmand %vm3559, %vm3569
        %vm3580 = vmand %vm3560, %vm3570
        %vm3581 = vmand %vm3561, %vm3571
        %vm3582 = vmand %vm3562, %vm3572
        %vm3583 = vmand %vm3563, %vm3573
        %vm3584 = vmand %vm3564, %vm3574
        %vm3585 = vmand %vm3565, %vm3575
        %vm3586 = vmand %vm3566, %vm3576
        %vm3587 = vmand %vm3567, %vm3577
        %vm3588 = vmand %vm3568, %vm3578
        %v3589 = vsel %vm3579, %v3528, 0.0
        %v3590 = vsel %vm3579, %v3529, 0.0
        %v3591 = vsel %vm3580, %v3530, 0.0
        %v3592 = vsel %vm3580, %v3531, 0.0
        %v3593 = vsel %vm3581, %v3532, 0.0
        %v3594 = vsel %vm3581, %v3533, 0.0
        %v3595 = vsel %vm3582, %v3534, 0.0
        %v3596 = vsel %vm3582, %v3535, 0.0
        %v3597 = vsel %vm3583, %v3536, 0.0
        %v3598 = vsel %vm3583, %v3537, 0.0
        %v3599 = vsel %vm3584, %v3538, 0.0
        %v3600 = vsel %vm3584, %v3539, 0.0
        %v3601 = vsel %vm3585, %v3540, 0.0
        %v3602 = vsel %vm3585, %v3541, 0.0
        %v3603 = vsel %vm3586, %v3542, 0.0
        %v3604 = vsel %vm3586, %v3543, 0.0
        %v3605 = vsel %vm3587, %v3544, 0.0
        %v3606 = vsel %vm3587, %v3545, 0.0
        %v3607 = vsel %vm3588, %v3546, 0.0
        %v3608 = vsel %vm3588, %v3547, 0.0
        %v3609 = vadd.f32 %v3589, %v729
        %v3610 = vadd.f32 %v3590, %v730
        %v3611 = vadd.f32 %v3591, %v731
        %v3612 = vadd.f32 %v3592, %v732
        %v3613 = vadd.f32 %v3593, %v733
        %v3614 = vadd.f32 %v3594, %v734
        %v3615 = vadd.f32 %v3595, %v735
        %v3616 = vadd.f32 %v3596, %v736
        %v3617 = vadd.f32 %v3597, %v737
        %v3618 = vadd.f32 %v3598, %v738
        %v3619 = vadd.f32 %v3599, %v739
        %v3620 = vadd.f32 %v3600, %v740
        %v3621 = vadd.f32 %v3601, %v741
        %v3622 = vadd.f32 %v3602, %v742
        %v3623 = vadd.f32 %v3603, %v743
        %v3624 = vadd.f32 %v3604, %v744
        %v3625 = vadd.f32 %v3605, %v745
        %v3626 = vadd.f32 %v3606, %v746
        %v3627 = vadd.f32 %v3607, %v747
        %v3628 = vadd.f32 %v3608, %v748
        %v3629 = vpack.c.bf16 %v3609, %v3609
        %v3630 = vpack.c.bf16 %v3610, %v3610
        %v3631 = vpack.c.bf16 %v3611, %v3611
        %v3632 = vpack.c.bf16 %v3612, %v3612
        %v3633 = vpack.c.bf16 %v3613, %v3613
        %v3634 = vpack.c.bf16 %v3614, %v3614
        %v3635 = vpack.c.bf16 %v3615, %v3615
        %v3636 = vpack.c.bf16 %v3616, %v3616
        %v3637 = vpack.c.bf16 %v3617, %v3617
        %v3638 = vpack.c.bf16 %v3618, %v3618
        %v3639 = vpack.c.bf16 %v3619, %v3619
        %v3640 = vpack.c.bf16 %v3620, %v3620
        %v3641 = vpack.c.bf16 %v3621, %v3621
        %v3642 = vpack.c.bf16 %v3622, %v3622
        %v3643 = vpack.c.bf16 %v3623, %v3623
        %v3644 = vpack.c.bf16 %v3624, %v3624
        %v3645 = vpack.c.bf16 %v3625, %v3625
        %v3646 = vpack.c.bf16 %v3626, %v3626
        %v3647 = vpack.c.bf16 %v3627, %v3627
        %v3648 = vpack.c.bf16 %v3628, %v3628
        %v3669 = vunpack.c.l.b16 %v3629
        %v3670 = vunpack.c.l.b16 %v3630
        %v3671 = vunpack.c.l.b16 %v3631
        %v3672 = vunpack.c.l.b16 %v3632
        %v3673 = vunpack.c.l.b16 %v3633
        %v3674 = vunpack.c.l.b16 %v3634
        %v3675 = vunpack.c.l.b16 %v3635
        %v3676 = vunpack.c.l.b16 %v3636
        %v3677 = vunpack.c.l.b16 %v3637
        %v3678 = vunpack.c.l.b16 %v3638
        %v3679 = vunpack.c.l.b16 %v3639
        %v3680 = vunpack.c.l.b16 %v3640
        %v3681 = vunpack.c.l.b16 %v3641
        %v3682 = vunpack.c.l.b16 %v3642
        %v3683 = vunpack.c.l.b16 %v3643
        %v3684 = vunpack.c.l.b16 %v3644
        %v3685 = vunpack.c.l.b16 %v3645
        %v3686 = vunpack.c.l.b16 %v3646
        %v3687 = vunpack.c.l.b16 %v3647
        %v3688 = vunpack.c.l.b16 %v3648
        %v3689 = vpack.c.b16 %v3670, %v3669
        %v3690 = vpack.c.b16 %v3672, %v3671
        %v3691 = vpack.c.b16 %v3674, %v3673
        %v3692 = vpack.c.b16 %v3676, %v3675
        %v3693 = vpack.c.b16 %v3678, %v3677
        %v3694 = vpack.c.b16 %v3680, %v3679
        %v3695 = vpack.c.b16 %v3682, %v3681
        %v3696 = vpack.c.b16 %v3684, %v3683
        %v3697 = vpack.c.b16 %v3686, %v3685
        %v3698 = vpack.c.b16 %v3688, %v3687
        %v3700 = vshrl.u32 %v3689, 16
        %v3702 = vrot.slane %v3700, 7
        %v3703 = vshll.u32 %v3689, 16
        %v3705 = vor.u32 %v3702, %v3703
        %v3707 = vshrl.u32 %v3690, 16
        %v3709 = vrot.slane %v3707, 7
        %v3710 = vshll.u32 %v3690, 16
        %v3712 = vor.u32 %v3709, %v3710
        %v3714 = vshrl.u32 %v3691, 16
        %v3716 = vrot.slane %v3714, 7
        %v3717 = vshll.u32 %v3691, 16
        %v3719 = vor.u32 %v3716, %v3717
        %v3721 = vshrl.u32 %v3692, 16
        %v3723 = vrot.slane %v3721, 7
        %v3724 = vshll.u32 %v3692, 16
        %v3726 = vor.u32 %v3723, %v3724
        %v3728 = vshrl.u32 %v3693, 16
        %v3730 = vrot.slane %v3728, 7
        %v3731 = vshll.u32 %v3693, 16
        %v3733 = vor.u32 %v3730, %v3731
        %v3735 = vshrl.u32 %v3694, 16
        %v3737 = vrot.slane %v3735, 7
        %v3738 = vshll.u32 %v3694, 16
        %v3740 = vor.u32 %v3737, %v3738
        %v3742 = vshrl.u32 %v3695, 16
        %v3744 = vrot.slane %v3742, 7
        %v3745 = vshll.u32 %v3695, 16
        %v3747 = vor.u32 %v3744, %v3745
        %v3749 = vshrl.u32 %v3696, 16
        %v3751 = vrot.slane %v3749, 7
        %v3752 = vshll.u32 %v3696, 16
        %v3754 = vor.u32 %v3751, %v3752
        %v3756 = vshrl.u32 %v3697, 16
        %v3758 = vrot.slane %v3756, 7
        %v3759 = vshll.u32 %v3697, 16
        %v3761 = vor.u32 %v3758, %v3759
        %v3763 = vshrl.u32 %v3698, 16
        %v3765 = vrot.slane %v3763, 7
        %v3766 = vshll.u32 %v3698, 16
        %v3768 = vor.u32 %v3765, %v3766
        %v3789 = vsel %vm979, 0, %v3705
        %v3790 = vsel %vm979, 0, %v3712
        %v3791 = vsel %vm979, 0, %v3719
        %v3792 = vsel %vm979, 0, %v3726
        %v3793 = vsel %vm979, 0, %v3733
        %v3794 = vsel %vm979, 0, %v3740
        %v3795 = vsel %vm979, 0, %v3747
        %v3796 = vsel %vm979, 0, %v3754
        %v3797 = vsel %vm979, 0, %v3761
        %v3798 = vsel %vm979, 0, %v3768
        %v3799 = vsel %vm979, %v3702, 0
        %v3800 = vsel %vm979, %v3709, 0
        %v3801 = vsel %vm979, %v3716, 0
        %v3802 = vsel %vm979, %v3723, 0
        %v3803 = vsel %vm979, %v3730, 0
        %v3804 = vsel %vm979, %v3737, 0
        %v3805 = vsel %vm979, %v3744, 0
        %v3806 = vsel %vm979, %v3751, 0
        %v3807 = vsel %vm979, %v3758, 0
        %v3808 = vsel %vm979, %v3765, 0
        %v3810 = vshrl.u32 %v3789, 16
        %v3812 = vshll.u32 %v3789, 16
        %v3814 = vrot.slane %v3812, 1
        %v3815 = vor.u32 %v3810, %v3814
        %v3817 = vshll.u32 %v3799, 16
        %v3819 = vrot.slane %v3817, 1
        %v3820 = vsel %vm1008, %v3815, %v3819
        %v3822 = vshrl.u32 %v3790, 16
        %v3824 = vshll.u32 %v3790, 16
        %v3826 = vrot.slane %v3824, 1
        %v3827 = vor.u32 %v3822, %v3826
        %v3829 = vshll.u32 %v3800, 16
        %v3831 = vrot.slane %v3829, 1
        %v3832 = vsel %vm1008, %v3827, %v3831
        %v3834 = vshrl.u32 %v3791, 16
        %v3836 = vshll.u32 %v3791, 16
        %v3838 = vrot.slane %v3836, 1
        %v3839 = vor.u32 %v3834, %v3838
        %v3841 = vshll.u32 %v3801, 16
        %v3843 = vrot.slane %v3841, 1
        %v3844 = vsel %vm1008, %v3839, %v3843
        %v3846 = vshrl.u32 %v3792, 16
        %v3848 = vshll.u32 %v3792, 16
        %v3850 = vrot.slane %v3848, 1
        %v3851 = vor.u32 %v3846, %v3850
        %v3853 = vshll.u32 %v3802, 16
        %v3855 = vrot.slane %v3853, 1
        %v3856 = vsel %vm1008, %v3851, %v3855
        %v3858 = vshrl.u32 %v3793, 16
        %v3860 = vshll.u32 %v3793, 16
        %v3862 = vrot.slane %v3860, 1
        %v3863 = vor.u32 %v3858, %v3862
        %v3865 = vshll.u32 %v3803, 16
        %v3867 = vrot.slane %v3865, 1
        %v3868 = vsel %vm1008, %v3863, %v3867
        %v3870 = vshrl.u32 %v3794, 16
        %v3872 = vshll.u32 %v3794, 16
        %v3874 = vrot.slane %v3872, 1
        %v3875 = vor.u32 %v3870, %v3874
        %v3877 = vshll.u32 %v3804, 16
        %v3879 = vrot.slane %v3877, 1
        %v3880 = vsel %vm1008, %v3875, %v3879
        %v3882 = vshrl.u32 %v3795, 16
        %v3884 = vshll.u32 %v3795, 16
        %v3886 = vrot.slane %v3884, 1
        %v3887 = vor.u32 %v3882, %v3886
        %v3889 = vshll.u32 %v3805, 16
        %v3891 = vrot.slane %v3889, 1
        %v3892 = vsel %vm1008, %v3887, %v3891
        %v3894 = vshrl.u32 %v3796, 16
        %v3896 = vshll.u32 %v3796, 16
        %v3898 = vrot.slane %v3896, 1
        %v3899 = vor.u32 %v3894, %v3898
        %v3901 = vshll.u32 %v3806, 16
        %v3903 = vrot.slane %v3901, 1
        %v3904 = vsel %vm1008, %v3899, %v3903
        %3905 = vrot.lane.b32.xlu0 %v3820, 64
        %v3906 = vpop.permute.xlu0 %3905
        %3907 = vrot.lane.b32.xlu0 %v3832, 64
        %v3908 = vpop.permute.xlu0 %3907
        %3909 = vrot.lane.b32.xlu0 %v3844, 64
        %v3910 = vpop.permute.xlu0 %3909
        %3911 = vrot.lane.b32.xlu0 %v3856, 64
        %v3912 = vpop.permute.xlu0 %3911
        %3913 = vrot.lane.b32.xlu0 %v3868, 64
        %v3914 = vpop.permute.xlu0 %3913
        %3915 = vrot.lane.b32.xlu0 %v3880, 64
        %v3916 = vpop.permute.xlu0 %3915
        %3917 = vrot.lane.b32.xlu0 %v3892, 64
        %v3918 = vpop.permute.xlu0 %3917
        %3919 = vrot.lane.b32.xlu0 %v3904, 64
        %v3920 = vpop.permute.xlu0 %3919
        %v3937 = vrot.slane %v3789, 1
        %v3938 = vrot.slane %v3799, 1
        %v3939 = vsel %vm1201, %v3937, %v3938
        %v3940 = vrot.slane %v3790, 1
        %v3941 = vrot.slane %v3800, 1
        %v3942 = vsel %vm1201, %v3940, %v3941
        %v3943 = vrot.slane %v3791, 1
        %v3944 = vrot.slane %v3801, 1
        %v3945 = vsel %vm1201, %v3943, %v3944
        %v3946 = vrot.slane %v3792, 1
        %v3947 = vrot.slane %v3802, 1
        %v3948 = vsel %vm1201, %v3946, %v3947
        %v3949 = vrot.slane %v3793, 1
        %v3950 = vrot.slane %v3803, 1
        %v3951 = vsel %vm1201, %v3949, %v3950
        %v3952 = vrot.slane %v3794, 1
        %v3953 = vrot.slane %v3804, 1
        %v3954 = vsel %vm1201, %v3952, %v3953
        %v3955 = vrot.slane %v3795, 1
        %v3956 = vrot.slane %v3805, 1
        %v3957 = vsel %vm1201, %v3955, %v3956
        %v3958 = vrot.slane %v3796, 1
        %v3959 = vrot.slane %v3806, 1
        %v3960 = vsel %vm1201, %v3958, %v3959
        %3962 = vrot.lane.b32.xlu0 %v3790, 64
        %v3963 = vpop.permute.xlu0 %3962
        %3964 = vrot.lane.b32.xlu0 %v3791, 64
        %v3965 = vpop.permute.xlu0 %3964
        %3966 = vrot.lane.b32.xlu0 %v3792, 64
        %v3967 = vpop.permute.xlu0 %3966
        %3968 = vrot.lane.b32.xlu0 %v3793, 64
        %v3969 = vpop.permute.xlu0 %3968
        %3970 = vrot.lane.b32.xlu0 %v3794, 64
        %v3971 = vpop.permute.xlu0 %3970
        %3972 = vrot.lane.b32.xlu0 %v3795, 64
        %v3973 = vpop.permute.xlu0 %3972
        %3974 = vrot.lane.b32.xlu0 %v3796, 64
        %v3975 = vpop.permute.xlu0 %3974
        %3976 = vrot.lane.b32.xlu0 %v3797, 64
        %v3977 = vpop.permute.xlu0 %3976
        %v3979 = vshrl.u32 %v3797, 16
        %v3981 = vshll.u32 %v3797, 16
        %v3983 = vrot.slane %v3981, 1
        %v3984 = vor.u32 %v3979, %v3983
        %v3986 = vshll.u32 %v3807, 16
        %v3988 = vrot.slane %v3986, 1
        %v3989 = vsel %vm1008, %v3984, %v3988
        %v3991 = vrot.slane %v3797, 1
        %v3992 = vrot.slane %v3807, 1
        %v3993 = vsel %vm1201, %v3991, %v3992
        %3994 = vrot.lane.b32.xlu0 %v3942, 64
        %v3995 = vpop.permute.xlu0 %3994
        %3996 = vrot.lane.b32.xlu0 %v3945, 64
        %v3997 = vpop.permute.xlu0 %3996
        %3998 = vrot.lane.b32.xlu0 %v3948, 64
        %v3999 = vpop.permute.xlu0 %3998
        %4000 = vrot.lane.b32.xlu0 %v3951, 64
        %v4001 = vpop.permute.xlu0 %4000
        %4002 = vrot.lane.b32.xlu0 %v3954, 64
        %v4003 = vpop.permute.xlu0 %4002
        %4004 = vrot.lane.b32.xlu0 %v3957, 64
        %v4005 = vpop.permute.xlu0 %4004
        %4006 = vrot.lane.b32.xlu0 %v3960, 64
        %v4007 = vpop.permute.xlu0 %4006
        %4008 = vrot.lane.b32.xlu0 %v3993, 64
        %v4009 = vpop.permute.xlu0 %4008
        %v4011 = vshrl.u32 %v3798, 16
        %v4013 = vshll.u32 %v3798, 16
        %v4015 = vrot.slane %v4013, 1
        %v4016 = vor.u32 %v4011, %v4015
        %v4018 = vshll.u32 %v3808, 16
        %v4020 = vrot.slane %v4018, 1
        %v4021 = vsel %vm1008, %v4016, %v4020
        %4022 = vrot.lane.b32.xlu0 %v3989, 64
        %v4023 = vpop.permute.xlu0 %4022
        %4024 = vrot.lane.b32.xlu0 %v4021, 64
        %v4025 = vpop.permute.xlu0 %4024
        %v4028 = vrot.slane %v3798, 1
        %v4029 = vrot.slane %v3808, 1
        %v4030 = vsel %vm1201, %v4028, %v4029
        %v4032 = vsel %vm1324, %v3789, %v3906
        %v4035 = vsel %vm1324, %v3790, %v3908
        %v4038 = vsel %vm1324, %v3791, %v3910
        %v4041 = vsel %vm1324, %v3792, %v3912
        %v4044 = vsel %vm1324, %v3793, %v3914
        %v4047 = vsel %vm1324, %v3794, %v3916
        %v4050 = vsel %vm1324, %v3795, %v3918
        %v4053 = vsel %vm1324, %v3796, %v3920
        %v4057 = vsel %vm1324, %v3939, %v3963
        %v4061 = vsel %vm1324, %v3942, %v3965
        %v4065 = vsel %vm1324, %v3945, %v3967
        %v4069 = vsel %vm1324, %v3948, %v3969
        %v4073 = vsel %vm1324, %v3951, %v3971
        %v4077 = vsel %vm1324, %v3954, %v3973
        %v4081 = vsel %vm1324, %v3957, %v3975
        %v4085 = vsel %vm1324, %v3960, %v3977
        %v4089 = vsel %vm1324, %v3832, %v3995
        %v4093 = vsel %vm1324, %v3844, %v3997
        %v4097 = vsel %vm1324, %v3856, %v3999
        %v4101 = vsel %vm1324, %v3868, %v4001
        %v4105 = vsel %vm1324, %v3880, %v4003
        %v4109 = vsel %vm1324, %v3892, %v4005
        %v4113 = vsel %vm1324, %v3904, %v4007
        %v4117 = vsel %vm1324, %v3989, %v4009
        %v4120 = vsel %vm1324, %v3797, %v4023
        %v4123 = vsel %vm1324, %v3798, %v4025
        %v4125 = vld [vmem:[%s8] sm:$0xf]
        %v4126 = vld [vmem:[%s8 + $0x4] sm:$0xf]
        %v4127 = vld [vmem:[%s8 + $0x8] sm:$0xf]
        %v4128 = vld [vmem:[%s8 + $0xc] sm:$0xf]
        %v4129 = vld [vmem:[%s8 + $0x10] sm:$0xf]
        %v4130 = vld [vmem:[%s8 + $0x14] sm:$0xf]
        %v4131 = vld [vmem:[%s8 + $0x18] sm:$0xf]
        %v4132 = vld [vmem:[%s8 + $0x1c] sm:$0xf]
        %v4133 = vld [vmem:[%s8 + $0x20] sm:$0xf]
        %v4134 = vld [vmem:[%s8 + $0x24] sm:$0xf]
        %v4135 = vld [vmem:[%s8 + $0x28] sm:$0xf]
        %v4136 = vld [vmem:[%s8 + $0x2c] sm:$0xf]
        %v4137 = vld [vmem:[%s8 + $0x30] sm:$0xf]
        %v4138 = vld [vmem:[%s8 + $0x34] sm:$0xf]
        %v4139 = vld [vmem:[%s8 + $0x38] sm:$0xf]
        %v4140 = vld [vmem:[%s8 + $0x3c] sm:$0xf]
        %v4141 = vld [vmem:[%s8 + $0x40] sm:$0xf]
        %v4142 = vld [vmem:[%s8 + $0x44] sm:$0xf]
        %v4143 = vld [vmem:[%s8 + $0x48] sm:$0xf]
        %v4144 = vld [vmem:[%s8 + $0x4c] sm:$0xf]
        %v4145 = vld [vmem:[%s8 + $0x50] sm:$0xf]
        %v4146 = vld [vmem:[%s8 + $0x54] sm:$0xf]
        %v4147 = vld [vmem:[%s8 + $0x58] sm:$0xf]
        %v4148 = vld [vmem:[%s8 + $0x5c] sm:$0xf]
        %v4149 = vld [vmem:[%s8 + $0x60] sm:$0xf]
        %v4150 = vld [vmem:[%s8 + $0x64] sm:$0xf]
        %v4151 = vld [vmem:[%s8 + $0x68] sm:$0xf]
        %v4152 = vld [vmem:[%s8 + $0x6c] sm:$0xf]
        %v4153 = vld [vmem:[%s8 + $0x70] sm:$0xf]
        %v4154 = vld [vmem:[%s8 + $0x74] sm:$0xf]
        %v4155 = vld [vmem:[%s8 + $0x78] sm:$0xf]
        %v4156 = vld [vmem:[%s8 + $0x7c] sm:$0xf]
        %v4157 = vld [vmem:[%s8 + $0x80] sm:$0xf]
        %v4158 = vld [vmem:[%s8 + $0x84] sm:$0xf]
        %v4159 = vld [vmem:[%s8 + $0x88] sm:$0xf]
        %v4160 = vld [vmem:[%s8 + $0x8c] sm:$0xf]
        %v4161 = vld [vmem:[%s8 + $0x90] sm:$0xf]
        %v4162 = vld [vmem:[%s8 + $0x94] sm:$0xf]
        %v4163 = vld [vmem:[%s8 + $0x98] sm:$0xf]
        %v4164 = vld [vmem:[%s8 + $0x9c] sm:$0xf]
        %v4165 = vld [vmem:[%s8 + $0xa0] sm:$0xf]
        %v4166 = vld [vmem:[%s8 + $0xa4] sm:$0xf]
        %v4167 = vld [vmem:[%s8 + $0xa8] sm:$0xf]
        %v4168 = vld [vmem:[%s8 + $0xac] sm:$0xf]
        %v4169 = vld [vmem:[%s8 + $0xb0] sm:$0xf]
        %v4170 = vld [vmem:[%s8 + $0xb4] sm:$0xf]
        %v4171 = vld [vmem:[%s8 + $0xb8] sm:$0xf]
        %v4172 = vld [vmem:[%s8 + $0xbc] sm:$0xf]
        %v4173 = vld [vmem:[%s8 + $0xc0] sm:$0xf]
        %v4174 = vld [vmem:[%s8 + $0xc4] sm:$0xf]
        %v4175 = vld [vmem:[%s8 + $0xc8] sm:$0xf]
        %v4176 = vld [vmem:[%s8 + $0xcc] sm:$0xf]
        %v4177 = vld [vmem:[%s8 + $0xd0] sm:$0xf]
        %v4178 = vld [vmem:[%s8 + $0xd4] sm:$0xf]
        %v4179 = vld [vmem:[%s8 + $0xd8] sm:$0xf]
        %v4180 = vld [vmem:[%s8 + $0xdc] sm:$0xf]
        %v4181 = vld [vmem:[%s8 + $0xe0] sm:$0xf]
        %v4182 = vld [vmem:[%s8 + $0xe4] sm:$0xf]
        %v4183 = vld [vmem:[%s8 + $0xe8] sm:$0xf]
        %v4184 = vld [vmem:[%s8 + $0xec] sm:$0xf]
        %v4185 = vld [vmem:[%s8 + $0xf0] sm:$0xf]
        %v4186 = vld [vmem:[%s8 + $0xf4] sm:$0xf]
        %v4187 = vld [vmem:[%s8 + $0xf8] sm:$0xf]
        %v4188 = vld [vmem:[%s8 + $0xfc] sm:$0xf]
        %v4189 = vld [vmem:[%s8 + $0x100] sm:$0xf]
        %v4190 = vld [vmem:[%s8 + $0x104] sm:$0xf]
        %v4191 = vld [vmem:[%s8 + $0x108] sm:$0xf]
        %v4192 = vld [vmem:[%s8 + $0x10c] sm:$0xf]
        %v4193 = vld [vmem:[%s8 + $0x110] sm:$0xf]
        %v4194 = vld [vmem:[%s8 + $0x114] sm:$0xf]
        %v4195 = vld [vmem:[%s8 + $0x118] sm:$0xf]
        %v4196 = vld [vmem:[%s8 + $0x11c] sm:$0xf]
        %v4269 = vunpack.c.l.b16 %v4125
        %v4270 = vunpack.c.l.b16 %v4126
        %v4271 = vunpack.c.l.b16 %v4127
        %v4272 = vunpack.c.l.b16 %v4128
        %v4273 = vunpack.c.l.b16 %v4129
        %v4274 = vunpack.c.l.b16 %v4130
        %v4275 = vunpack.c.l.b16 %v4131
        %v4276 = vunpack.c.l.b16 %v4132
        %v4277 = vunpack.c.l.b16 %v4133
        %v4278 = vunpack.c.l.b16 %v4134
        %v4279 = vunpack.c.l.b16 %v4135
        %v4280 = vunpack.c.l.b16 %v4136
        %v4281 = vunpack.c.l.b16 %v4137
        %v4282 = vunpack.c.l.b16 %v4138
        %v4283 = vunpack.c.l.b16 %v4139
        %v4284 = vunpack.c.l.b16 %v4140
        %v4285 = vunpack.c.l.b16 %v4141
        %v4286 = vunpack.c.l.b16 %v4142
        %v4287 = vunpack.c.l.b16 %v4143
        %v4288 = vunpack.c.l.b16 %v4144
        %v4289 = vunpack.c.l.b16 %v4145
        %v4290 = vunpack.c.l.b16 %v4146
        %v4291 = vunpack.c.l.b16 %v4147
        %v4292 = vunpack.c.l.b16 %v4148
        %v4293 = vunpack.c.l.b16 %v4149
        %v4294 = vunpack.c.l.b16 %v4150
        %v4295 = vunpack.c.l.b16 %v4151
        %v4296 = vunpack.c.l.b16 %v4152
        %v4297 = vunpack.c.l.b16 %v4153
        %v4298 = vunpack.c.l.b16 %v4154
        %v4299 = vunpack.c.l.b16 %v4155
        %v4300 = vunpack.c.l.b16 %v4156
        %v4301 = vunpack.c.l.b16 %v4157
        %v4302 = vunpack.c.l.b16 %v4158
        %v4303 = vunpack.c.l.b16 %v4159
        %v4304 = vunpack.c.l.b16 %v4160
        %v4305 = vunpack.c.l.b16 %v4161
        %v4306 = vunpack.c.l.b16 %v4162
        %v4307 = vunpack.c.l.b16 %v4163
        %v4308 = vunpack.c.l.b16 %v4164
        %v4309 = vunpack.c.l.b16 %v4165
        %v4310 = vunpack.c.l.b16 %v4166
        %v4311 = vunpack.c.l.b16 %v4167
        %v4312 = vunpack.c.l.b16 %v4168
        %v4313 = vunpack.c.l.b16 %v4169
        %v4314 = vunpack.c.l.b16 %v4170
        %v4315 = vunpack.c.l.b16 %v4171
        %v4316 = vunpack.c.l.b16 %v4172
        %v4317 = vunpack.c.l.b16 %v4173
        %v4318 = vunpack.c.l.b16 %v4174
        %v4319 = vunpack.c.l.b16 %v4175
        %v4320 = vunpack.c.l.b16 %v4176
        %v4321 = vunpack.c.l.b16 %v4177
        %v4322 = vunpack.c.l.b16 %v4178
        %v4323 = vunpack.c.l.b16 %v4179
        %v4324 = vunpack.c.l.b16 %v4180
        %v4325 = vunpack.c.l.b16 %v4181
        %v4326 = vunpack.c.l.b16 %v4182
        %v4327 = vunpack.c.l.b16 %v4183
        %v4328 = vunpack.c.l.b16 %v4184
        %v4329 = vunpack.c.l.b16 %v4185
        %v4330 = vunpack.c.l.b16 %v4186
        %v4331 = vunpack.c.l.b16 %v4187
        %v4332 = vunpack.c.l.b16 %v4188
        %v4333 = vunpack.c.l.b16 %v4189
        %v4334 = vunpack.c.l.b16 %v4190
        %v4335 = vunpack.c.l.b16 %v4191
        %v4336 = vunpack.c.l.b16 %v4192
        %v4337 = vunpack.c.l.b16 %v4193
        %v4338 = vunpack.c.l.b16 %v4194
        %v4339 = vunpack.c.l.b16 %v4195
        %v4340 = vunpack.c.l.b16 %v4196
        %v4341 = vpack.c.b16 %v4270, %v4269
        %v4342 = vpack.c.b16 %v4272, %v4271
        %v4343 = vpack.c.b16 %v4274, %v4273
        %v4344 = vpack.c.b16 %v4276, %v4275
        %v4345 = vpack.c.b16 %v4278, %v4277
        %v4346 = vpack.c.b16 %v4280, %v4279
        %v4347 = vpack.c.b16 %v4282, %v4281
        %v4348 = vpack.c.b16 %v4284, %v4283
        %v4349 = vpack.c.b16 %v4286, %v4285
        %v4350 = vpack.c.b16 %v4288, %v4287
        %v4351 = vpack.c.b16 %v4290, %v4289
        %v4352 = vpack.c.b16 %v4292, %v4291
        %v4353 = vpack.c.b16 %v4294, %v4293
        %v4354 = vpack.c.b16 %v4296, %v4295
        %v4355 = vpack.c.b16 %v4298, %v4297
        %v4356 = vpack.c.b16 %v4300, %v4299
        %v4357 = vpack.c.b16 %v4302, %v4301
        %v4358 = vpack.c.b16 %v4304, %v4303
        %v4359 = vpack.c.b16 %v4306, %v4305
        %v4360 = vpack.c.b16 %v4308, %v4307
        %v4361 = vpack.c.b16 %v4310, %v4309
        %v4362 = vpack.c.b16 %v4312, %v4311
        %v4363 = vpack.c.b16 %v4314, %v4313
        %v4364 = vpack.c.b16 %v4316, %v4315
        %v4365 = vpack.c.b16 %v4318, %v4317
        %v4366 = vpack.c.b16 %v4320, %v4319
        %v4367 = vpack.c.b16 %v4322, %v4321
        %v4368 = vpack.c.b16 %v4324, %v4323
        %v4369 = vpack.c.b16 %v4326, %v4325
        %v4370 = vpack.c.b16 %v4328, %v4327
        %v4371 = vpack.c.b16 %v4330, %v4329
        %v4372 = vpack.c.b16 %v4332, %v4331
        %v4373 = vpack.c.b16 %v4334, %v4333
        %v4374 = vpack.c.b16 %v4336, %v4335
        %v4375 = vpack.c.b16 %v4338, %v4337
        %v4376 = vpack.c.b16 %v4340, %v4339
        %v4413 = vsel %vm1324, %v3945, 0
        %v4415 = vsel %vm1324, %v3948, 0
        %v4417 = vsel %vm1324, %v3951, 0
        %v4419 = vsel %vm1324, %v3954, 0
        %v4421 = vsel %vm1324, %v3957, 0
        %v4423 = vsel %vm1324, %v3960, 0
        %v4426 = vsel %vm1324, %v3993, 0
        %v4429 = vsel %vm1324, %v4030, 0
        %4431 = vmatpush.bf16.msra.mxu0 %v4348
        %4432 = vmatpush.bf16.msra.mxu0 %v4347
        %4433 = vmatpush.bf16.msra.mxu0 %v4346
        %4434 = vmatpush.bf16.msra.mxu0 %v4345
        %4435 = vmatpush.bf16.msra.mxu0 %v4344
        %4436 = vmatpush.bf16.msra.mxu0 %v4343
        %4437 = vmatpush.bf16.msra.mxu0 %v4342
        %4438 = vmatpush.bf16.msra.mxu0 %v4341
        %4439 = vmatmul.bf16.gmra.mxu0 %v4032
        %v4440 = vpop.f32.mrf.mxu0
        %v4441 = vadd.f32 0.0, %v4440
        %v4442 = vpop.f32.mrf.mxu0
        %v4443 = vadd.f32 0.0, %v4442
        %4444 = vmatmul.bf16.gmra.mxu0 %v4035
        %v4445 = vpop.f32.mrf.mxu0
        %v4446 = vadd.f32 0.0, %v4445
        %v4447 = vpop.f32.mrf.mxu0
        %v4448 = vadd.f32 0.0, %v4447
        %4449 = vmatmul.bf16.gmra.mxu0 %v4038
        %v4450 = vpop.f32.mrf.mxu0
        %v4451 = vadd.f32 0.0, %v4450
        %v4452 = vpop.f32.mrf.mxu0
        %v4453 = vadd.f32 0.0, %v4452
        %4454 = vmatmul.bf16.gmra.mxu0 %v4041
        %v4455 = vpop.f32.mrf.mxu0
        %v4456 = vadd.f32 0.0, %v4455
        %v4457 = vpop.f32.mrf.mxu0
        %v4458 = vadd.f32 0.0, %v4457
        %4459 = vmatmul.bf16.gmra.mxu0 %v4044
        %v4460 = vpop.f32.mrf.mxu0
        %v4461 = vadd.f32 0.0, %v4460
        %v4462 = vpop.f32.mrf.mxu0
        %v4463 = vadd.f32 0.0, %v4462
        %4464 = vmatmul.bf16.gmra.mxu0 %v4047
        %v4465 = vpop.f32.mrf.mxu0
        %v4466 = vadd.f32 0.0, %v4465
        %v4467 = vpop.f32.mrf.mxu0
        %v4468 = vadd.f32 0.0, %v4467
        %4469 = vmatmul.bf16.gmra.mxu0 %v4050
        %v4470 = vpop.f32.mrf.mxu0
        %v4471 = vadd.f32 0.0, %v4470
        %v4472 = vpop.f32.mrf.mxu0
        %v4473 = vadd.f32 0.0, %v4472
        %4474 = vmatmul.bf16.gmra.mxu0 %v4053
        %v4475 = vpop.f32.mrf.mxu0
        %v4476 = vadd.f32 0.0, %v4475
        %v4477 = vpop.f32.mrf.mxu0
        %v4478 = vadd.f32 0.0, %v4477
        %4479 = vdwg.mxu0
        %4480 = vmatpush.bf16.msra.mxu0 %v4356
        %4481 = vmatpush.bf16.msra.mxu0 %v4355
        %4482 = vmatpush.bf16.msra.mxu0 %v4354
        %4483 = vmatpush.bf16.msra.mxu0 %v4353
        %4484 = vmatpush.bf16.msra.mxu0 %v4352
        %4485 = vmatpush.bf16.msra.mxu0 %v4351
        %4486 = vmatpush.bf16.msra.mxu0 %v4350
        %4487 = vmatpush.bf16.msra.mxu0 %v4349
        %4488 = vmatmul.bf16.gmra.mxu0 %v4057
        %v4489 = vpop.f32.mrf.mxu0
        %v4490 = vadd.f32 %v4441, %v4489
        %v4491 = vpop.f32.mrf.mxu0
        %v4492 = vadd.f32 %v4443, %v4491
        %4493 = vmatmul.bf16.gmra.mxu0 %v4061
        %v4494 = vpop.f32.mrf.mxu0
        %v4495 = vadd.f32 %v4446, %v4494
        %v4496 = vpop.f32.mrf.mxu0
        %v4497 = vadd.f32 %v4448, %v4496
        %4498 = vmatmul.bf16.gmra.mxu0 %v4065
        %v4499 = vpop.f32.mrf.mxu0
        %v4500 = vadd.f32 %v4451, %v4499
        %v4501 = vpop.f32.mrf.mxu0
        %v4502 = vadd.f32 %v4453, %v4501
        %4503 = vmatmul.bf16.gmra.mxu0 %v4069
        %v4504 = vpop.f32.mrf.mxu0
        %v4505 = vadd.f32 %v4456, %v4504
        %v4506 = vpop.f32.mrf.mxu0
        %v4507 = vadd.f32 %v4458, %v4506
        %4508 = vmatmul.bf16.gmra.mxu0 %v4073
        %v4509 = vpop.f32.mrf.mxu0
        %v4510 = vadd.f32 %v4461, %v4509
        %v4511 = vpop.f32.mrf.mxu0
        %v4512 = vadd.f32 %v4463, %v4511
        %4513 = vmatmul.bf16.gmra.mxu0 %v4077
        %v4514 = vpop.f32.mrf.mxu0
        %v4515 = vadd.f32 %v4466, %v4514
        %v4516 = vpop.f32.mrf.mxu0
        %v4517 = vadd.f32 %v4468, %v4516
        %4518 = vmatmul.bf16.gmra.mxu0 %v4081
        %v4519 = vpop.f32.mrf.mxu0
        %v4520 = vadd.f32 %v4471, %v4519
        %v4521 = vpop.f32.mrf.mxu0
        %v4522 = vadd.f32 %v4473, %v4521
        %4523 = vmatmul.bf16.gmra.mxu0 %v4085
        %v4524 = vpop.f32.mrf.mxu0
        %v4525 = vadd.f32 %v4476, %v4524
        %v4526 = vpop.f32.mrf.mxu0
        %v4527 = vadd.f32 %v4478, %v4526
        %4528 = vdwg.mxu0
        %4529 = vmatpush.bf16.msra.mxu0 %v4364
        %4530 = vmatpush.bf16.msra.mxu0 %v4363
        %4531 = vmatpush.bf16.msra.mxu0 %v4362
        %4532 = vmatpush.bf16.msra.mxu0 %v4361
        %4533 = vmatpush.bf16.msra.mxu0 %v4360
        %4534 = vmatpush.bf16.msra.mxu0 %v4359
        %4535 = vmatpush.bf16.msra.mxu0 %v4358
        %4536 = vmatpush.bf16.msra.mxu0 %v4357
        %4537 = vmatmul.bf16.gmra.mxu0 %v4089
        %v4538 = vpop.f32.mrf.mxu0
        %v4539 = vadd.f32 %v4490, %v4538
        %v4540 = vpop.f32.mrf.mxu0
        %v4541 = vadd.f32 %v4492, %v4540
        %4542 = vmatmul.bf16.gmra.mxu0 %v4093
        %v4543 = vpop.f32.mrf.mxu0
        %v4544 = vadd.f32 %v4495, %v4543
        %v4545 = vpop.f32.mrf.mxu0
        %v4546 = vadd.f32 %v4497, %v4545
        %4547 = vmatmul.bf16.gmra.mxu0 %v4097
        %v4548 = vpop.f32.mrf.mxu0
        %v4549 = vadd.f32 %v4500, %v4548
        %v4550 = vpop.f32.mrf.mxu0
        %v4551 = vadd.f32 %v4502, %v4550
        %4552 = vmatmul.bf16.gmra.mxu0 %v4101
        %v4553 = vpop.f32.mrf.mxu0
        %v4554 = vadd.f32 %v4505, %v4553
        %v4555 = vpop.f32.mrf.mxu0
        %v4556 = vadd.f32 %v4507, %v4555
        %4557 = vmatmul.bf16.gmra.mxu0 %v4105
        %v4558 = vpop.f32.mrf.mxu0
        %v4559 = vadd.f32 %v4510, %v4558
        %v4560 = vpop.f32.mrf.mxu0
        %v4561 = vadd.f32 %v4512, %v4560
        %4562 = vmatmul.bf16.gmra.mxu0 %v4109
        %v4563 = vpop.f32.mrf.mxu0
        %v4564 = vadd.f32 %v4515, %v4563
        %v4565 = vpop.f32.mrf.mxu0
        %v4566 = vadd.f32 %v4517, %v4565
        %4567 = vmatmul.bf16.gmra.mxu0 %v4113
        %v4568 = vpop.f32.mrf.mxu0
        %v4569 = vadd.f32 %v4520, %v4568
        %v4570 = vpop.f32.mrf.mxu0
        %v4571 = vadd.f32 %v4522, %v4570
        %4572 = vmatmul.bf16.gmra.mxu0 %v4117
        %v4573 = vpop.f32.mrf.mxu0
        %v4574 = vadd.f32 %v4525, %v4573
        %v4575 = vpop.f32.mrf.mxu0
        %v4576 = vadd.f32 %v4527, %v4575
        %4577 = vdwg.mxu0
        %4578 = vmatpush.bf16.msra.mxu0 %v4372
        %4579 = vmatpush.bf16.msra.mxu0 %v4371
        %4580 = vmatpush.bf16.msra.mxu0 %v4370
        %4581 = vmatpush.bf16.msra.mxu0 %v4369
        %4582 = vmatpush.bf16.msra.mxu0 %v4368
        %4583 = vmatpush.bf16.msra.mxu0 %v4367
        %4584 = vmatpush.bf16.msra.mxu0 %v4366
        %4585 = vmatpush.bf16.msra.mxu0 %v4365
        %4586 = vmatmul.bf16.gmra.mxu0 %v4038
        %v4587 = vpop.f32.mrf.mxu0
        %v4588 = vadd.f32 %v4539, %v4587
        %v4589 = vpop.f32.mrf.mxu0
        %v4590 = vadd.f32 %v4541, %v4589
        %4591 = vmatmul.bf16.gmra.mxu0 %v4041
        %v4592 = vpop.f32.mrf.mxu0
        %v4593 = vadd.f32 %v4544, %v4592
        %v4594 = vpop.f32.mrf.mxu0
        %v4595 = vadd.f32 %v4546, %v4594
        %4596 = vmatmul.bf16.gmra.mxu0 %v4044
        %v4597 = vpop.f32.mrf.mxu0
        %v4598 = vadd.f32 %v4549, %v4597
        %v4599 = vpop.f32.mrf.mxu0
        %v4600 = vadd.f32 %v4551, %v4599
        %4601 = vmatmul.bf16.gmra.mxu0 %v4047
        %v4602 = vpop.f32.mrf.mxu0
        %v4603 = vadd.f32 %v4554, %v4602
        %v4604 = vpop.f32.mrf.mxu0
        %v4605 = vadd.f32 %v4556, %v4604
        %4606 = vmatmul.bf16.gmra.mxu0 %v4050
        %v4607 = vpop.f32.mrf.mxu0
        %v4608 = vadd.f32 %v4559, %v4607
        %v4609 = vpop.f32.mrf.mxu0
        %v4610 = vadd.f32 %v4561, %v4609
        %4611 = vmatmul.bf16.gmra.mxu0 %v4053
        %v4612 = vpop.f32.mrf.mxu0
        %v4613 = vadd.f32 %v4564, %v4612
        %v4614 = vpop.f32.mrf.mxu0
        %v4615 = vadd.f32 %v4566, %v4614
        %4616 = vmatmul.bf16.gmra.mxu0 %v4120
        %v4617 = vpop.f32.mrf.mxu0
        %v4618 = vadd.f32 %v4569, %v4617
        %v4619 = vpop.f32.mrf.mxu0
        %v4620 = vadd.f32 %v4571, %v4619
        %4621 = vmatmul.bf16.gmra.mxu0 %v4123
        %v4622 = vpop.f32.mrf.mxu0
        %v4623 = vadd.f32 %v4574, %v4622
        %v4624 = vpop.f32.mrf.mxu0
        %v4625 = vadd.f32 %v4576, %v4624
        %4626 = vdwg.mxu0
        %4627 = vmatpush.bf16.msra.mxu0 0
        %4628 = vmatpush.bf16.msra.mxu0 0
        %4629 = vmatpush.bf16.msra.mxu0 0
        %4630 = vmatpush.bf16.msra.mxu0 0
        %4631 = vmatpush.bf16.msra.mxu0 %v4376
        %4632 = vmatpush.bf16.msra.mxu0 %v4375
        %4633 = vmatpush.bf16.msra.mxu0 %v4374
        %4634 = vmatpush.bf16.msra.mxu0 %v4373
        %4635 = vmatmul.bf16.gmra.mxu0 %v4413
        %v4636 = vpop.f32.mrf.mxu0
        %v4637 = vadd.f32 %v4588, %v4636
        %v4638 = vpop.f32.mrf.mxu0
        %v4639 = vadd.f32 %v4590, %v4638
        %4640 = vmatmul.bf16.gmra.mxu0 %v4415
        %v4641 = vpop.f32.mrf.mxu0
        %v4642 = vadd.f32 %v4593, %v4641
        %v4643 = vpop.f32.mrf.mxu0
        %v4644 = vadd.f32 %v4595, %v4643
        %4645 = vmatmul.bf16.gmra.mxu0 %v4417
        %v4646 = vpop.f32.mrf.mxu0
        %v4647 = vadd.f32 %v4598, %v4646
        %v4648 = vpop.f32.mrf.mxu0
        %v4649 = vadd.f32 %v4600, %v4648
        %4650 = vmatmul.bf16.gmra.mxu0 %v4419
        %v4651 = vpop.f32.mrf.mxu0
        %v4652 = vadd.f32 %v4603, %v4651
        %v4653 = vpop.f32.mrf.mxu0
        %v4654 = vadd.f32 %v4605, %v4653
        %4655 = vmatmul.bf16.gmra.mxu0 %v4421
        %v4656 = vpop.f32.mrf.mxu0
        %v4657 = vadd.f32 %v4608, %v4656
        %v4658 = vpop.f32.mrf.mxu0
        %v4659 = vadd.f32 %v4610, %v4658
        %4660 = vmatmul.bf16.gmra.mxu0 %v4423
        %v4661 = vpop.f32.mrf.mxu0
        %v4662 = vadd.f32 %v4613, %v4661
        %v4663 = vpop.f32.mrf.mxu0
        %v4664 = vadd.f32 %v4615, %v4663
        %4665 = vmatmul.bf16.gmra.mxu0 %v4426
        %v4666 = vpop.f32.mrf.mxu0
        %v4667 = vadd.f32 %v4618, %v4666
        %v4668 = vpop.f32.mrf.mxu0
        %v4669 = vadd.f32 %v4620, %v4668
        %4670 = vmatmul.bf16.gmra.mxu0 %v4429
        %v4671 = vpop.f32.mrf.mxu0
        %v4672 = vadd.f32 %v4623, %v4671
        %v4673 = vpop.f32.mrf.mxu0
        %v4674 = vadd.f32 %v4625, %v4673
        %4675 = vdwg.mxu0
        %v4676 = vld [vmem:[%s9] sm:$0x1]
        %v4678 = vperm.slane %v4676, 0
        %v4680 = vadd.f32 %v4637, %v4678
        %v4681 = vadd.f32 %v4639, %v4678
        %v4682 = vadd.f32 %v4642, %v4678
        %v4683 = vadd.f32 %v4644, %v4678
        %v4684 = vadd.f32 %v4647, %v4678
        %v4685 = vadd.f32 %v4649, %v4678
        %v4686 = vadd.f32 %v4652, %v4678
        %v4687 = vadd.f32 %v4654, %v4678
        %v4688 = vadd.f32 %v4657, %v4678
        %v4689 = vadd.f32 %v4659, %v4678
        %v4690 = vadd.f32 %v4662, %v4678
        %v4691 = vadd.f32 %v4664, %v4678
        %v4692 = vadd.f32 %v4667, %v4678
        %v4693 = vadd.f32 %v4669, %v4678
        %v4694 = vadd.f32 %v4672, %v4678
        %v4695 = vadd.f32 %v4674, %v4678
        %v4696 = vmax.f32 %v4680, 0.0
        %v4697 = vmax.f32 %v4681, 0.0
        %v4698 = vmax.f32 %v4682, 0.0
        %v4699 = vmax.f32 %v4683, 0.0
        %v4700 = vmax.f32 %v4684, 0.0
        %v4701 = vmax.f32 %v4685, 0.0
        %v4702 = vmax.f32 %v4686, 0.0
        %v4703 = vmax.f32 %v4687, 0.0
        %v4704 = vmax.f32 %v4688, 0.0
        %v4705 = vmax.f32 %v4689, 0.0
        %v4706 = vmax.f32 %v4690, 0.0
        %v4707 = vmax.f32 %v4691, 0.0
        %v4708 = vmax.f32 %v4692, 0.0
        %v4709 = vmax.f32 %v4693, 0.0
        %v4710 = vmax.f32 %v4694, 0.0
        %v4711 = vmax.f32 %v4695, 0.0
        %4712 = vst.msk [vmem:[%s379] sm:$0xff] %vm1324, %v4696
        %4713 = vst.msk [vmem:[%s379 + $0x8] sm:$0xff] %vm1324, %v4697
        %4714 = vst.msk [vmem:[%s379 + $0x10] sm:$0xff] %vm1324, %v4698
        %4715 = vst.msk [vmem:[%s379 + $0x18] sm:$0xff] %vm1324, %v4699
        %4716 = vst.msk [vmem:[%s379 + $0x20] sm:$0xff] %vm1324, %v4700
        %4717 = vst.msk [vmem:[%s379 + $0x28] sm:$0xff] %vm1324, %v4701
        %4718 = vst.msk [vmem:[%s379 + $0x30] sm:$0xff] %vm1324, %v4702
        %4719 = vst.msk [vmem:[%s379 + $0x38] sm:$0xff] %vm1324, %v4703
        %4720 = vst.msk [vmem:[%s379 + $0x40] sm:$0xff] %vm1324, %v4704
        %4721 = vst.msk [vmem:[%s379 + $0x48] sm:$0xff] %vm1324, %v4705
        %4722 = vst.msk [vmem:[%s379 + $0x50] sm:$0xff] %vm1324, %v4706
        %4723 = vst.msk [vmem:[%s379 + $0x58] sm:$0xff] %vm1324, %v4707
        %4724 = vst.msk [vmem:[%s379 + $0x60] sm:$0xff] %vm1324, %v4708
        %4725 = vst.msk [vmem:[%s379 + $0x68] sm:$0xff] %vm1324, %v4709
        %4726 = vst.msk [vmem:[%s379 + $0x70] sm:$0xff] %vm1324, %v4710
        %4727 = vst.msk [vmem:[%s379 + $0x78] sm:$0xff] %vm1324, %v4711
        %s4728 = sand.u32 %s250, 1
        %s4729 = scalar_lea.sflag [#allocation4], %s4728
        %s4730 = sand.u32 %s250, 1
        %s4731 = smul.addr %s4730, 128
        %s4732 = scalar_lea.vmem [#allocation5], %s4731
        // Predicated region
        $region65: #{tpu_custom_call.1} parent=59 // pred_check
          %p4733 = pneg %p260
        $region66: #{tpu_custom_call.1} parent=59 // pred_check_branch
          %4735 = sbr.rel (%p4733) target = $region68
        $region67: #{tpu_custom_call.1} parent=59 // pred_region
          %4737 = vsyncadd %s4729, 0
          %s4738 = smul.addr %s27, 16
          %s4739 = smul.addr %s4738, 8
          %s4740 = scalar_lea.hbm %s10, %s4739
          %s4741 = sshll.u32 %s4732, 4
          %s4742 = int_to_ptr.vmem [resolvable:$true] %s4741
          %s4743 = sshll.u32 %s4740, 4
          %s4744 = int_to_ptr.hbm [resolvable:$true] %s4743
          %4749 = dma.vmem_to_hbm [thread:$0]  %s4742, 2048, %s4744, %s4729, 128, 128, 8
        $region68: #{tpu_custom_call.1} parent=59 // pred_fallthru
          _
      $region60: #{tpu_custom_call.1} parent=5 // pred_fallthru
        _
      %p4750 = scmp.le.s32.totalorder 2, %s22
      // Predicated region
      $region69: #{tpu_custom_call.1} parent=5 // pred_check
        %p4751 = pneg %p4750
      $region70: #{tpu_custom_call.1} parent=5 // pred_check_branch
        %4753 = sbr.rel (%p4751) target = $region72
      $region71: #{tpu_custom_call.1} parent=5 // pred_region
        %s4754 = ssub.s32 %s22, 2
        // Predicated region
        $region73: #{tpu_custom_call.1} parent=71 // pred_check
          %p4755 = pneg %p266
        $region74: #{tpu_custom_call.1} parent=71 // pred_check_branch
          %4757 = sbr.rel (%p4755) target = $region76
        $region75: #{tpu_custom_call.1} parent=71 // pred_region
          %s4758 = sand.u32 %s251, 1
          %s4759 = scalar_lea.sflag [#allocation4], %s4758
          %s4760 = sand.u32 %s251, 1
          %s4761 = smul.addr %s4760, 128
          %s4762 = scalar_lea.vmem [#allocation5], %s4761
          %4764 = dma.done %s4759, 2048
        $region76: #{tpu_custom_call.1} parent=71 // pred_fallthru
          _
      $region72: #{tpu_custom_call.1} parent=5 // pred_fallthru
        _
    $region6: #{tpu_custom_call.1} parent=1 // loop_footer
      %s26 = sadd.s32 1, %s22
    $region7: #{tpu_custom_call.1} parent=1 // loop_footer_branch
      %21 = sbr.rel target = $region3
    $region8: #{tpu_custom_call.1} parent=1 // loop_exit
      _
    %4765 = vsyncpa [#allocation3], 1
    %s4766 = scalar_lea.sflag [#allocation3], 1
    %4767 = vsyncpa %s4766, 1
    %4768 = vsyncpa [#allocation4], 1
    %s4769 = scalar_lea.sflag [#allocation4], 1
    %4770 = vsyncpa %s4769, 1

</llo_original>
